<compile_context>
chip_gen: v7x
topology: tpu7x:2x2x1
jax: 0.10.0
libtpu: 0.0.40
codegen_flags: <defaults>
</compile_context>

<pallas_src>
import jax
import jax.numpy as jnp
from jax import lax
from jax.experimental import pallas as pl

LANE = 128   # lane width the packed slabs are padded to
SUB = 8      # f32 sublane tile


def _round_up(v, m):
    return (v + m - 1) // m * m


def _layer_cfgs(in_channels, out_channels):
    # (heads, fan_in, fan_out, concat) for conv1 / conv2 / conv3
    return ((4, in_channels, 4, True),
            (8, 4 * 4, 8, True),
            (1, 8 * 8, out_channels, False))


def _slab_layout(cfgs):
    """Row layout of the packed weight slab.

    Every block starts at a multiple of 8 rows (f32 sublane tile) so all
    in-kernel slices / reshapes stay tile-aligned and relayout-free.
    Returns ([{name: (row0, rows, cols)} per layer], total_rows).
    """
    layout, row = [], 0
    for heads, k, f, _ in cfgs:
        entries = {}
        for name, shape in (("proj", (heads * k, f)),      # (H,K,F) flattened
                            ("att", (heads * SUB, f)),     # (H,8,F): row0=dst, row1=src
                            ("bias", (1, heads * f))):
            entries[name] = (row, shape[0], shape[1])
            row += _round_up(shape[0], SUB)
        layout.append(entries)
    return layout, row


# ------------------------------ Fused kernel -------------------------------

def _make_kernel(cfgs, layout, n):
    in_ch = cfgs[0][1]

    def kernel(data_ref, w_ref, o_ref):
        # data slab: rows [0, n)  cols [0, in_ch) = node features
        #            rows [n, 2n) cols [0, n)     = additive adjacency mask
        #            (0 for edge / self-loop, -1e30 otherwise).
        # Every mask row has at least one zero thanks to the self-loops added
        # in edge_index_to_adj, so the softmax never sees a fully-masked row.
        x = data_ref[0:n, 0:in_ch]
        mask_add = data_ref[n:2 * n, 0:n]

        def wslice(li, name):
            r0, rows, cols = layout[li][name]
            return w_ref[r0:r0 + rows, 0:cols]

        def gat_layer(li, h2d):
            heads, k, f, concat = cfgs[li]
            w_proj = wslice(li, "proj").reshape(heads, k, f)    # (H, K, F)
            att_p = wslice(li, "att").reshape(heads, SUB, f)    # (H, 8, F)
            bias = wslice(li, "bias")                           # (1, H*F)

            # --- projection, batched over all heads (one dot_general) ------
            x_rep = jnp.broadcast_to(h2d, (heads, n, k))        # (H, N, K)
            xp = lax.dot_general(
                x_rep, w_proj, (((2,), (1,)), ((0,), (0,))),
                preferred_element_type=jnp.float32)             # (H, N, F)

            # --- attention logits, directly in broadcast-ready layouts -----
            # a_dst[h, i] = <xp[h, i], att_dst_h>   (node index on sublanes)
            a_dst = lax.dot_general(
                xp, att_p, (((2,), (2,)), ((0,), (0,))),
                preferred_element_type=jnp.float32)[..., 0:1]   # (H, N, 1)
            # a_src[h, j] = <xp[h, j], att_src_h>   (node index on lanes)
            a_src = lax.dot_general(
                att_p, xp, (((2,), (2,)), ((0,), (0,))),
                preferred_element_type=jnp.float32)[:, 1:2, :]  # (H, 1, N)

            # --- leaky_relu + mask + softmax, all heads in one pass ---------
            e = a_dst + a_src                                   # (H, N, N): i, j
            e = jnp.where(e > 0, e, 0.2 * e) + mask_add[None, :, :]
            e = e - jnp.max(e, axis=-1, keepdims=True)
            p = jnp.exp(e)
            attn = p / jnp.sum(p, axis=-1, keepdims=True)       # softmax over j

            # --- aggregation, batched over all heads (one dot_general) ------
            out = lax.dot_general(
                attn, xp, (((2,), (1,)), ((0,), (0,))),
                preferred_element_type=jnp.float32)             # (H, N, F)

            if concat:
                out2d = jnp.concatenate([out[hh] for hh in range(heads)],
                                        axis=-1)                # (N, H*F)
            else:
                out2d = out[0]
                for hh in range(1, heads):
                    out2d = out2d + out[hh]
                out2d = out2d * (1.0 / heads)                   # (N, F)
            return out2d + bias

        def elu(v):
            # exp(min(v,0)) - 1 == expm1(v) for v <= 0 up to f32 rounding
            # (far inside the test tolerance); plain exp has guaranteed Mosaic
            # lowering, so expm1 support is not relied upon.
            return jnp.where(v > 0, v, jnp.exp(jnp.minimum(v, 0.0)) - 1.0)

        h1 = elu(gat_layer(0, x))
        h2 = elu(gat_layer(1, h1))
        o_ref[...] = gat_layer(2, h2)

    return kernel


def net_forward(data_slab, w_slab, *, cfgs, layout, n):
    """Entire 3-layer GAT network in a single pallas_call (all data in VMEM)."""
    out_ch = cfgs[-1][2]
    return pl.pallas_call(
        _make_kernel(cfgs, layout, n),
        out_shape=jax.ShapeDtypeStruct((n, out_ch), jnp.float32),
        # grid=() : the whole network (a few hundred KiB) lives in VMEM; the
        # only DMAs are the two packed input slabs and the small result.
        # TODO(synk): for batched multi-graph workloads add a leading
        # "parallel" grid axis so v7x's second TensorCore is used.
    )(data_slab, w_slab)


# ------------------------- Operand packing (host) ---------------------------

def pack_inputs(x, adj, params, in_channels, out_channels):
    """Pack all kernel operands into two lane-padded f32 slabs."""
    n = x.shape[0]
    cfgs = _layer_cfgs(in_channels, out_channels)
    layout, total_rows = _slab_layout(cfgs)

    # Activations / mask slab.
    mask_add = jnp.where(adj > 0, jnp.float32(0.0), jnp.float32(-1e30))
    data = jnp.zeros((2 * n, LANE), jnp.float32)
    data = data.at[0:n, 0:in_channels].set(x.astype(jnp.float32))
    data = data.at[n:2 * n, 0:n].set(mask_add)

    # Weight slab.
    slab = jnp.zeros((_round_up(total_rows, SUB), LANE), jnp.float32)
    for li, (name, (heads, k, f, _)) in enumerate(
            zip(("conv1", "conv2", "conv3"), cfgs)):
        w, att_src, att_dst, bias = params[name]
        w_hkf = jnp.transpose(w.reshape(k, heads, f), (1, 0, 2))   # (H, K, F)
        att_p = jnp.zeros((heads, SUB, f), jnp.float32)
        att_p = att_p.at[:, 0, :].set(att_dst.reshape(heads, f))   # row 0: dst
        att_p = att_p.at[:, 1, :].set(att_src.reshape(heads, f))   # row 1: src
        for comp, val in (("proj", w_hkf.reshape(heads * k, f)),
                          ("att", att_p.reshape(heads * SUB, f)),
                          ("bias", bias.reshape(1, heads * f))):
            r0, rows, cols = layout[li][comp]
            slab = slab.at[r0:r0 + rows, 0:cols].set(val)
    return data, slab, cfgs, layout


# --------------------------- Pure-JAX reference ----------------------------

def _elu(x):
    return jnp.where(x > 0, x, jnp.expm1(x))


def _ref_gat_layer(x, adj, params, *, heads, out_ch, concat):
    w, att_src, att_dst, bias = params
    n = x.shape[0]
    xp = (x @ w).reshape(n, heads, out_ch)                    # [N, H, F]
    a_s = jnp.einsum("nhf,hf->nh", xp, att_src.reshape(heads, out_ch))
    a_d = jnp.einsum("nhf,hf->nh", xp, att_dst.reshape(heads, out_ch))
    scores = a_d[:, None, :] + a_s[None, :, :]                # [i, j, h]
    scores = jnp.where(scores > 0, scores, 0.2 * scores)
    scores = jnp.where(adj[:, :, None] > 0, scores, -1e30)
    scores = scores - scores.max(axis=1, keepdims=True)
    p = jnp.exp(scores)
    attn = p / p.sum(axis=1, keepdims=True)                   # softmax over j
    out = jnp.einsum("ijh,jhf->ihf", attn, xp)                # [N, H, F]
    if concat:
        return out.reshape(n, heads * out_ch) + bias
    return out.mean(axis=1) + bias


def _ref_forward(x, adj, params, out_channels):
    h = _elu(_ref_gat_layer(x, adj, params["conv1"], heads=4, out_ch=4,
                            concat=True))
    h = _elu(_ref_gat_layer(h, adj, params["conv2"], heads=8, out_ch=8,
                            concat=True))
    return _ref_gat_layer(h, adj, params["conv3"], heads=1,
                          out_ch=out_channels, concat=False)


# --------------------------------- Setup -----------------------------------

def _glorot(key, shape):
    fan_in, fan_out = shape[0], shape[-1]
    lim = jnp.sqrt(6.0 / (fan_in + fan_out))
    return jax.random.uniform(key, shape, jnp.float32, -lim, lim)


def init_params(key, in_channels, out_channels):
    ks = jax.random.split(key, 12)
    return {
        # W stored as [Fin, H*Fout] (transposed PyG lin weight), att as [H*F].
        "conv1": (_glorot(ks[0], (in_channels, 4 * 4)),
                  _glorot(ks[1], (1, 4 * 4))[0],
                  _glorot(ks[2], (1, 4 * 4))[0],
                  jnp.zeros((4 * 4,), jnp.float32)),
        "conv2": (_glorot(ks[3], (4 * 4, 8 * 8)),
                  _glorot(ks[4], (1, 8 * 8))[0],
                  _glorot(ks[5], (1, 8 * 8))[0],
                  jnp.zeros((8 * 8,), jnp.float32)),
        "conv3": (_glorot(ks[6], (8 * 8, 1 * out_channels)),
                  _glorot(ks[7], (1, out_channels))[0],
                  _glorot(ks[8], (1, out_channels))[0],
                  jnp.zeros((out_channels,), jnp.float32)),
    }


def edge_index_to_adj(edge_index, num_nodes):
    # adj[dst, src] = 1 for each edge src -> dst, plus self-loops (PyG default).
    src, dst = edge_index[0], edge_index[1]
    adj = jnp.zeros((num_nodes, num_nodes), jnp.float32)
    adj = adj.at[dst, src].set(1.0)
    adj = jnp.maximum(adj, jnp.eye(num_nodes, dtype=jnp.float32))
    return adj


if __name__ == "__main__":
    N = 16            # nodes
    IN_CH = 8
    OUT_CH = 6

    key = jax.random.PRNGKey(0)
    kx, kp, _ = jax.random.split(key, 3)

    x = jax.random.normal(kx, (N, IN_CH), jnp.float32)

    # Deterministic small graph: bidirectional ring + a few extra edges.
    ring_src = jnp.arange(N)
    ring_dst = (ring_src + 1) % N
    extra_src = jnp.array([0, 3, 5, 7, 10, 12])
    extra_dst = jnp.array([8, 11, 1, 14, 2, 6])
    src = jnp.concatenate([ring_src, ring_dst, extra_src, extra_dst])
    dst = jnp.concatenate([ring_dst, ring_src, extra_dst, extra_src])
    edge_index = jnp.stack([src, dst]).astype(jnp.int32)      # [2, E]

    adj = edge_index_to_adj(edge_index, N)
    params = init_params(kp, IN_CH, OUT_CH)

    data_slab, w_slab, cfgs, layout = pack_inputs(x, adj, params, IN_CH, OUT_CH)

    @jax.jit
    def fwd(d, w):
        return net_forward(d, w, cfgs=cfgs, layout=layout, n=N)

    out = jax.block_until_ready(fwd(data_slab, w_slab))

    with jax.default_matmul_precision("highest"):
        ref = _ref_forward(x, adj, params, OUT_CH)

    assert out.shape == (N, OUT_CH), out.shape
    max_err = float(jnp.max(jnp.abs(out - ref)))
    assert jnp.allclose(out, ref, rtol=2e-4, atol=2e-4), max_err

    print("KERNEL_OK")
</pallas_src>

<mosaic_0001>
module attributes {stable_mosaic.version = 11 : i64} {
  func.func @kernel(%arg0: memref<32x128xf32, #tpu.memory_space<vmem>>, %arg1: memref<352x128xf32, #tpu.memory_space<vmem>>, %arg2: memref<16x6xf32, #tpu.memory_space<vmem>>) attributes {dimension_semantics = [], scalar_prefetch = 0 : i64, scratch_operands = 0 : i64, tpu.core_type = #tpu.core_type<tc>} {
    %c0 = arith.constant 0 : index
    %c0_0 = arith.constant 0 : index
    %0 = vector.load %arg0[%c0, %c0_0] : memref<32x128xf32, #tpu.memory_space<vmem>>, vector<16x8xf32>
    %c16 = arith.constant 16 : index
    %c0_1 = arith.constant 0 : index
    %1 = vector.load %arg0[%c16, %c0_1] : memref<32x128xf32, #tpu.memory_space<vmem>>, vector<16x16xf32>
    %c0_2 = arith.constant 0 : index
    %c0_3 = arith.constant 0 : index
    %2 = vector.load %arg1[%c0_2, %c0_3] : memref<352x128xf32, #tpu.memory_space<vmem>>, vector<32x4xf32>
    %3 = vector.shape_cast %2 : vector<32x4xf32> to vector<4x8x4xf32>
    %c32 = arith.constant 32 : index
    %c0_4 = arith.constant 0 : index
    %4 = vector.load %arg1[%c32, %c0_4] : memref<352x128xf32, #tpu.memory_space<vmem>>, vector<32x4xf32>
    %5 = vector.shape_cast %4 : vector<32x4xf32> to vector<4x8x4xf32>
    %c64 = arith.constant 64 : index
    %c0_5 = arith.constant 0 : index
    %6 = vector.load %arg1[%c64, %c0_5] : memref<352x128xf32, #tpu.memory_space<vmem>>, vector<1x16xf32>
    %7 = vector.shape_cast %0 : vector<16x8xf32> to vector<1x16x8xf32>
    %8 = vector.broadcast %7 : vector<1x16x8xf32> to vector<4x16x8xf32>
    %cst = arith.constant dense<0.000000e+00> : vector<4x16x4xf32>
    %9 = tpu.matmul %8, %3, %cst {dimension_numbers = #tpu.dot_dimension_numbers<[2], [1], [1], [2], [0, 0, 0, 1, 1, 2], [0], [0]>} : vector<4x16x8xf32>, vector<4x8x4xf32>, vector<4x16x4xf32> -> vector<4x16x4xf32>
    %cst_6 = arith.constant dense<0.000000e+00> : vector<4x16x8xf32>
    %10 = tpu.matmul %9, %5, %cst_6 {dimension_numbers = #tpu.dot_dimension_numbers<[2], [2], [1], [1], [0, 0, 0, 1, 1, 1], [0], [0]>} : vector<4x16x4xf32>, vector<4x8x4xf32>, vector<4x16x8xf32> -> vector<4x16x8xf32>
    %11 = vector.extract_strided_slice %10 {offsets = [0, 0, 0], sizes = [4, 16, 1], strides = [1, 1, 1]} : vector<4x16x8xf32> to vector<4x16x1xf32>
    %cst_7 = arith.constant dense<0.000000e+00> : vector<4x8x16xf32>
    %12 = tpu.matmul %5, %9, %cst_7 {dimension_numbers = #tpu.dot_dimension_numbers<[2], [2], [1], [1], [0, 0, 0, 1, 1, 1], [0], [0]>} : vector<4x8x4xf32>, vector<4x16x4xf32>, vector<4x8x16xf32> -> vector<4x8x16xf32>
    %13 = vector.extract_strided_slice %12 {offsets = [0, 1, 0], sizes = [4, 1, 16], strides = [1, 1, 1]} : vector<4x8x16xf32> to vector<4x1x16xf32>
    %14 = vector.broadcast %11 : vector<4x16x1xf32> to vector<4x16x16xf32>
    %15 = vector.broadcast %13 : vector<4x1x16xf32> to vector<4x16x16xf32>
    %16 = arith.addf %14, %15 : vector<4x16x16xf32>
    %cst_8 = arith.constant 0.000000e+00 : f32
    %17 = vector.broadcast %cst_8 : f32 to vector<4x16x16xf32>
    %18 = arith.cmpf ogt, %16, %17 : vector<4x16x16xf32>
    %cst_9 = arith.constant 2.000000e-01 : f32
    %19 = vector.broadcast %cst_9 : f32 to vector<4x16x16xf32>
    %20 = arith.mulf %19, %16 : vector<4x16x16xf32>
    %21 = arith.select %18, %16, %20 : vector<4x16x16xi1>, vector<4x16x16xf32>
    %22 = vector.shape_cast %1 : vector<16x16xf32> to vector<1x16x16xf32>
    %23 = vector.broadcast %22 : vector<1x16x16xf32> to vector<4x16x16xf32>
    %24 = arith.addf %21, %23 : vector<4x16x16xf32>
    %cst_10 = arith.constant dense<0xFF800000> : vector<4x16xf32>
    %25 = vector.multi_reduction <maximumf>, %24, %cst_10 [2] : vector<4x16x16xf32> to vector<4x16xf32>
    %26 = vector.shape_cast %25 : vector<4x16xf32> to vector<4x16x1xf32>
    %27 = vector.broadcast %26 : vector<4x16x1xf32> to vector<4x16x16xf32>
    %28 = arith.subf %24, %27 : vector<4x16x16xf32>
    %29 = math.exp %28 : vector<4x16x16xf32>
    %cst_11 = arith.constant dense<0.000000e+00> : vector<4x16xf32>
    %30 = vector.multi_reduction <add>, %29, %cst_11 [2] : vector<4x16x16xf32> to vector<4x16xf32>
    %31 = vector.shape_cast %30 : vector<4x16xf32> to vector<4x16x1xf32>
    %32 = vector.broadcast %31 : vector<4x16x1xf32> to vector<4x16x16xf32>
    %33 = arith.divf %29, %32 : vector<4x16x16xf32>
    %cst_12 = arith.constant dense<0.000000e+00> : vector<4x16x4xf32>
    %34 = tpu.matmul %33, %9, %cst_12 {dimension_numbers = #tpu.dot_dimension_numbers<[2], [1], [1], [2], [0, 0, 0, 1, 1, 2], [0], [0]>} : vector<4x16x16xf32>, vector<4x16x4xf32>, vector<4x16x4xf32> -> vector<4x16x4xf32>
    %35 = vector.extract_strided_slice %34 {offsets = [0, 0, 0], sizes = [1, 16, 4], strides = [1, 1, 1]} : vector<4x16x4xf32> to vector<1x16x4xf32>
    %36 = vector.shape_cast %35 : vector<1x16x4xf32> to vector<16x4xf32>
    %37 = vector.extract_strided_slice %34 {offsets = [1, 0, 0], sizes = [1, 16, 4], strides = [1, 1, 1]} : vector<4x16x4xf32> to vector<1x16x4xf32>
    %38 = vector.shape_cast %37 : vector<1x16x4xf32> to vector<16x4xf32>
    %39 = vector.extract_strided_slice %34 {offsets = [2, 0, 0], sizes = [1, 16, 4], strides = [1, 1, 1]} : vector<4x16x4xf32> to vector<1x16x4xf32>
    %40 = vector.shape_cast %39 : vector<1x16x4xf32> to vector<16x4xf32>
    %41 = vector.extract_strided_slice %34 {offsets = [3, 0, 0], sizes = [1, 16, 4], strides = [1, 1, 1]} : vector<4x16x4xf32> to vector<1x16x4xf32>
    %42 = vector.shape_cast %41 : vector<1x16x4xf32> to vector<16x4xf32>
    %43 = tpu.concatenate %36, %38, %40, %42 in 1 : vector<16x4xf32>, vector<16x4xf32>, vector<16x4xf32>, vector<16x4xf32> -> vector<16x16xf32>
    %44 = vector.broadcast %6 : vector<1x16xf32> to vector<16x16xf32>
    %45 = arith.addf %43, %44 : vector<16x16xf32>
    %cst_13 = arith.constant 0.000000e+00 : f32
    %46 = vector.broadcast %cst_13 : f32 to vector<16x16xf32>
    %47 = arith.cmpf ogt, %45, %46 : vector<16x16xf32>
    %cst_14 = arith.constant 0.000000e+00 : f32
    %48 = vector.broadcast %cst_14 : f32 to vector<16x16xf32>
    %49 = arith.minimumf %45, %48 : vector<16x16xf32>
    %50 = math.exp %49 : vector<16x16xf32>
    %cst_15 = arith.constant 1.000000e+00 : f32
    %51 = vector.broadcast %cst_15 : f32 to vector<16x16xf32>
    %52 = arith.subf %50, %51 : vector<16x16xf32>
    %53 = arith.select %47, %45, %52 : vector<16x16xi1>, vector<16x16xf32>
    %c72 = arith.constant 72 : index
    %c0_16 = arith.constant 0 : index
    %54 = vector.load %arg1[%c72, %c0_16] : memref<352x128xf32, #tpu.memory_space<vmem>>, vector<128x8xf32>
    %55 = vector.shape_cast %54 : vector<128x8xf32> to vector<8x16x8xf32>
    %c200 = arith.constant 200 : index
    %c0_17 = arith.constant 0 : index
    %56 = vector.load %arg1[%c200, %c0_17] : memref<352x128xf32, #tpu.memory_space<vmem>>, vector<64x8xf32>
    %57 = vector.shape_cast %56 : vector<64x8xf32> to vector<8x8x8xf32>
    %c264 = arith.constant 264 : index
    %c0_18 = arith.constant 0 : index
    %58 = vector.load %arg1[%c264, %c0_18] : memref<352x128xf32, #tpu.memory_space<vmem>>, vector<1x64xf32>
    %59 = vector.shape_cast %53 : vector<16x16xf32> to vector<1x16x16xf32>
    %60 = vector.broadcast %59 : vector<1x16x16xf32> to vector<8x16x16xf32>
    %cst_19 = arith.constant dense<0.000000e+00> : vector<8x16x8xf32>
    %61 = tpu.matmul %60, %55, %cst_19 {dimension_numbers = #tpu.dot_dimension_numbers<[2], [1], [1], [2], [0, 0, 0, 1, 1, 2], [0], [0]>} : vector<8x16x16xf32>, vector<8x16x8xf32>, vector<8x16x8xf32> -> vector<8x16x8xf32>
    %cst_20 = arith.constant dense<0.000000e+00> : vector<8x16x8xf32>
    %62 = tpu.matmul %61, %57, %cst_20 {dimension_numbers = #tpu.dot_dimension_numbers<[2], [2], [1], [1], [0, 0, 0, 1, 1, 1], [0], [0]>} : vector<8x16x8xf32>, vector<8x8x8xf32>, vector<8x16x8xf32> -> vector<8x16x8xf32>
    %63 = vector.extract_strided_slice %62 {offsets = [0, 0, 0], sizes = [8, 16, 1], strides = [1, 1, 1]} : vector<8x16x8xf32> to vector<8x16x1xf32>
    %cst_21 = arith.constant dense<0.000000e+00> : vector<8x8x16xf32>
    %64 = tpu.matmul %57, %61, %cst_21 {dimension_numbers = #tpu.dot_dimension_numbers<[2], [2], [1], [1], [0, 0, 0, 1, 1, 1], [0], [0]>} : vector<8x8x8xf32>, vector<8x16x8xf32>, vector<8x8x16xf32> -> vector<8x8x16xf32>
    %65 = vector.extract_strided_slice %64 {offsets = [0, 1, 0], sizes = [8, 1, 16], strides = [1, 1, 1]} : vector<8x8x16xf32> to vector<8x1x16xf32>
    %66 = vector.broadcast %63 : vector<8x16x1xf32> to vector<8x16x16xf32>
    %67 = vector.broadcast %65 : vector<8x1x16xf32> to vector<8x16x16xf32>
    %68 = arith.addf %66, %67 : vector<8x16x16xf32>
    %cst_22 = arith.constant 0.000000e+00 : f32
    %69 = vector.broadcast %cst_22 : f32 to vector<8x16x16xf32>
    %70 = arith.cmpf ogt, %68, %69 : vector<8x16x16xf32>
    %cst_23 = arith.constant 2.000000e-01 : f32
    %71 = vector.broadcast %cst_23 : f32 to vector<8x16x16xf32>
    %72 = arith.mulf %71, %68 : vector<8x16x16xf32>
    %73 = arith.select %70, %68, %72 : vector<8x16x16xi1>, vector<8x16x16xf32>
    %74 = vector.shape_cast %1 : vector<16x16xf32> to vector<1x16x16xf32>
    %75 = vector.broadcast %74 : vector<1x16x16xf32> to vector<8x16x16xf32>
    %76 = arith.addf %73, %75 : vector<8x16x16xf32>
    %cst_24 = arith.constant dense<0xFF800000> : vector<8x16xf32>
    %77 = vector.multi_reduction <maximumf>, %76, %cst_24 [2] : vector<8x16x16xf32> to vector<8x16xf32>
    %78 = vector.shape_cast %77 : vector<8x16xf32> to vector<8x16x1xf32>
    %79 = vector.broadcast %78 : vector<8x16x1xf32> to vector<8x16x16xf32>
    %80 = arith.subf %76, %79 : vector<8x16x16xf32>
    %81 = math.exp %80 : vector<8x16x16xf32>
    %cst_25 = arith.constant dense<0.000000e+00> : vector<8x16xf32>
    %82 = vector.multi_reduction <add>, %81, %cst_25 [2] : vector<8x16x16xf32> to vector<8x16xf32>
    %83 = vector.shape_cast %82 : vector<8x16xf32> to vector<8x16x1xf32>
    %84 = vector.broadcast %83 : vector<8x16x1xf32> to vector<8x16x16xf32>
    %85 = arith.divf %81, %84 : vector<8x16x16xf32>
    %cst_26 = arith.constant dense<0.000000e+00> : vector<8x16x8xf32>
    %86 = tpu.matmul %85, %61, %cst_26 {dimension_numbers = #tpu.dot_dimension_numbers<[2], [1], [1], [2], [0, 0, 0, 1, 1, 2], [0], [0]>} : vector<8x16x16xf32>, vector<8x16x8xf32>, vector<8x16x8xf32> -> vector<8x16x8xf32>
    %87 = vector.extract_strided_slice %86 {offsets = [0, 0, 0], sizes = [1, 16, 8], strides = [1, 1, 1]} : vector<8x16x8xf32> to vector<1x16x8xf32>
    %88 = vector.shape_cast %87 : vector<1x16x8xf32> to vector<16x8xf32>
    %89 = vector.extract_strided_slice %86 {offsets = [1, 0, 0], sizes = [1, 16, 8], strides = [1, 1, 1]} : vector<8x16x8xf32> to vector<1x16x8xf32>
    %90 = vector.shape_cast %89 : vector<1x16x8xf32> to vector<16x8xf32>
    %91 = vector.extract_strided_slice %86 {offsets = [2, 0, 0], sizes = [1, 16, 8], strides = [1, 1, 1]} : vector<8x16x8xf32> to vector<1x16x8xf32>
    %92 = vector.shape_cast %91 : vector<1x16x8xf32> to vector<16x8xf32>
    %93 = vector.extract_strided_slice %86 {offsets = [3, 0, 0], sizes = [1, 16, 8], strides = [1, 1, 1]} : vector<8x16x8xf32> to vector<1x16x8xf32>
    %94 = vector.shape_cast %93 : vector<1x16x8xf32> to vector<16x8xf32>
    %95 = vector.extract_strided_slice %86 {offsets = [4, 0, 0], sizes = [1, 16, 8], strides = [1, 1, 1]} : vector<8x16x8xf32> to vector<1x16x8xf32>
    %96 = vector.shape_cast %95 : vector<1x16x8xf32> to vector<16x8xf32>
    %97 = vector.extract_strided_slice %86 {offsets = [5, 0, 0], sizes = [1, 16, 8], strides = [1, 1, 1]} : vector<8x16x8xf32> to vector<1x16x8xf32>
    %98 = vector.shape_cast %97 : vector<1x16x8xf32> to vector<16x8xf32>
    %99 = vector.extract_strided_slice %86 {offsets = [6, 0, 0], sizes = [1, 16, 8], strides = [1, 1, 1]} : vector<8x16x8xf32> to vector<1x16x8xf32>
    %100 = vector.shape_cast %99 : vector<1x16x8xf32> to vector<16x8xf32>
    %101 = vector.extract_strided_slice %86 {offsets = [7, 0, 0], sizes = [1, 16, 8], strides = [1, 1, 1]} : vector<8x16x8xf32> to vector<1x16x8xf32>
    %102 = vector.shape_cast %101 : vector<1x16x8xf32> to vector<16x8xf32>
    %103 = tpu.concatenate %88, %90, %92, %94, %96, %98, %100, %102 in 1 : vector<16x8xf32>, vector<16x8xf32>, vector<16x8xf32>, vector<16x8xf32>, vector<16x8xf32>, vector<16x8xf32>, vector<16x8xf32>, vector<16x8xf32> -> vector<16x64xf32>
    %104 = vector.broadcast %58 : vector<1x64xf32> to vector<16x64xf32>
    %105 = arith.addf %103, %104 : vector<16x64xf32>
    %cst_27 = arith.constant 0.000000e+00 : f32
    %106 = vector.broadcast %cst_27 : f32 to vector<16x64xf32>
    %107 = arith.cmpf ogt, %105, %106 : vector<16x64xf32>
    %cst_28 = arith.constant 0.000000e+00 : f32
    %108 = vector.broadcast %cst_28 : f32 to vector<16x64xf32>
    %109 = arith.minimumf %105, %108 : vector<16x64xf32>
    %110 = math.exp %109 : vector<16x64xf32>
    %cst_29 = arith.constant 1.000000e+00 : f32
    %111 = vector.broadcast %cst_29 : f32 to vector<16x64xf32>
    %112 = arith.subf %110, %111 : vector<16x64xf32>
    %113 = arith.select %107, %105, %112 : vector<16x64xi1>, vector<16x64xf32>
    %c272 = arith.constant 272 : index
    %c0_30 = arith.constant 0 : index
    %114 = vector.load %arg1[%c272, %c0_30] : memref<352x128xf32, #tpu.memory_space<vmem>>, vector<64x6xf32>
    %115 = vector.shape_cast %114 : vector<64x6xf32> to vector<1x64x6xf32>
    %c336 = arith.constant 336 : index
    %c0_31 = arith.constant 0 : index
    %116 = vector.load %arg1[%c336, %c0_31] : memref<352x128xf32, #tpu.memory_space<vmem>>, vector<8x6xf32>
    %117 = vector.shape_cast %116 : vector<8x6xf32> to vector<1x8x6xf32>
    %c344 = arith.constant 344 : index
    %c0_32 = arith.constant 0 : index
    %118 = vector.load %arg1[%c344, %c0_32] : memref<352x128xf32, #tpu.memory_space<vmem>>, vector<1x6xf32>
    %119 = vector.shape_cast %113 : vector<16x64xf32> to vector<1x16x64xf32>
    %cst_33 = arith.constant dense<0.000000e+00> : vector<1x16x6xf32>
    %120 = tpu.matmul %119, %115, %cst_33 {dimension_numbers = #tpu.dot_dimension_numbers<[2], [1], [1], [2], [0, 0, 0, 1, 1, 2], [0], [0]>} : vector<1x16x64xf32>, vector<1x64x6xf32>, vector<1x16x6xf32> -> vector<1x16x6xf32>
    %cst_34 = arith.constant dense<0.000000e+00> : vector<1x16x8xf32>
    %121 = tpu.matmul %120, %117, %cst_34 {dimension_numbers = #tpu.dot_dimension_numbers<[2], [2], [1], [1], [0, 0, 0, 1, 1, 1], [0], [0]>} : vector<1x16x6xf32>, vector<1x8x6xf32>, vector<1x16x8xf32> -> vector<1x16x8xf32>
    %122 = vector.extract_strided_slice %121 {offsets = [0, 0, 0], sizes = [1, 16, 1], strides = [1, 1, 1]} : vector<1x16x8xf32> to vector<1x16x1xf32>
    %cst_35 = arith.constant dense<0.000000e+00> : vector<1x8x16xf32>
    %123 = tpu.matmul %117, %120, %cst_35 {dimension_numbers = #tpu.dot_dimension_numbers<[2], [2], [1], [1], [0, 0, 0, 1, 1, 1], [0], [0]>} : vector<1x8x6xf32>, vector<1x16x6xf32>, vector<1x8x16xf32> -> vector<1x8x16xf32>
    %124 = vector.extract_strided_slice %123 {offsets = [0, 1, 0], sizes = [1, 1, 16], strides = [1, 1, 1]} : vector<1x8x16xf32> to vector<1x1x16xf32>
    %125 = vector.broadcast %122 : vector<1x16x1xf32> to vector<1x16x16xf32>
    %126 = vector.broadcast %124 : vector<1x1x16xf32> to vector<1x16x16xf32>
    %127 = arith.addf %125, %126 : vector<1x16x16xf32>
    %cst_36 = arith.constant 0.000000e+00 : f32
    %128 = vector.broadcast %cst_36 : f32 to vector<1x16x16xf32>
    %129 = arith.cmpf ogt, %127, %128 : vector<1x16x16xf32>
    %cst_37 = arith.constant 2.000000e-01 : f32
    %130 = vector.broadcast %cst_37 : f32 to vector<1x16x16xf32>
    %131 = arith.mulf %130, %127 : vector<1x16x16xf32>
    %132 = arith.select %129, %127, %131 : vector<1x16x16xi1>, vector<1x16x16xf32>
    %133 = vector.shape_cast %1 : vector<16x16xf32> to vector<1x16x16xf32>
    %134 = arith.addf %132, %133 : vector<1x16x16xf32>
    %cst_38 = arith.constant dense<0xFF800000> : vector<1x16xf32>
    %135 = vector.multi_reduction <maximumf>, %134, %cst_38 [2] : vector<1x16x16xf32> to vector<1x16xf32>
    %136 = vector.shape_cast %135 : vector<1x16xf32> to vector<1x16x1xf32>
    %137 = vector.broadcast %136 : vector<1x16x1xf32> to vector<1x16x16xf32>
    %138 = arith.subf %134, %137 : vector<1x16x16xf32>
    %139 = math.exp %138 : vector<1x16x16xf32>
    %cst_39 = arith.constant dense<0.000000e+00> : vector<1x16xf32>
    %140 = vector.multi_reduction <add>, %139, %cst_39 [2] : vector<1x16x16xf32> to vector<1x16xf32>
    %141 = vector.shape_cast %140 : vector<1x16xf32> to vector<1x16x1xf32>
    %142 = vector.broadcast %141 : vector<1x16x1xf32> to vector<1x16x16xf32>
    %143 = arith.divf %139, %142 : vector<1x16x16xf32>
    %cst_40 = arith.constant dense<0.000000e+00> : vector<1x16x6xf32>
    %144 = tpu.matmul %143, %120, %cst_40 {dimension_numbers = #tpu.dot_dimension_numbers<[2], [1], [1], [2], [0, 0, 0, 1, 1, 2], [0], [0]>} : vector<1x16x16xf32>, vector<1x16x6xf32>, vector<1x16x6xf32> -> vector<1x16x6xf32>
    %145 = vector.shape_cast %144 : vector<1x16x6xf32> to vector<16x6xf32>
    %cst_41 = arith.constant 1.000000e+00 : f32
    %146 = vector.broadcast %cst_41 : f32 to vector<16x6xf32>
    %147 = arith.mulf %145, %146 : vector<16x6xf32>
    %148 = vector.broadcast %118 : vector<1x6xf32> to vector<16x6xf32>
    %149 = arith.addf %147, %148 : vector<16x6xf32>
    %c0_42 = arith.constant 0 : index
    %c0_43 = arith.constant 0 : index
    %150 = vector.load %arg2[%c0_42, %c0_43] : memref<16x6xf32, #tpu.memory_space<vmem>>, vector<16x6xf32>
    tpu.vector_store %arg2[%c0_42, %c0_43], %149 {strides = array<i32>} : memref<16x6xf32, #tpu.memory_space<vmem>>, vector<16x6xf32>,
    return
  }
}

</mosaic_0001>

<llo_original>
// kernel: fwd.1
$region0: #{fwd.1}
  #allocation0 [shape = 'u32[]', space=smem, size = 0x4, offset = 0x4, fixed_abs, tag = 'smem constant byte address 0x4 - core index']
  #allocation1 [shape = 'u32[144,128]{1,0:T(1,128)}', space=vmem, size = 0x12000, scoped, tag = 'internal scratch']
  %s0 = inlined_call_operand.hbm [shape: f32[32,128], index: 0, kind: input, shape index: {}]
  %s1 = inlined_call_operand.hbm [shape: f32[352,128], index: 1, kind: input, shape index: {}]
  %s2 = inlined_call_operand.vmem [shape: f32[16,6], index: 2, kind: output, shape index: {}]
  %s3 = sld [smem:[#allocation0]]
  $region26: #{fwd.1} parent=0
    _
  %s5 = ssub.s32 1, %s3
  %s6 = scalar_select 0, %s5, %s3
  $region1: #{fwd.1} parent=0
    #allocation2 [shape = 'u8[16384]{0}', space=vmem, size = 0x4000, scoped, tag = 'input window, operand 0, single buffered']
    #allocation3 [shape = 's32[1]{0}', space=sflag, size = 0x4, scoped, tag = 'scoped memory for fwd.1']
    #allocation4 [shape = 'u8[180224]{0}', space=vmem, size = 0x2c000, scoped, tag = 'input window, operand 1, single buffered']
    #allocation5 [shape = 's32[1]{0}', space=sflag, size = 0x4, scoped, tag = 'scoped memory for fwd.1']
    %7 = vsyncpa [#allocation3], 0
    %8 = vsyncpa [#allocation5], 0
    // Predicated region
    $region2: #{fwd.1} parent=1 // pred_check
      _
    $region3: #{fwd.1} parent=1 // pred_check_branch
      %10 = sbr.rel (0) target = $region5
    $region4: #{fwd.1} parent=1 // pred_region
      %s12 = ssub.s32 512, 512
      %13 = vsyncadd [#allocation3], %s12
      %s14 = sshll.u32 [#allocation2], 4
      %s15 = int_to_ptr.vmem [resolvable:$true] %s14
      %20 = dma.hbm_to_vmem [thread:$0]  %s0, 512, %s15, [#allocation3], 128, 128, 8
    $region5: #{fwd.1} parent=1 // pred_fallthru
      _
    // Predicated region
    $region6: #{fwd.1} parent=1 // pred_check
      _
    $region7: #{fwd.1} parent=1 // pred_check_branch
      %22 = sbr.rel (0) target = $region9
    $region8: #{fwd.1} parent=1 // pred_region
      %s24 = ssub.s32 5632, 5632
      %25 = vsyncadd [#allocation5], %s24
      %s26 = sshll.u32 [#allocation4], 4
      %s27 = int_to_ptr.vmem [resolvable:$true] %s26
      %32 = dma.hbm_to_vmem [thread:$0]  %s1, 5632, %s27, [#allocation5], 128, 128, 8
    $region9: #{fwd.1} parent=1 // pred_fallthru
      _
    // Predicated region
    $region10: #{fwd.1} parent=1 // pred_check
      _
    $region11: #{fwd.1} parent=1 // pred_check_branch
      %34 = sbr.rel (0) target = $region13
    $region12: #{fwd.1} parent=1 // pred_region
      %35 = dma.done [#allocation3], 512
    $region13: #{fwd.1} parent=1 // pred_fallthru
      _
    // Predicated region
    $region14: #{fwd.1} parent=1 // pred_check
      _
    $region15: #{fwd.1} parent=1 // pred_check_branch
      %37 = sbr.rel (0) target = $region17
    $region16: #{fwd.1} parent=1 // pred_region
      %38 = dma.done [#allocation5], 5632
    $region17: #{fwd.1} parent=1 // pred_fallthru
      _
    %v39 = vld [vmem:[#allocation2] sm:$0xff]
    %v40 = vld [vmem:[#allocation2 + $0x8] sm:$0xff]
    %v41 = vld [vmem:[#allocation2 + $0x10] sm:$0xff]
    %v42 = vld [vmem:[#allocation2 + $0x18] sm:$0xff]
    %v43 = vld [vmem:[#allocation4] sm:$0xff]
    %v44 = vld [vmem:[#allocation4 + $0x8] sm:$0xff]
    %v45 = vld [vmem:[#allocation4 + $0x10] sm:$0xff]
    %v46 = vld [vmem:[#allocation4 + $0x18] sm:$0xff]
    %v47 = vld [vmem:[#allocation4 + $0x20] sm:$0xff]
    %v48 = vld [vmem:[#allocation4 + $0x28] sm:$0xff]
    %v49 = vld [vmem:[#allocation4 + $0x30] sm:$0xff]
    %v50 = vld [vmem:[#allocation4 + $0x38] sm:$0xff]
    %v51 = vld [vmem:[#allocation4 + $0x40] sm:$0x1]
    %vm52 = vcmask 64512
    %v54 = vsel %vm52, %v39, 0
    %v57 = vsel %vm52, %v40, 0
    %59 = vmatprep.subr.mxu0 0.0
    %60 = vmatpush1.msra.mxu0 %v43
    %61 = vmatprep.subr.mxu0 0.0
    %62 = vmatpush1.msra.mxu0 0.0
    %63 = vmatprep.subr.mxu0 0.0
    %64 = vmatpush1.msra.mxu0 0.0
    %65 = vmatprep.subr.mxu0 0.0
    %66 = vmatpush1.msra.mxu0 0.0
    %67 = vmatprep.subr.mxu0 0.0
    %68 = vmatpush1.msra.mxu0 0.0
    %69 = vmatprep.subr.mxu0 0.0
    %70 = vmatpush1.msra.mxu0 0.0
    %71 = vmatprep.subr.mxu0 0.0
    %72 = vmatpush1.msra.mxu0 0.0
    %73 = vmatprep.subr.mxu0 0.0
    %74 = vmatpush1.msra.mxu0 0.0
    %75 = vmatprep.subr.mxu0 0.0
    %76 = vmatpush1.msra.mxu0 0.0
    %77 = vmatprep.subr.mxu0 0.0
    %78 = vmatpush1.msra.mxu0 0.0
    %79 = vmatprep.subr.mxu0 0.0
    %80 = vmatpush1.msra.mxu0 0.0
    %81 = vmatprep.subr.mxu0 0.0
    %82 = vmatpush1.msra.mxu0 0.0
    %83 = vmatprep.subr.mxu0 0.0
    %84 = vmatpush1.msra.mxu0 0.0
    %85 = vmatprep.subr.mxu0 0.0
    %86 = vmatpush1.msra.mxu0 0.0
    %87 = vmatprep.subr.mxu0 0.0
    %88 = vmatpush1.msra.mxu0 0.0
    %89 = vmatprep.subr.mxu0 0.0
    %90 = vmatpush1.msra.mxu0 0.0
    %91 = vmatprep.subr.mxu0 0.0
    %92 = vmatpush1.msra.mxu0 0.0
    %93 = vmatprep.subr.mxu0 0.0
    %94 = vmatpush1.msra.mxu0 0.0
    %95 = vmatprep.subr.mxu0 0.0
    %96 = vmatpush1.msra.mxu0 0.0
    %97 = vmatprep.subr.mxu0 0.0
    %98 = vmatpush1.msra.mxu0 0.0
    %99 = vmatprep.subr.mxu0 0.0
    %100 = vmatpush1.msra.mxu0 0.0
    %101 = vmatprep.subr.mxu0 0.0
    %102 = vmatpush1.msra.mxu0 0.0
    %103 = vmatprep.subr.mxu0 0.0
    %104 = vmatpush1.msra.mxu0 0.0
    %105 = vmatprep.subr.mxu0 0.0
    %106 = vmatpush1.msra.mxu0 0.0
    %107 = vmatprep.subr.mxu0 0.0
    %108 = vmatpush1.msra.mxu0 0.0
    %109 = vmatprep.subr.mxu0 0.0
    %110 = vmatpush1.msra.mxu0 0.0
    %111 = vmatprep.subr.mxu0 0.0
    %112 = vmatpush1.msra.mxu0 0.0
    %113 = vmatprep.subr.mxu0 0.0
    %114 = vmatpush1.msra.mxu0 0.0
    %115 = vmatprep.subr.mxu0 0.0
    %116 = vmatpush1.msra.mxu0 0.0
    %117 = vmatprep.subr.mxu0 0.0
    %118 = vmatpush1.msra.mxu0 0.0
    %119 = vmatprep.subr.mxu0 0.0
    %120 = vmatpush1.msra.mxu0 0.0
    %121 = vmatprep.subr.mxu0 0.0
    %122 = vmatpush1.msra.mxu0 0.0
    %123 = vmatprep.mubr.f32.mxu0 0.0
    %124 = vmatmul.mubr.f32.gmra.mrb[0].mxu0 %v54
    %v125 = vpop.f32.mrb[0].mxu0
    %v126 = vadd.f32 0.0, %v125
    %v127 = vpop.f32.mrb[0].mxu0
    %128 = vmatprep.mubr.f32.mxu0 0.0
    %129 = vmatmul.mubr.f32.gmra.mrb[0].mxu0 %v57
    %v130 = vpop.f32.mrb[0].mxu0
    %v131 = vadd.f32 0.0, %v130
    %v132 = vpop.f32.mrb[0].mxu0
    %133 = vdwg.mxu0
    %134 = vmatprep.subr.mxu0 0.0
    %135 = vmatpush1.msra.mxu0 %v44
    %136 = vmatprep.subr.mxu0 0.0
    %137 = vmatpush1.msra.mxu0 0.0
    %138 = vmatprep.subr.mxu0 0.0
    %139 = vmatpush1.msra.mxu0 0.0
    %140 = vmatprep.subr.mxu0 0.0
    %141 = vmatpush1.msra.mxu0 0.0
    %142 = vmatprep.subr.mxu0 0.0
    %143 = vmatpush1.msra.mxu0 0.0
    %144 = vmatprep.subr.mxu0 0.0
    %145 = vmatpush1.msra.mxu0 0.0
    %146 = vmatprep.subr.mxu0 0.0
    %147 = vmatpush1.msra.mxu0 0.0
    %148 = vmatprep.subr.mxu0 0.0
    %149 = vmatpush1.msra.mxu0 0.0
    %150 = vmatprep.subr.mxu0 0.0
    %151 = vmatpush1.msra.mxu0 0.0
    %152 = vmatprep.subr.mxu0 0.0
    %153 = vmatpush1.msra.mxu0 0.0
    %154 = vmatprep.subr.mxu0 0.0
    %155 = vmatpush1.msra.mxu0 0.0
    %156 = vmatprep.subr.mxu0 0.0
    %157 = vmatpush1.msra.mxu0 0.0
    %158 = vmatprep.subr.mxu0 0.0
    %159 = vmatpush1.msra.mxu0 0.0
    %160 = vmatprep.subr.mxu0 0.0
    %161 = vmatpush1.msra.mxu0 0.0
    %162 = vmatprep.subr.mxu0 0.0
    %163 = vmatpush1.msra.mxu0 0.0
    %164 = vmatprep.subr.mxu0 0.0
    %165 = vmatpush1.msra.mxu0 0.0
    %166 = vmatprep.subr.mxu0 0.0
    %167 = vmatpush1.msra.mxu0 0.0
    %168 = vmatprep.subr.mxu0 0.0
    %169 = vmatpush1.msra.mxu0 0.0
    %170 = vmatprep.subr.mxu0 0.0
    %171 = vmatpush1.msra.mxu0 0.0
    %172 = vmatprep.subr.mxu0 0.0
    %173 = vmatpush1.msra.mxu0 0.0
    %174 = vmatprep.subr.mxu0 0.0
    %175 = vmatpush1.msra.mxu0 0.0
    %176 = vmatprep.subr.mxu0 0.0
    %177 = vmatpush1.msra.mxu0 0.0
    %178 = vmatprep.subr.mxu0 0.0
    %179 = vmatpush1.msra.mxu0 0.0
    %180 = vmatprep.subr.mxu0 0.0
    %181 = vmatpush1.msra.mxu0 0.0
    %182 = vmatprep.subr.mxu0 0.0
    %183 = vmatpush1.msra.mxu0 0.0
    %184 = vmatprep.subr.mxu0 0.0
    %185 = vmatpush1.msra.mxu0 0.0
    %186 = vmatprep.subr.mxu0 0.0
    %187 = vmatpush1.msra.mxu0 0.0
    %188 = vmatprep.subr.mxu0 0.0
    %189 = vmatpush1.msra.mxu0 0.0
    %190 = vmatprep.subr.mxu0 0.0
    %191 = vmatpush1.msra.mxu0 0.0
    %192 = vmatprep.subr.mxu0 0.0
    %193 = vmatpush1.msra.mxu0 0.0
    %194 = vmatprep.subr.mxu0 0.0
    %195 = vmatpush1.msra.mxu0 0.0
    %196 = vmatprep.subr.mxu0 0.0
    %197 = vmatpush1.msra.mxu0 0.0
    %198 = vmatprep.mubr.f32.mxu0 0.0
    %199 = vmatmul.mubr.f32.gmra.mrb[0].mxu0 %v54
    %v200 = vpop.f32.mrb[0].mxu0
    %v201 = vadd.f32 0.0, %v200
    %v202 = vpop.f32.mrb[0].mxu0
    %203 = vmatprep.mubr.f32.mxu0 0.0
    %204 = vmatmul.mubr.f32.gmra.mrb[0].mxu0 %v57
    %v205 = vpop.f32.mrb[0].mxu0
    %v206 = vadd.f32 0.0, %v205
    %v207 = vpop.f32.mrb[0].mxu0
    %208 = vdwg.mxu0
    %209 = vmatprep.subr.mxu0 0.0
    %210 = vmatpush1.msra.mxu0 %v45
    %211 = vmatprep.subr.mxu0 0.0
    %212 = vmatpush1.msra.mxu0 0.0
    %213 = vmatprep.subr.mxu0 0.0
    %214 = vmatpush1.msra.mxu0 0.0
    %215 = vmatprep.subr.mxu0 0.0
    %216 = vmatpush1.msra.mxu0 0.0
    %217 = vmatprep.subr.mxu0 0.0
    %218 = vmatpush1.msra.mxu0 0.0
    %219 = vmatprep.subr.mxu0 0.0
    %220 = vmatpush1.msra.mxu0 0.0
    %221 = vmatprep.subr.mxu0 0.0
    %222 = vmatpush1.msra.mxu0 0.0
    %223 = vmatprep.subr.mxu0 0.0
    %224 = vmatpush1.msra.mxu0 0.0
    %225 = vmatprep.subr.mxu0 0.0
    %226 = vmatpush1.msra.mxu0 0.0
    %227 = vmatprep.subr.mxu0 0.0
    %228 = vmatpush1.msra.mxu0 0.0
    %229 = vmatprep.subr.mxu0 0.0
    %230 = vmatpush1.msra.mxu0 0.0
    %231 = vmatprep.subr.mxu0 0.0
    %232 = vmatpush1.msra.mxu0 0.0
    %233 = vmatprep.subr.mxu0 0.0
    %234 = vmatpush1.msra.mxu0 0.0
    %235 = vmatprep.subr.mxu0 0.0
    %236 = vmatpush1.msra.mxu0 0.0
    %237 = vmatprep.subr.mxu0 0.0
    %238 = vmatpush1.msra.mxu0 0.0
    %239 = vmatprep.subr.mxu0 0.0
    %240 = vmatpush1.msra.mxu0 0.0
    %241 = vmatprep.subr.mxu0 0.0
    %242 = vmatpush1.msra.mxu0 0.0
    %243 = vmatprep.subr.mxu0 0.0
    %244 = vmatpush1.msra.mxu0 0.0
    %245 = vmatprep.subr.mxu0 0.0
    %246 = vmatpush1.msra.mxu0 0.0
    %247 = vmatprep.subr.mxu0 0.0
    %248 = vmatpush1.msra.mxu0 0.0
    %249 = vmatprep.subr.mxu0 0.0
    %250 = vmatpush1.msra.mxu0 0.0
    %251 = vmatprep.subr.mxu0 0.0
    %252 = vmatpush1.msra.mxu0 0.0
    %253 = vmatprep.subr.mxu0 0.0
    %254 = vmatpush1.msra.mxu0 0.0
    %255 = vmatprep.subr.mxu0 0.0
    %256 = vmatpush1.msra.mxu0 0.0
    %257 = vmatprep.subr.mxu0 0.0
    %258 = vmatpush1.msra.mxu0 0.0
    %259 = vmatprep.subr.mxu0 0.0
    %260 = vmatpush1.msra.mxu0 0.0
    %261 = vmatprep.subr.mxu0 0.0
    %262 = vmatpush1.msra.mxu0 0.0
    %263 = vmatprep.subr.mxu0 0.0
    %264 = vmatpush1.msra.mxu0 0.0
    %265 = vmatprep.subr.mxu0 0.0
    %266 = vmatpush1.msra.mxu0 0.0
    %267 = vmatprep.subr.mxu0 0.0
    %268 = vmatpush1.msra.mxu0 0.0
    %269 = vmatprep.subr.mxu0 0.0
    %270 = vmatpush1.msra.mxu0 0.0
    %271 = vmatprep.subr.mxu0 0.0
    %272 = vmatpush1.msra.mxu0 0.0
    %273 = vmatprep.mubr.f32.mxu0 0.0
    %274 = vmatmul.mubr.f32.gmra.mrb[0].mxu0 %v54
    %v275 = vpop.f32.mrb[0].mxu0
    %v276 = vadd.f32 0.0, %v275
    %v277 = vpop.f32.mrb[0].mxu0
    %278 = vmatprep.mubr.f32.mxu0 0.0
    %279 = vmatmul.mubr.f32.gmra.mrb[0].mxu0 %v57
    %v280 = vpop.f32.mrb[0].mxu0
    %v281 = vadd.f32 0.0, %v280
    %v282 = vpop.f32.mrb[0].mxu0
    %283 = vdwg.mxu0
    %284 = vmatprep.subr.mxu0 0.0
    %285 = vmatpush1.msra.mxu0 %v46
    %286 = vmatprep.subr.mxu0 0.0
    %287 = vmatpush1.msra.mxu0 0.0
    %288 = vmatprep.subr.mxu0 0.0
    %289 = vmatpush1.msra.mxu0 0.0
    %290 = vmatprep.subr.mxu0 0.0
    %291 = vmatpush1.msra.mxu0 0.0
    %292 = vmatprep.subr.mxu0 0.0
    %293 = vmatpush1.msra.mxu0 0.0
    %294 = vmatprep.subr.mxu0 0.0
    %295 = vmatpush1.msra.mxu0 0.0
    %296 = vmatprep.subr.mxu0 0.0
    %297 = vmatpush1.msra.mxu0 0.0
    %298 = vmatprep.subr.mxu0 0.0
    %299 = vmatpush1.msra.mxu0 0.0
    %300 = vmatprep.subr.mxu0 0.0
    %301 = vmatpush1.msra.mxu0 0.0
    %302 = vmatprep.subr.mxu0 0.0
    %303 = vmatpush1.msra.mxu0 0.0
    %304 = vmatprep.subr.mxu0 0.0
    %305 = vmatpush1.msra.mxu0 0.0
    %306 = vmatprep.subr.mxu0 0.0
    %307 = vmatpush1.msra.mxu0 0.0
    %308 = vmatprep.subr.mxu0 0.0
    %309 = vmatpush1.msra.mxu0 0.0
    %310 = vmatprep.subr.mxu0 0.0
    %311 = vmatpush1.msra.mxu0 0.0
    %312 = vmatprep.subr.mxu0 0.0
    %313 = vmatpush1.msra.mxu0 0.0
    %314 = vmatprep.subr.mxu0 0.0
    %315 = vmatpush1.msra.mxu0 0.0
    %316 = vmatprep.subr.mxu0 0.0
    %317 = vmatpush1.msra.mxu0 0.0
    %318 = vmatprep.subr.mxu0 0.0
    %319 = vmatpush1.msra.mxu0 0.0
    %320 = vmatprep.subr.mxu0 0.0
    %321 = vmatpush1.msra.mxu0 0.0
    %322 = vmatprep.subr.mxu0 0.0
    %323 = vmatpush1.msra.mxu0 0.0
    %324 = vmatprep.subr.mxu0 0.0
    %325 = vmatpush1.msra.mxu0 0.0
    %326 = vmatprep.subr.mxu0 0.0
    %327 = vmatpush1.msra.mxu0 0.0
    %328 = vmatprep.subr.mxu0 0.0
    %329 = vmatpush1.msra.mxu0 0.0
    %330 = vmatprep.subr.mxu0 0.0
    %331 = vmatpush1.msra.mxu0 0.0
    %332 = vmatprep.subr.mxu0 0.0
    %333 = vmatpush1.msra.mxu0 0.0
    %334 = vmatprep.subr.mxu0 0.0
    %335 = vmatpush1.msra.mxu0 0.0
    %336 = vmatprep.subr.mxu0 0.0
    %337 = vmatpush1.msra.mxu0 0.0
    %338 = vmatprep.subr.mxu0 0.0
    %339 = vmatpush1.msra.mxu0 0.0
    %340 = vmatprep.subr.mxu0 0.0
    %341 = vmatpush1.msra.mxu0 0.0
    %342 = vmatprep.subr.mxu0 0.0
    %343 = vmatpush1.msra.mxu0 0.0
    %344 = vmatprep.subr.mxu0 0.0
    %345 = vmatpush1.msra.mxu0 0.0
    %346 = vmatprep.subr.mxu0 0.0
    %347 = vmatpush1.msra.mxu0 0.0
    %348 = vmatprep.mubr.f32.mxu0 0.0
    %349 = vmatmul.mubr.f32.gmra.mrb[0].mxu0 %v54
    %v350 = vpop.f32.mrb[0].mxu0
    %v351 = vadd.f32 0.0, %v350
    %v352 = vpop.f32.mrb[0].mxu0
    %353 = vmatprep.mubr.f32.mxu0 0.0
    %354 = vmatmul.mubr.f32.gmra.mrb[0].mxu0 %v57
    %v355 = vpop.f32.mrb[0].mxu0
    %v356 = vadd.f32 0.0, %v355
    %v357 = vpop.f32.mrb[0].mxu0
    %358 = vdwg.mxu0
    %vm359 = vcmask 31744
    %v361 = vsel %vm359, %v126, 0
    %v364 = vsel %vm359, %v131, 0
    %v367 = vsel %vm359, %v47, 0
    %369 = vmatprep.subr.mxu0 0.0
    %370 = vmatpush1.xpose.msra.mxu0 %v367
    %371 = vmatprep.subr.mxu0 0.0
    %372 = vmatpush1.xpose.msra.mxu0 0.0
    %373 = vmatprep.subr.mxu0 0.0
    %374 = vmatpush1.xpose.msra.mxu0 0.0
    %375 = vmatprep.subr.mxu0 0.0
    %376 = vmatpush1.xpose.msra.mxu0 0.0
    %377 = vmatprep.subr.mxu0 0.0
    %378 = vmatpush1.xpose.msra.mxu0 0.0
    %379 = vmatprep.subr.mxu0 0.0
    %380 = vmatpush1.xpose.msra.mxu0 0.0
    %381 = vmatprep.subr.mxu0 0.0
    %382 = vmatpush1.xpose.msra.mxu0 0.0
    %383 = vmatprep.subr.mxu0 0.0
    %384 = vmatpush1.xpose.msra.mxu0 0.0
    %385 = vmatprep.subr.mxu0 0.0
    %386 = vmatpush1.xpose.msra.mxu0 0.0
    %387 = vmatprep.subr.mxu0 0.0
    %388 = vmatpush1.xpose.msra.mxu0 0.0
    %389 = vmatprep.subr.mxu0 0.0
    %390 = vmatpush1.xpose.msra.mxu0 0.0
    %391 = vmatprep.subr.mxu0 0.0
    %392 = vmatpush1.xpose.msra.mxu0 0.0
    %393 = vmatprep.subr.mxu0 0.0
    %394 = vmatpush1.xpose.msra.mxu0 0.0
    %395 = vmatprep.subr.mxu0 0.0
    %396 = vmatpush1.xpose.msra.mxu0 0.0
    %397 = vmatprep.subr.mxu0 0.0
    %398 = vmatpush1.xpose.msra.mxu0 0.0
    %399 = vmatprep.subr.mxu0 0.0
    %400 = vmatpush1.xpose.msra.mxu0 0.0
    %401 = vmatprep.subr.mxu0 0.0
    %402 = vmatpush1.xpose.msra.mxu0 0.0
    %403 = vmatprep.subr.mxu0 0.0
    %404 = vmatpush1.xpose.msra.mxu0 0.0
    %405 = vmatprep.subr.mxu0 0.0
    %406 = vmatpush1.xpose.msra.mxu0 0.0
    %407 = vmatprep.subr.mxu0 0.0
    %408 = vmatpush1.xpose.msra.mxu0 0.0
    %409 = vmatprep.subr.mxu0 0.0
    %410 = vmatpush1.xpose.msra.mxu0 0.0
    %411 = vmatprep.subr.mxu0 0.0
    %412 = vmatpush1.xpose.msra.mxu0 0.0
    %413 = vmatprep.subr.mxu0 0.0
    %414 = vmatpush1.xpose.msra.mxu0 0.0
    %415 = vmatprep.subr.mxu0 0.0
    %416 = vmatpush1.xpose.msra.mxu0 0.0
    %417 = vmatprep.subr.mxu0 0.0
    %418 = vmatpush1.xpose.msra.mxu0 0.0
    %419 = vmatprep.subr.mxu0 0.0
    %420 = vmatpush1.xpose.msra.mxu0 0.0
    %421 = vmatprep.subr.mxu0 0.0
    %422 = vmatpush1.xpose.msra.mxu0 0.0
    %423 = vmatprep.subr.mxu0 0.0
    %424 = vmatpush1.xpose.msra.mxu0 0.0
    %425 = vmatprep.subr.mxu0 0.0
    %426 = vmatpush1.xpose.msra.mxu0 0.0
    %427 = vmatprep.subr.mxu0 0.0
    %428 = vmatpush1.xpose.msra.mxu0 0.0
    %429 = vmatprep.subr.mxu0 0.0
    %430 = vmatpush1.xpose.msra.mxu0 0.0
    %431 = vmatprep.subr.mxu0 0.0
    %432 = vmatpush1.xpose.msra.mxu0 0.0
    %433 = vmatprep.mubr.f32.mxu0 0.0
    %434 = vmatmul.mubr.f32.gmra.mrb[0].mxu0 %v361
    %v435 = vpop.f32.mrb[0].mxu0
    %v436 = vadd.f32 0.0, %v435
    %v437 = vpop.f32.mrb[0].mxu0
    %438 = vmatprep.mubr.f32.mxu0 0.0
    %439 = vmatmul.mubr.f32.gmra.mrb[0].mxu0 %v364
    %v440 = vpop.f32.mrb[0].mxu0
    %v441 = vadd.f32 0.0, %v440
    %v442 = vpop.f32.mrb[0].mxu0
    %443 = vdwg.mxu0
    %v445 = vsel %vm359, %v201, 0
    %v448 = vsel %vm359, %v206, 0
    %v451 = vsel %vm359, %v48, 0
    %453 = vmatprep.subr.mxu0 0.0
    %454 = vmatpush1.xpose.msra.mxu0 %v451
    %455 = vmatprep.subr.mxu0 0.0
    %456 = vmatpush1.xpose.msra.mxu0 0.0
    %457 = vmatprep.subr.mxu0 0.0
    %458 = vmatpush1.xpose.msra.mxu0 0.0
    %459 = vmatprep.subr.mxu0 0.0
    %460 = vmatpush1.xpose.msra.mxu0 0.0
    %461 = vmatprep.subr.mxu0 0.0
    %462 = vmatpush1.xpose.msra.mxu0 0.0
    %463 = vmatprep.subr.mxu0 0.0
    %464 = vmatpush1.xpose.msra.mxu0 0.0
    %465 = vmatprep.subr.mxu0 0.0
    %466 = vmatpush1.xpose.msra.mxu0 0.0
    %467 = vmatprep.subr.mxu0 0.0
    %468 = vmatpush1.xpose.msra.mxu0 0.0
    %469 = vmatprep.subr.mxu0 0.0
    %470 = vmatpush1.xpose.msra.mxu0 0.0
    %471 = vmatprep.subr.mxu0 0.0
    %472 = vmatpush1.xpose.msra.mxu0 0.0
    %473 = vmatprep.subr.mxu0 0.0
    %474 = vmatpush1.xpose.msra.mxu0 0.0
    %475 = vmatprep.subr.mxu0 0.0
    %476 = vmatpush1.xpose.msra.mxu0 0.0
    %477 = vmatprep.subr.mxu0 0.0
    %478 = vmatpush1.xpose.msra.mxu0 0.0
    %479 = vmatprep.subr.mxu0 0.0
    %480 = vmatpush1.xpose.msra.mxu0 0.0
    %481 = vmatprep.subr.mxu0 0.0
    %482 = vmatpush1.xpose.msra.mxu0 0.0
    %483 = vmatprep.subr.mxu0 0.0
    %484 = vmatpush1.xpose.msra.mxu0 0.0
    %485 = vmatprep.subr.mxu0 0.0
    %486 = vmatpush1.xpose.msra.mxu0 0.0
    %487 = vmatprep.subr.mxu0 0.0
    %488 = vmatpush1.xpose.msra.mxu0 0.0
    %489 = vmatprep.subr.mxu0 0.0
    %490 = vmatpush1.xpose.msra.mxu0 0.0
    %491 = vmatprep.subr.mxu0 0.0
    %492 = vmatpush1.xpose.msra.mxu0 0.0
    %493 = vmatprep.subr.mxu0 0.0
    %494 = vmatpush1.xpose.msra.mxu0 0.0
    %495 = vmatprep.subr.mxu0 0.0
    %496 = vmatpush1.xpose.msra.mxu0 0.0
    %497 = vmatprep.subr.mxu0 0.0
    %498 = vmatpush1.xpose.msra.mxu0 0.0
    %499 = vmatprep.subr.mxu0 0.0
    %500 = vmatpush1.xpose.msra.mxu0 0.0
    %501 = vmatprep.subr.mxu0 0.0
    %502 = vmatpush1.xpose.msra.mxu0 0.0
    %503 = vmatprep.subr.mxu0 0.0
    %504 = vmatpush1.xpose.msra.mxu0 0.0
    %505 = vmatprep.subr.mxu0 0.0
    %506 = vmatpush1.xpose.msra.mxu0 0.0
    %507 = vmatprep.subr.mxu0 0.0
    %508 = vmatpush1.xpose.msra.mxu0 0.0
    %509 = vmatprep.subr.mxu0 0.0
    %510 = vmatpush1.xpose.msra.mxu0 0.0
    %511 = vmatprep.subr.mxu0 0.0
    %512 = vmatpush1.xpose.msra.mxu0 0.0
    %513 = vmatprep.subr.mxu0 0.0
    %514 = vmatpush1.xpose.msra.mxu0 0.0
    %515 = vmatprep.subr.mxu0 0.0
    %516 = vmatpush1.xpose.msra.mxu0 0.0
    %517 = vmatprep.mubr.f32.mxu0 0.0
    %518 = vmatmul.mubr.f32.gmra.mrb[0].mxu0 %v445
    %v519 = vpop.f32.mrb[0].mxu0
    %v520 = vadd.f32 0.0, %v519
    %v521 = vpop.f32.mrb[0].mxu0
    %522 = vmatprep.mubr.f32.mxu0 0.0
    %523 = vmatmul.mubr.f32.gmra.mrb[0].mxu0 %v448
    %v524 = vpop.f32.mrb[0].mxu0
    %v525 = vadd.f32 0.0, %v524
    %v526 = vpop.f32.mrb[0].mxu0
    %527 = vdwg.mxu0
    %v529 = vsel %vm359, %v276, 0
    %v532 = vsel %vm359, %v281, 0
    %v535 = vsel %vm359, %v49, 0
    %537 = vmatprep.subr.mxu0 0.0
    %538 = vmatpush1.xpose.msra.mxu0 %v535
    %539 = vmatprep.subr.mxu0 0.0
    %540 = vmatpush1.xpose.msra.mxu0 0.0
    %541 = vmatprep.subr.mxu0 0.0
    %542 = vmatpush1.xpose.msra.mxu0 0.0
    %543 = vmatprep.subr.mxu0 0.0
    %544 = vmatpush1.xpose.msra.mxu0 0.0
    %545 = vmatprep.subr.mxu0 0.0
    %546 = vmatpush1.xpose.msra.mxu0 0.0
    %547 = vmatprep.subr.mxu0 0.0
    %548 = vmatpush1.xpose.msra.mxu0 0.0
    %549 = vmatprep.subr.mxu0 0.0
    %550 = vmatpush1.xpose.msra.mxu0 0.0
    %551 = vmatprep.subr.mxu0 0.0
    %552 = vmatpush1.xpose.msra.mxu0 0.0
    %553 = vmatprep.subr.mxu0 0.0
    %554 = vmatpush1.xpose.msra.mxu0 0.0
    %555 = vmatprep.subr.mxu0 0.0
    %556 = vmatpush1.xpose.msra.mxu0 0.0
    %557 = vmatprep.subr.mxu0 0.0
    %558 = vmatpush1.xpose.msra.mxu0 0.0
    %559 = vmatprep.subr.mxu0 0.0
    %560 = vmatpush1.xpose.msra.mxu0 0.0
    %561 = vmatprep.subr.mxu0 0.0
    %562 = vmatpush1.xpose.msra.mxu0 0.0
    %563 = vmatprep.subr.mxu0 0.0
    %564 = vmatpush1.xpose.msra.mxu0 0.0
    %565 = vmatprep.subr.mxu0 0.0
    %566 = vmatpush1.xpose.msra.mxu0 0.0
    %567 = vmatprep.subr.mxu0 0.0
    %568 = vmatpush1.xpose.msra.mxu0 0.0
    %569 = vmatprep.subr.mxu0 0.0
    %570 = vmatpush1.xpose.msra.mxu0 0.0
    %571 = vmatprep.subr.mxu0 0.0
    %572 = vmatpush1.xpose.msra.mxu0 0.0
    %573 = vmatprep.subr.mxu0 0.0
    %574 = vmatpush1.xpose.msra.mxu0 0.0
    %575 = vmatprep.subr.mxu0 0.0
    %576 = vmatpush1.xpose.msra.mxu0 0.0
    %577 = vmatprep.subr.mxu0 0.0
    %578 = vmatpush1.xpose.msra.mxu0 0.0
    %579 = vmatprep.subr.mxu0 0.0
    %580 = vmatpush1.xpose.msra.mxu0 0.0
    %581 = vmatprep.subr.mxu0 0.0
    %582 = vmatpush1.xpose.msra.mxu0 0.0
    %583 = vmatprep.subr.mxu0 0.0
    %584 = vmatpush1.xpose.msra.mxu0 0.0
    %585 = vmatprep.subr.mxu0 0.0
    %586 = vmatpush1.xpose.msra.mxu0 0.0
    %587 = vmatprep.subr.mxu0 0.0
    %588 = vmatpush1.xpose.msra.mxu0 0.0
    %589 = vmatprep.subr.mxu0 0.0
    %590 = vmatpush1.xpose.msra.mxu0 0.0
    %591 = vmatprep.subr.mxu0 0.0
    %592 = vmatpush1.xpose.msra.mxu0 0.0
    %593 = vmatprep.subr.mxu0 0.0
    %594 = vmatpush1.xpose.msra.mxu0 0.0
    %595 = vmatprep.subr.mxu0 0.0
    %596 = vmatpush1.xpose.msra.mxu0 0.0
    %597 = vmatprep.subr.mxu0 0.0
    %598 = vmatpush1.xpose.msra.mxu0 0.0
    %599 = vmatprep.subr.mxu0 0.0
    %600 = vmatpush1.xpose.msra.mxu0 0.0
    %601 = vmatprep.mubr.f32.mxu0 0.0
    %602 = vmatmul.mubr.f32.gmra.mrb[0].mxu0 %v529
    %v603 = vpop.f32.mrb[0].mxu0
    %v604 = vadd.f32 0.0, %v603
    %v605 = vpop.f32.mrb[0].mxu0
    %606 = vmatprep.mubr.f32.mxu0 0.0
    %607 = vmatmul.mubr.f32.gmra.mrb[0].mxu0 %v532
    %v608 = vpop.f32.mrb[0].mxu0
    %v609 = vadd.f32 0.0, %v608
    %v610 = vpop.f32.mrb[0].mxu0
    %611 = vdwg.mxu0
    %v613 = vsel %vm359, %v351, 0
    %v616 = vsel %vm359, %v356, 0
    %v619 = vsel %vm359, %v50, 0
    %621 = vmatprep.subr.mxu0 0.0
    %622 = vmatpush1.xpose.msra.mxu0 %v619
    %623 = vmatprep.subr.mxu0 0.0
    %624 = vmatpush1.xpose.msra.mxu0 0.0
    %625 = vmatprep.subr.mxu0 0.0
    %626 = vmatpush1.xpose.msra.mxu0 0.0
    %627 = vmatprep.subr.mxu0 0.0
    %628 = vmatpush1.xpose.msra.mxu0 0.0
    %629 = vmatprep.subr.mxu0 0.0
    %630 = vmatpush1.xpose.msra.mxu0 0.0
    %631 = vmatprep.subr.mxu0 0.0
    %632 = vmatpush1.xpose.msra.mxu0 0.0
    %633 = vmatprep.subr.mxu0 0.0
    %634 = vmatpush1.xpose.msra.mxu0 0.0
    %635 = vmatprep.subr.mxu0 0.0
    %636 = vmatpush1.xpose.msra.mxu0 0.0
    %637 = vmatprep.subr.mxu0 0.0
    %638 = vmatpush1.xpose.msra.mxu0 0.0
    %639 = vmatprep.subr.mxu0 0.0
    %640 = vmatpush1.xpose.msra.mxu0 0.0
    %641 = vmatprep.subr.mxu0 0.0
    %642 = vmatpush1.xpose.msra.mxu0 0.0
    %643 = vmatprep.subr.mxu0 0.0
    %644 = vmatpush1.xpose.msra.mxu0 0.0
    %645 = vmatprep.subr.mxu0 0.0
    %646 = vmatpush1.xpose.msra.mxu0 0.0
    %647 = vmatprep.subr.mxu0 0.0
    %648 = vmatpush1.xpose.msra.mxu0 0.0
    %649 = vmatprep.subr.mxu0 0.0
    %650 = vmatpush1.xpose.msra.mxu0 0.0
    %651 = vmatprep.subr.mxu0 0.0
    %652 = vmatpush1.xpose.msra.mxu0 0.0
    %653 = vmatprep.subr.mxu0 0.0
    %654 = vmatpush1.xpose.msra.mxu0 0.0
    %655 = vmatprep.subr.mxu0 0.0
    %656 = vmatpush1.xpose.msra.mxu0 0.0
    %657 = vmatprep.subr.mxu0 0.0
    %658 = vmatpush1.xpose.msra.mxu0 0.0
    %659 = vmatprep.subr.mxu0 0.0
    %660 = vmatpush1.xpose.msra.mxu0 0.0
    %661 = vmatprep.subr.mxu0 0.0
    %662 = vmatpush1.xpose.msra.mxu0 0.0
    %663 = vmatprep.subr.mxu0 0.0
    %664 = vmatpush1.xpose.msra.mxu0 0.0
    %665 = vmatprep.subr.mxu0 0.0
    %666 = vmatpush1.xpose.msra.mxu0 0.0
    %667 = vmatprep.subr.mxu0 0.0
    %668 = vmatpush1.xpose.msra.mxu0 0.0
    %669 = vmatprep.subr.mxu0 0.0
    %670 = vmatpush1.xpose.msra.mxu0 0.0
    %671 = vmatprep.subr.mxu0 0.0
    %672 = vmatpush1.xpose.msra.mxu0 0.0
    %673 = vmatprep.subr.mxu0 0.0
    %674 = vmatpush1.xpose.msra.mxu0 0.0
    %675 = vmatprep.subr.mxu0 0.0
    %676 = vmatpush1.xpose.msra.mxu0 0.0
    %677 = vmatprep.subr.mxu0 0.0
    %678 = vmatpush1.xpose.msra.mxu0 0.0
    %679 = vmatprep.subr.mxu0 0.0
    %680 = vmatpush1.xpose.msra.mxu0 0.0
    %681 = vmatprep.subr.mxu0 0.0
    %682 = vmatpush1.xpose.msra.mxu0 0.0
    %683 = vmatprep.subr.mxu0 0.0
    %684 = vmatpush1.xpose.msra.mxu0 0.0
    %685 = vmatprep.mubr.f32.mxu0 0.0
    %686 = vmatmul.mubr.f32.gmra.mrb[0].mxu0 %v613
    %v687 = vpop.f32.mrb[0].mxu0
    %v688 = vadd.f32 0.0, %v687
    %v689 = vpop.f32.mrb[0].mxu0
    %690 = vmatprep.mubr.f32.mxu0 0.0
    %691 = vmatmul.mubr.f32.gmra.mrb[0].mxu0 %v616
    %v692 = vpop.f32.mrb[0].mxu0
    %v693 = vadd.f32 0.0, %v692
    %v694 = vpop.f32.mrb[0].mxu0
    %695 = vdwg.mxu0
    %696 = vmatprep.subr.mxu0 0.0
    %697 = vmatpush1.xpose.msra.mxu0 %v361
    %698 = vmatprep.subr.mxu0 0.0
    %699 = vmatpush1.xpose.msra.mxu0 %v364
    %700 = vmatprep.subr.mxu0 0.0
    %701 = vmatpush1.xpose.msra.mxu0 0.0
    %702 = vmatprep.subr.mxu0 0.0
    %703 = vmatpush1.xpose.msra.mxu0 0.0
    %704 = vmatprep.subr.mxu0 0.0
    %705 = vmatpush1.xpose.msra.mxu0 0.0
    %706 = vmatprep.subr.mxu0 0.0
    %707 = vmatpush1.xpose.msra.mxu0 0.0
    %708 = vmatprep.subr.mxu0 0.0
    %709 = vmatpush1.xpose.msra.mxu0 0.0
    %710 = vmatprep.subr.mxu0 0.0
    %711 = vmatpush1.xpose.msra.mxu0 0.0
    %712 = vmatprep.subr.mxu0 0.0
    %713 = vmatpush1.xpose.msra.mxu0 0.0
    %714 = vmatprep.subr.mxu0 0.0
    %715 = vmatpush1.xpose.msra.mxu0 0.0
    %716 = vmatprep.subr.mxu0 0.0
    %717 = vmatpush1.xpose.msra.mxu0 0.0
    %718 = vmatprep.subr.mxu0 0.0
    %719 = vmatpush1.xpose.msra.mxu0 0.0
    %720 = vmatprep.subr.mxu0 0.0
    %721 = vmatpush1.xpose.msra.mxu0 0.0
    %722 = vmatprep.subr.mxu0 0.0
    %723 = vmatpush1.xpose.msra.mxu0 0.0
    %724 = vmatprep.subr.mxu0 0.0
    %725 = vmatpush1.xpose.msra.mxu0 0.0
    %726 = vmatprep.subr.mxu0 0.0
    %727 = vmatpush1.xpose.msra.mxu0 0.0
    %728 = vmatprep.subr.mxu0 0.0
    %729 = vmatpush1.xpose.msra.mxu0 0.0
    %730 = vmatprep.subr.mxu0 0.0
    %731 = vmatpush1.xpose.msra.mxu0 0.0
    %732 = vmatprep.subr.mxu0 0.0
    %733 = vmatpush1.xpose.msra.mxu0 0.0
    %734 = vmatprep.subr.mxu0 0.0
    %735 = vmatpush1.xpose.msra.mxu0 0.0
    %736 = vmatprep.subr.mxu0 0.0
    %737 = vmatpush1.xpose.msra.mxu0 0.0
    %738 = vmatprep.subr.mxu0 0.0
    %739 = vmatpush1.xpose.msra.mxu0 0.0
    %740 = vmatprep.subr.mxu0 0.0
    %741 = vmatpush1.xpose.msra.mxu0 0.0
    %742 = vmatprep.subr.mxu0 0.0
    %743 = vmatpush1.xpose.msra.mxu0 0.0
    %744 = vmatprep.subr.mxu0 0.0
    %745 = vmatpush1.xpose.msra.mxu0 0.0
    %746 = vmatprep.subr.mxu0 0.0
    %747 = vmatpush1.xpose.msra.mxu0 0.0
    %748 = vmatprep.subr.mxu0 0.0
    %749 = vmatpush1.xpose.msra.mxu0 0.0
    %750 = vmatprep.subr.mxu0 0.0
    %751 = vmatpush1.xpose.msra.mxu0 0.0
    %752 = vmatprep.subr.mxu0 0.0
    %753 = vmatpush1.xpose.msra.mxu0 0.0
    %754 = vmatprep.subr.mxu0 0.0
    %755 = vmatpush1.xpose.msra.mxu0 0.0
    %756 = vmatprep.subr.mxu0 0.0
    %757 = vmatpush1.xpose.msra.mxu0 0.0
    %758 = vmatprep.subr.mxu0 0.0
    %759 = vmatpush1.xpose.msra.mxu0 0.0
    %760 = vmatprep.mubr.f32.mxu0 0.0
    %761 = vmatmul.mubr.f32.gmra.mrb[0].mxu0 %v367
    %v762 = vpop.f32.mrb[0].mxu0
    %v763 = vadd.f32 0.0, %v762
    %v764 = vpop.f32.mrb[0].mxu0
    %765 = vdwg.mxu0
    %766 = vmatprep.subr.mxu0 0.0
    %767 = vmatpush1.xpose.msra.mxu0 %v445
    %768 = vmatprep.subr.mxu0 0.0
    %769 = vmatpush1.xpose.msra.mxu0 %v448
    %770 = vmatprep.subr.mxu0 0.0
    %771 = vmatpush1.xpose.msra.mxu0 0.0
    %772 = vmatprep.subr.mxu0 0.0
    %773 = vmatpush1.xpose.msra.mxu0 0.0
    %774 = vmatprep.subr.mxu0 0.0
    %775 = vmatpush1.xpose.msra.mxu0 0.0
    %776 = vmatprep.subr.mxu0 0.0
    %777 = vmatpush1.xpose.msra.mxu0 0.0
    %778 = vmatprep.subr.mxu0 0.0
    %779 = vmatpush1.xpose.msra.mxu0 0.0
    %780 = vmatprep.subr.mxu0 0.0
    %781 = vmatpush1.xpose.msra.mxu0 0.0
    %782 = vmatprep.subr.mxu0 0.0
    %783 = vmatpush1.xpose.msra.mxu0 0.0
    %784 = vmatprep.subr.mxu0 0.0
    %785 = vmatpush1.xpose.msra.mxu0 0.0
    %786 = vmatprep.subr.mxu0 0.0
    %787 = vmatpush1.xpose.msra.mxu0 0.0
    %788 = vmatprep.subr.mxu0 0.0
    %789 = vmatpush1.xpose.msra.mxu0 0.0
    %790 = vmatprep.subr.mxu0 0.0
    %791 = vmatpush1.xpose.msra.mxu0 0.0
    %792 = vmatprep.subr.mxu0 0.0
    %793 = vmatpush1.xpose.msra.mxu0 0.0
    %794 = vmatprep.subr.mxu0 0.0
    %795 = vmatpush1.xpose.msra.mxu0 0.0
    %796 = vmatprep.subr.mxu0 0.0
    %797 = vmatpush1.xpose.msra.mxu0 0.0
    %798 = vmatprep.subr.mxu0 0.0
    %799 = vmatpush1.xpose.msra.mxu0 0.0
    %800 = vmatprep.subr.mxu0 0.0
    %801 = vmatpush1.xpose.msra.mxu0 0.0
    %802 = vmatprep.subr.mxu0 0.0
    %803 = vmatpush1.xpose.msra.mxu0 0.0
    %804 = vmatprep.subr.mxu0 0.0
    %805 = vmatpush1.xpose.msra.mxu0 0.0
    %806 = vmatprep.subr.mxu0 0.0
    %807 = vmatpush1.xpose.msra.mxu0 0.0
    %808 = vmatprep.subr.mxu0 0.0
    %809 = vmatpush1.xpose.msra.mxu0 0.0
    %810 = vmatprep.subr.mxu0 0.0
    %811 = vmatpush1.xpose.msra.mxu0 0.0
    %812 = vmatprep.subr.mxu0 0.0
    %813 = vmatpush1.xpose.msra.mxu0 0.0
    %814 = vmatprep.subr.mxu0 0.0
    %815 = vmatpush1.xpose.msra.mxu0 0.0
    %816 = vmatprep.subr.mxu0 0.0
    %817 = vmatpush1.xpose.msra.mxu0 0.0
    %818 = vmatprep.subr.mxu0 0.0
    %819 = vmatpush1.xpose.msra.mxu0 0.0
    %820 = vmatprep.subr.mxu0 0.0
    %821 = vmatpush1.xpose.msra.mxu0 0.0
    %822 = vmatprep.subr.mxu0 0.0
    %823 = vmatpush1.xpose.msra.mxu0 0.0
    %824 = vmatprep.subr.mxu0 0.0
    %825 = vmatpush1.xpose.msra.mxu0 0.0
    %826 = vmatprep.subr.mxu0 0.0
    %827 = vmatpush1.xpose.msra.mxu0 0.0
    %828 = vmatprep.subr.mxu0 0.0
    %829 = vmatpush1.xpose.msra.mxu0 0.0
    %830 = vmatprep.mubr.f32.mxu0 0.0
    %831 = vmatmul.mubr.f32.gmra.mrb[0].mxu0 %v451
    %v832 = vpop.f32.mrb[0].mxu0
    %v833 = vadd.f32 0.0, %v832
    %v834 = vpop.f32.mrb[0].mxu0
    %835 = vdwg.mxu0
    %836 = vmatprep.subr.mxu0 0.0
    %837 = vmatpush1.xpose.msra.mxu0 %v529
    %838 = vmatprep.subr.mxu0 0.0
    %839 = vmatpush1.xpose.msra.mxu0 %v532
    %840 = vmatprep.subr.mxu0 0.0
    %841 = vmatpush1.xpose.msra.mxu0 0.0
    %842 = vmatprep.subr.mxu0 0.0
    %843 = vmatpush1.xpose.msra.mxu0 0.0
    %844 = vmatprep.subr.mxu0 0.0
    %845 = vmatpush1.xpose.msra.mxu0 0.0
    %846 = vmatprep.subr.mxu0 0.0
    %847 = vmatpush1.xpose.msra.mxu0 0.0
    %848 = vmatprep.subr.mxu0 0.0
    %849 = vmatpush1.xpose.msra.mxu0 0.0
    %850 = vmatprep.subr.mxu0 0.0
    %851 = vmatpush1.xpose.msra.mxu0 0.0
    %852 = vmatprep.subr.mxu0 0.0
    %853 = vmatpush1.xpose.msra.mxu0 0.0
    %854 = vmatprep.subr.mxu0 0.0
    %855 = vmatpush1.xpose.msra.mxu0 0.0
    %856 = vmatprep.subr.mxu0 0.0
    %857 = vmatpush1.xpose.msra.mxu0 0.0
    %858 = vmatprep.subr.mxu0 0.0
    %859 = vmatpush1.xpose.msra.mxu0 0.0
    %860 = vmatprep.subr.mxu0 0.0
    %861 = vmatpush1.xpose.msra.mxu0 0.0
    %862 = vmatprep.subr.mxu0 0.0
    %863 = vmatpush1.xpose.msra.mxu0 0.0
    %864 = vmatprep.subr.mxu0 0.0
    %865 = vmatpush1.xpose.msra.mxu0 0.0
    %866 = vmatprep.subr.mxu0 0.0
    %867 = vmatpush1.xpose.msra.mxu0 0.0
    %868 = vmatprep.subr.mxu0 0.0
    %869 = vmatpush1.xpose.msra.mxu0 0.0
    %870 = vmatprep.subr.mxu0 0.0
    %871 = vmatpush1.xpose.msra.mxu0 0.0
    %872 = vmatprep.subr.mxu0 0.0
    %873 = vmatpush1.xpose.msra.mxu0 0.0
    %874 = vmatprep.subr.mxu0 0.0
    %875 = vmatpush1.xpose.msra.mxu0 0.0
    %876 = vmatprep.subr.mxu0 0.0
    %877 = vmatpush1.xpose.msra.mxu0 0.0
    %878 = vmatprep.subr.mxu0 0.0
    %879 = vmatpush1.xpose.msra.mxu0 0.0
    %880 = vmatprep.subr.mxu0 0.0
    %881 = vmatpush1.xpose.msra.mxu0 0.0
    %882 = vmatprep.subr.mxu0 0.0
    %883 = vmatpush1.xpose.msra.mxu0 0.0
    %884 = vmatprep.subr.mxu0 0.0
    %885 = vmatpush1.xpose.msra.mxu0 0.0
    %886 = vmatprep.subr.mxu0 0.0
    %887 = vmatpush1.xpose.msra.mxu0 0.0
    %888 = vmatprep.subr.mxu0 0.0
    %889 = vmatpush1.xpose.msra.mxu0 0.0
    %890 = vmatprep.subr.mxu0 0.0
    %891 = vmatpush1.xpose.msra.mxu0 0.0
    %892 = vmatprep.subr.mxu0 0.0
    %893 = vmatpush1.xpose.msra.mxu0 0.0
    %894 = vmatprep.subr.mxu0 0.0
    %895 = vmatpush1.xpose.msra.mxu0 0.0
    %896 = vmatprep.subr.mxu0 0.0
    %897 = vmatpush1.xpose.msra.mxu0 0.0
    %898 = vmatprep.subr.mxu0 0.0
    %899 = vmatpush1.xpose.msra.mxu0 0.0
    %900 = vmatprep.mubr.f32.mxu0 0.0
    %901 = vmatmul.mubr.f32.gmra.mrb[0].mxu0 %v535
    %v902 = vpop.f32.mrb[0].mxu0
    %v903 = vadd.f32 0.0, %v902
    %v904 = vpop.f32.mrb[0].mxu0
    %905 = vdwg.mxu0
    %906 = vmatprep.subr.mxu0 0.0
    %907 = vmatpush1.xpose.msra.mxu0 %v613
    %908 = vmatprep.subr.mxu0 0.0
    %909 = vmatpush1.xpose.msra.mxu0 %v616
    %910 = vmatprep.subr.mxu0 0.0
    %911 = vmatpush1.xpose.msra.mxu0 0.0
    %912 = vmatprep.subr.mxu0 0.0
    %913 = vmatpush1.xpose.msra.mxu0 0.0
    %914 = vmatprep.subr.mxu0 0.0
    %915 = vmatpush1.xpose.msra.mxu0 0.0
    %916 = vmatprep.subr.mxu0 0.0
    %917 = vmatpush1.xpose.msra.mxu0 0.0
    %918 = vmatprep.subr.mxu0 0.0
    %919 = vmatpush1.xpose.msra.mxu0 0.0
    %920 = vmatprep.subr.mxu0 0.0
    %921 = vmatpush1.xpose.msra.mxu0 0.0
    %922 = vmatprep.subr.mxu0 0.0
    %923 = vmatpush1.xpose.msra.mxu0 0.0
    %924 = vmatprep.subr.mxu0 0.0
    %925 = vmatpush1.xpose.msra.mxu0 0.0
    %926 = vmatprep.subr.mxu0 0.0
    %927 = vmatpush1.xpose.msra.mxu0 0.0
    %928 = vmatprep.subr.mxu0 0.0
    %929 = vmatpush1.xpose.msra.mxu0 0.0
    %930 = vmatprep.subr.mxu0 0.0
    %931 = vmatpush1.xpose.msra.mxu0 0.0
    %932 = vmatprep.subr.mxu0 0.0
    %933 = vmatpush1.xpose.msra.mxu0 0.0
    %934 = vmatprep.subr.mxu0 0.0
    %935 = vmatpush1.xpose.msra.mxu0 0.0
    %936 = vmatprep.subr.mxu0 0.0
    %937 = vmatpush1.xpose.msra.mxu0 0.0
    %938 = vmatprep.subr.mxu0 0.0
    %939 = vmatpush1.xpose.msra.mxu0 0.0
    %940 = vmatprep.subr.mxu0 0.0
    %941 = vmatpush1.xpose.msra.mxu0 0.0
    %942 = vmatprep.subr.mxu0 0.0
    %943 = vmatpush1.xpose.msra.mxu0 0.0
    %944 = vmatprep.subr.mxu0 0.0
    %945 = vmatpush1.xpose.msra.mxu0 0.0
    %946 = vmatprep.subr.mxu0 0.0
    %947 = vmatpush1.xpose.msra.mxu0 0.0
    %948 = vmatprep.subr.mxu0 0.0
    %949 = vmatpush1.xpose.msra.mxu0 0.0
    %950 = vmatprep.subr.mxu0 0.0
    %951 = vmatpush1.xpose.msra.mxu0 0.0
    %952 = vmatprep.subr.mxu0 0.0
    %953 = vmatpush1.xpose.msra.mxu0 0.0
    %954 = vmatprep.subr.mxu0 0.0
    %955 = vmatpush1.xpose.msra.mxu0 0.0
    %956 = vmatprep.subr.mxu0 0.0
    %957 = vmatpush1.xpose.msra.mxu0 0.0
    %958 = vmatprep.subr.mxu0 0.0
    %959 = vmatpush1.xpose.msra.mxu0 0.0
    %960 = vmatprep.subr.mxu0 0.0
    %961 = vmatpush1.xpose.msra.mxu0 0.0
    %962 = vmatprep.subr.mxu0 0.0
    %963 = vmatpush1.xpose.msra.mxu0 0.0
    %964 = vmatprep.subr.mxu0 0.0
    %965 = vmatpush1.xpose.msra.mxu0 0.0
    %966 = vmatprep.subr.mxu0 0.0
    %967 = vmatpush1.xpose.msra.mxu0 0.0
    %968 = vmatprep.subr.mxu0 0.0
    %969 = vmatpush1.xpose.msra.mxu0 0.0
    %970 = vmatprep.mubr.f32.mxu0 0.0
    %971 = vmatmul.mubr.f32.gmra.mrb[0].mxu0 %v619
    %v972 = vpop.f32.mrb[0].mxu0
    %v973 = vadd.f32 0.0, %v972
    %v974 = vpop.f32.mrb[0].mxu0
    %975 = vdwg.mxu0
    %977 = vset.pattern.permute.xlu0 0
    %978 = vperm.xlu0 %977, %v436
    %v979 = vpop.permute.xlu0 %978
    %982 = vset.pattern.permute.xlu0 0
    %983 = vperm.xlu0 %982, %v441
    %v984 = vpop.permute.xlu0 %983
    %987 = vset.pattern.permute.xlu0 0
    %988 = vperm.xlu0 %987, %v520
    %v989 = vpop.permute.xlu0 %988
    %992 = vset.pattern.permute.xlu0 0
    %993 = vperm.xlu0 %992, %v525
    %v994 = vpop.permute.xlu0 %993
    %997 = vset.pattern.permute.xlu0 0
    %998 = vperm.xlu0 %997, %v604
    %v999 = vpop.permute.xlu0 %998
    %1002 = vset.pattern.permute.xlu0 0
    %1003 = vperm.xlu0 %1002, %v609
    %v1004 = vpop.permute.xlu0 %1003
    %1007 = vset.pattern.permute.xlu0 0
    %1008 = vperm.xlu0 %1007, %v688
    %v1009 = vpop.permute.xlu0 %1008
    %1012 = vset.pattern.permute.xlu0 0
    %1013 = vperm.xlu0 %1012, %v693
    %v1014 = vpop.permute.xlu0 %1013
    %v1016 = vlaneseq
    %v1017 = vshrl.u32 %v1016, 7
    %v1018 = vsub.s32 1, %v1017
    %v1019 = vrot.slane %v763, %v1018
    %v1020 = vlaneseq
    %v1021 = vshrl.u32 %v1020, 7
    %v1022 = vsub.s32 1, %v1021
    %v1023 = vrot.slane %v833, %v1022
    %v1024 = vlaneseq
    %v1025 = vshrl.u32 %v1024, 7
    %v1026 = vsub.s32 1, %v1025
    %v1027 = vrot.slane %v903, %v1026
    %v1028 = vlaneseq
    %v1029 = vshrl.u32 %v1028, 7
    %v1030 = vsub.s32 1, %v1029
    %v1031 = vrot.slane %v973, %v1030
    %v1032 = vadd.f32 %v979, %v1019
    %v1033 = vadd.f32 %v984, %v1019
    %v1034 = vadd.f32 %v989, %v1023
    %v1035 = vadd.f32 %v994, %v1023
    %v1036 = vadd.f32 %v999, %v1027
    %v1037 = vadd.f32 %v1004, %v1027
    %v1038 = vadd.f32 %v1009, %v1031
    %v1039 = vadd.f32 %v1014, %v1031
    %vm1040 = vcmp.gt.f32.partialorder %v1032, 0.0
    %vm1041 = vcmp.gt.f32.partialorder %v1033, 0.0
    %vm1042 = vcmp.gt.f32.partialorder %v1034, 0.0
    %vm1043 = vcmp.gt.f32.partialorder %v1035, 0.0
    %vm1044 = vcmp.gt.f32.partialorder %v1036, 0.0
    %vm1045 = vcmp.gt.f32.partialorder %v1037, 0.0
    %vm1046 = vcmp.gt.f32.partialorder %v1038, 0.0
    %vm1047 = vcmp.gt.f32.partialorder %v1039, 0.0
    %v1048 = vmul.f32 %v1032, 0.2
    %v1049 = vmul.f32 %v1033, 0.2
    %v1050 = vmul.f32 %v1034, 0.2
    %v1051 = vmul.f32 %v1035, 0.2
    %v1052 = vmul.f32 %v1036, 0.2
    %v1053 = vmul.f32 %v1037, 0.2
    %v1054 = vmul.f32 %v1038, 0.2
    %v1055 = vmul.f32 %v1039, 0.2
    %v1056 = vsel %vm1040, %v1032, %v1048
    %v1057 = vsel %vm1041, %v1033, %v1049
    %v1058 = vsel %vm1042, %v1034, %v1050
    %v1059 = vsel %vm1043, %v1035, %v1051
    %v1060 = vsel %vm1044, %v1036, %v1052
    %v1061 = vsel %vm1045, %v1037, %v1053
    %v1062 = vsel %vm1046, %v1038, %v1054
    %v1063 = vsel %vm1047, %v1039, %v1055
    %v1064 = vadd.f32 %v1056, %v41
    %v1065 = vadd.f32 %v1057, %v42
    %v1066 = vadd.f32 %v1058, %v41
    %v1067 = vadd.f32 %v1059, %v42
    %v1068 = vadd.f32 %v1060, %v41
    %v1069 = vadd.f32 %v1061, %v42
    %v1070 = vadd.f32 %v1062, %v41
    %v1071 = vadd.f32 %v1063, %v42
    %vm1072 = vcmask 130048
    %v1073 = vsel %vm1072, %v1064, -inf
    %1074 = vmax.xlane.f32.xlu0 %v1073
    %v1075 = vpop.xlane.xlu0 %1074
    %v1076 = vsel %vm1072, %v1065, -inf
    %1077 = vmax.xlane.f32.xlu0 %v1076
    %v1078 = vpop.xlane.xlu0 %1077
    %v1079 = vsel %vm1072, %v1066, -inf
    %1080 = vmax.xlane.f32.xlu0 %v1079
    %v1081 = vpop.xlane.xlu0 %1080
    %v1082 = vsel %vm1072, %v1067, -inf
    %1083 = vmax.xlane.f32.xlu0 %v1082
    %v1084 = vpop.xlane.xlu0 %1083
    %v1085 = vsel %vm1072, %v1068, -inf
    %1086 = vmax.xlane.f32.xlu0 %v1085
    %v1087 = vpop.xlane.xlu0 %1086
    %v1088 = vsel %vm1072, %v1069, -inf
    %1089 = vmax.xlane.f32.xlu0 %v1088
    %v1090 = vpop.xlane.xlu0 %1089
    %v1091 = vsel %vm1072, %v1070, -inf
    %1092 = vmax.xlane.f32.xlu0 %v1091
    %v1093 = vpop.xlane.xlu0 %1092
    %v1094 = vsel %vm1072, %v1071, -inf
    %1095 = vmax.xlane.f32.xlu0 %v1094
    %v1096 = vpop.xlane.xlu0 %1095
    %v1097 = vsub.f32 %v1064, %v1075
    %v1098 = vsub.f32 %v1065, %v1078
    %v1099 = vsub.f32 %v1066, %v1081
    %v1100 = vsub.f32 %v1067, %v1084
    %v1101 = vsub.f32 %v1068, %v1087
    %v1102 = vsub.f32 %v1069, %v1090
    %v1103 = vsub.f32 %v1070, %v1093
    %v1104 = vsub.f32 %v1071, %v1096
    %v1105 = vmul.f32 %v1097, 1.442695
    %v1106 = vpow.pop %v1105
    %v1107 = vmul.f32 %v1098, 1.442695
    %v1108 = vpow.pop %v1107
    %v1109 = vmul.f32 %v1099, 1.442695
    %v1110 = vpow.pop %v1109
    %v1111 = vmul.f32 %v1100, 1.442695
    %v1112 = vpow.pop %v1111
    %v1113 = vmul.f32 %v1101, 1.442695
    %v1114 = vpow.pop %v1113
    %v1115 = vmul.f32 %v1102, 1.442695
    %v1116 = vpow.pop %v1115
    %v1117 = vmul.f32 %v1103, 1.442695
    %v1118 = vpow.pop %v1117
    %v1119 = vmul.f32 %v1104, 1.442695
    %v1120 = vpow.pop %v1119
    %v1121 = vsel %vm1072, %v1106, 0.0
    %1122 = vadd.xlane.f32.xlu0 %v1121
    %v1123 = vpop.xlane.xlu0 %1122
    %v1124 = vsel %vm1072, %v1108, 0.0
    %1125 = vadd.xlane.f32.xlu0 %v1124
    %v1126 = vpop.xlane.xlu0 %1125
    %v1127 = vsel %vm1072, %v1110, 0.0
    %1128 = vadd.xlane.f32.xlu0 %v1127
    %v1129 = vpop.xlane.xlu0 %1128
    %v1130 = vsel %vm1072, %v1112, 0.0
    %1131 = vadd.xlane.f32.xlu0 %v1130
    %v1132 = vpop.xlane.xlu0 %1131
    %v1133 = vsel %vm1072, %v1114, 0.0
    %1134 = vadd.xlane.f32.xlu0 %v1133
    %v1135 = vpop.xlane.xlu0 %1134
    %v1136 = vsel %vm1072, %v1116, 0.0
    %1137 = vadd.xlane.f32.xlu0 %v1136
    %v1138 = vpop.xlane.xlu0 %1137
    %v1139 = vsel %vm1072, %v1118, 0.0
    %1140 = vadd.xlane.f32.xlu0 %v1139
    %v1141 = vpop.xlane.xlu0 %1140
    %v1142 = vsel %vm1072, %v1120, 0.0
    %1143 = vadd.xlane.f32.xlu0 %v1142
    %v1144 = vpop.xlane.xlu0 %1143
    %v1145 = vrcp.pop %v1123
    %v1146 = vmul.f32 %v1106, %v1145
    %v1147 = vrcp.pop %v1126
    %v1148 = vmul.f32 %v1108, %v1147
    %v1149 = vrcp.pop %v1129
    %v1150 = vmul.f32 %v1110, %v1149
    %v1151 = vrcp.pop %v1132
    %v1152 = vmul.f32 %v1112, %v1151
    %v1153 = vrcp.pop %v1135
    %v1154 = vmul.f32 %v1114, %v1153
    %v1155 = vrcp.pop %v1138
    %v1156 = vmul.f32 %v1116, %v1155
    %v1157 = vrcp.pop %v1141
    %v1158 = vmul.f32 %v1118, %v1157
    %v1159 = vrcp.pop %v1144
    %v1160 = vmul.f32 %v1120, %v1159
    %v1162 = vsel %vm1072, %v1146, 0
    %v1165 = vsel %vm1072, %v1148, 0
    %1167 = vmatprep.subr.mxu0 0.0
    %1168 = vmatpush1.msra.mxu0 %v126
    %1169 = vmatprep.subr.mxu0 0.0
    %1170 = vmatpush1.msra.mxu0 %v131
    %1171 = vmatprep.subr.mxu0 0.0
    %1172 = vmatpush1.msra.mxu0 0.0
    %1173 = vmatprep.subr.mxu0 0.0
    %1174 = vmatpush1.msra.mxu0 0.0
    %1175 = vmatprep.subr.mxu0 0.0
    %1176 = vmatpush1.msra.mxu0 0.0
    %1177 = vmatprep.subr.mxu0 0.0
    %1178 = vmatpush1.msra.mxu0 0.0
    %1179 = vmatprep.subr.mxu0 0.0
    %1180 = vmatpush1.msra.mxu0 0.0
    %1181 = vmatprep.subr.mxu0 0.0
    %1182 = vmatpush1.msra.mxu0 0.0
    %1183 = vmatprep.subr.mxu0 0.0
    %1184 = vmatpush1.msra.mxu0 0.0
    %1185 = vmatprep.subr.mxu0 0.0
    %1186 = vmatpush1.msra.mxu0 0.0
    %1187 = vmatprep.subr.mxu0 0.0
    %1188 = vmatpush1.msra.mxu0 0.0
    %1189 = vmatprep.subr.mxu0 0.0
    %1190 = vmatpush1.msra.mxu0 0.0
    %1191 = vmatprep.subr.mxu0 0.0
    %1192 = vmatpush1.msra.mxu0 0.0
    %1193 = vmatprep.subr.mxu0 0.0
    %1194 = vmatpush1.msra.mxu0 0.0
    %1195 = vmatprep.subr.mxu0 0.0
    %1196 = vmatpush1.msra.mxu0 0.0
    %1197 = vmatprep.subr.mxu0 0.0
    %1198 = vmatpush1.msra.mxu0 0.0
    %1199 = vmatprep.subr.mxu0 0.0
    %1200 = vmatpush1.msra.mxu0 0.0
    %1201 = vmatprep.subr.mxu0 0.0
    %1202 = vmatpush1.msra.mxu0 0.0
    %1203 = vmatprep.subr.mxu0 0.0
    %1204 = vmatpush1.msra.mxu0 0.0
    %1205 = vmatprep.subr.mxu0 0.0
    %1206 = vmatpush1.msra.mxu0 0.0
    %1207 = vmatprep.subr.mxu0 0.0
    %1208 = vmatpush1.msra.mxu0 0.0
    %1209 = vmatprep.subr.mxu0 0.0
    %1210 = vmatpush1.msra.mxu0 0.0
    %1211 = vmatprep.subr.mxu0 0.0
    %1212 = vmatpush1.msra.mxu0 0.0
    %1213 = vmatprep.subr.mxu0 0.0
    %1214 = vmatpush1.msra.mxu0 0.0
    %1215 = vmatprep.subr.mxu0 0.0
    %1216 = vmatpush1.msra.mxu0 0.0
    %1217 = vmatprep.subr.mxu0 0.0
    %1218 = vmatpush1.msra.mxu0 0.0
    %1219 = vmatprep.subr.mxu0 0.0
    %1220 = vmatpush1.msra.mxu0 0.0
    %1221 = vmatprep.subr.mxu0 0.0
    %1222 = vmatpush1.msra.mxu0 0.0
    %1223 = vmatprep.subr.mxu0 0.0
    %1224 = vmatpush1.msra.mxu0 0.0
    %1225 = vmatprep.subr.mxu0 0.0
    %1226 = vmatpush1.msra.mxu0 0.0
    %1227 = vmatprep.subr.mxu0 0.0
    %1228 = vmatpush1.msra.mxu0 0.0
    %1229 = vmatprep.subr.mxu0 0.0
    %1230 = vmatpush1.msra.mxu0 0.0
    %1231 = vmatprep.mubr.f32.mxu0 0.0
    %1232 = vmatmul.mubr.f32.gmra.mrb[0].mxu0 %v1162
    %v1233 = vpop.f32.mrb[0].mxu0
    %v1234 = vadd.f32 0.0, %v1233
    %v1235 = vpop.f32.mrb[0].mxu0
    %1236 = vmatprep.mubr.f32.mxu0 0.0
    %1237 = vmatmul.mubr.f32.gmra.mrb[0].mxu0 %v1165
    %v1238 = vpop.f32.mrb[0].mxu0
    %v1239 = vadd.f32 0.0, %v1238
    %v1240 = vpop.f32.mrb[0].mxu0
    %1241 = vdwg.mxu0
    %v1243 = vsel %vm1072, %v1150, 0
    %v1246 = vsel %vm1072, %v1152, 0
    %1248 = vmatprep.subr.mxu0 0.0
    %1249 = vmatpush1.msra.mxu0 %v201
    %1250 = vmatprep.subr.mxu0 0.0
    %1251 = vmatpush1.msra.mxu0 %v206
    %1252 = vmatprep.subr.mxu0 0.0
    %1253 = vmatpush1.msra.mxu0 0.0
    %1254 = vmatprep.subr.mxu0 0.0
    %1255 = vmatpush1.msra.mxu0 0.0
    %1256 = vmatprep.subr.mxu0 0.0
    %1257 = vmatpush1.msra.mxu0 0.0
    %1258 = vmatprep.subr.mxu0 0.0
    %1259 = vmatpush1.msra.mxu0 0.0
    %1260 = vmatprep.subr.mxu0 0.0
    %1261 = vmatpush1.msra.mxu0 0.0
    %1262 = vmatprep.subr.mxu0 0.0
    %1263 = vmatpush1.msra.mxu0 0.0
    %1264 = vmatprep.subr.mxu0 0.0
    %1265 = vmatpush1.msra.mxu0 0.0
    %1266 = vmatprep.subr.mxu0 0.0
    %1267 = vmatpush1.msra.mxu0 0.0
    %1268 = vmatprep.subr.mxu0 0.0
    %1269 = vmatpush1.msra.mxu0 0.0
    %1270 = vmatprep.subr.mxu0 0.0
    %1271 = vmatpush1.msra.mxu0 0.0
    %1272 = vmatprep.subr.mxu0 0.0
    %1273 = vmatpush1.msra.mxu0 0.0
    %1274 = vmatprep.subr.mxu0 0.0
    %1275 = vmatpush1.msra.mxu0 0.0
    %1276 = vmatprep.subr.mxu0 0.0
    %1277 = vmatpush1.msra.mxu0 0.0
    %1278 = vmatprep.subr.mxu0 0.0
    %1279 = vmatpush1.msra.mxu0 0.0
    %1280 = vmatprep.subr.mxu0 0.0
    %1281 = vmatpush1.msra.mxu0 0.0
    %1282 = vmatprep.subr.mxu0 0.0
    %1283 = vmatpush1.msra.mxu0 0.0
    %1284 = vmatprep.subr.mxu0 0.0
    %1285 = vmatpush1.msra.mxu0 0.0
    %1286 = vmatprep.subr.mxu0 0.0
    %1287 = vmatpush1.msra.mxu0 0.0
    %1288 = vmatprep.subr.mxu0 0.0
    %1289 = vmatpush1.msra.mxu0 0.0
    %1290 = vmatprep.subr.mxu0 0.0
    %1291 = vmatpush1.msra.mxu0 0.0
    %1292 = vmatprep.subr.mxu0 0.0
    %1293 = vmatpush1.msra.mxu0 0.0
    %1294 = vmatprep.subr.mxu0 0.0
    %1295 = vmatpush1.msra.mxu0 0.0
    %1296 = vmatprep.subr.mxu0 0.0
    %1297 = vmatpush1.msra.mxu0 0.0
    %1298 = vmatprep.subr.mxu0 0.0
    %1299 = vmatpush1.msra.mxu0 0.0
    %1300 = vmatprep.subr.mxu0 0.0
    %1301 = vmatpush1.msra.mxu0 0.0
    %1302 = vmatprep.subr.mxu0 0.0
    %1303 = vmatpush1.msra.mxu0 0.0
    %1304 = vmatprep.subr.mxu0 0.0
    %1305 = vmatpush1.msra.mxu0 0.0
    %1306 = vmatprep.subr.mxu0 0.0
    %1307 = vmatpush1.msra.mxu0 0.0
    %1308 = vmatprep.subr.mxu0 0.0
    %1309 = vmatpush1.msra.mxu0 0.0
    %1310 = vmatprep.subr.mxu0 0.0
    %1311 = vmatpush1.msra.mxu0 0.0
    %1312 = vmatprep.mubr.f32.mxu0 0.0
    %1313 = vmatmul.mubr.f32.gmra.mrb[0].mxu0 %v1243
    %v1314 = vpop.f32.mrb[0].mxu0
    %v1315 = vadd.f32 0.0, %v1314
    %v1316 = vpop.f32.mrb[0].mxu0
    %1317 = vmatprep.mubr.f32.mxu0 0.0
    %1318 = vmatmul.mubr.f32.gmra.mrb[0].mxu0 %v1246
    %v1319 = vpop.f32.mrb[0].mxu0
    %v1320 = vadd.f32 0.0, %v1319
    %v1321 = vpop.f32.mrb[0].mxu0
    %1322 = vdwg.mxu0
    %v1324 = vsel %vm1072, %v1154, 0
    %v1327 = vsel %vm1072, %v1156, 0
    %1329 = vmatprep.subr.mxu0 0.0
    %1330 = vmatpush1.msra.mxu0 %v276
    %1331 = vmatprep.subr.mxu0 0.0
    %1332 = vmatpush1.msra.mxu0 %v281
    %1333 = vmatprep.subr.mxu0 0.0
    %1334 = vmatpush1.msra.mxu0 0.0
    %1335 = vmatprep.subr.mxu0 0.0
    %1336 = vmatpush1.msra.mxu0 0.0
    %1337 = vmatprep.subr.mxu0 0.0
    %1338 = vmatpush1.msra.mxu0 0.0
    %1339 = vmatprep.subr.mxu0 0.0
    %1340 = vmatpush1.msra.mxu0 0.0
    %1341 = vmatprep.subr.mxu0 0.0
    %1342 = vmatpush1.msra.mxu0 0.0
    %1343 = vmatprep.subr.mxu0 0.0
    %1344 = vmatpush1.msra.mxu0 0.0
    %1345 = vmatprep.subr.mxu0 0.0
    %1346 = vmatpush1.msra.mxu0 0.0
    %1347 = vmatprep.subr.mxu0 0.0
    %1348 = vmatpush1.msra.mxu0 0.0
    %1349 = vmatprep.subr.mxu0 0.0
    %1350 = vmatpush1.msra.mxu0 0.0
    %1351 = vmatprep.subr.mxu0 0.0
    %1352 = vmatpush1.msra.mxu0 0.0
    %1353 = vmatprep.subr.mxu0 0.0
    %1354 = vmatpush1.msra.mxu0 0.0
    %1355 = vmatprep.subr.mxu0 0.0
    %1356 = vmatpush1.msra.mxu0 0.0
    %1357 = vmatprep.subr.mxu0 0.0
    %1358 = vmatpush1.msra.mxu0 0.0
    %1359 = vmatprep.subr.mxu0 0.0
    %1360 = vmatpush1.msra.mxu0 0.0
    %1361 = vmatprep.subr.mxu0 0.0
    %1362 = vmatpush1.msra.mxu0 0.0
    %1363 = vmatprep.subr.mxu0 0.0
    %1364 = vmatpush1.msra.mxu0 0.0
    %1365 = vmatprep.subr.mxu0 0.0
    %1366 = vmatpush1.msra.mxu0 0.0
    %1367 = vmatprep.subr.mxu0 0.0
    %1368 = vmatpush1.msra.mxu0 0.0
    %1369 = vmatprep.subr.mxu0 0.0
    %1370 = vmatpush1.msra.mxu0 0.0
    %1371 = vmatprep.subr.mxu0 0.0
    %1372 = vmatpush1.msra.mxu0 0.0
    %1373 = vmatprep.subr.mxu0 0.0
    %1374 = vmatpush1.msra.mxu0 0.0
    %1375 = vmatprep.subr.mxu0 0.0
    %1376 = vmatpush1.msra.mxu0 0.0
    %1377 = vmatprep.subr.mxu0 0.0
    %1378 = vmatpush1.msra.mxu0 0.0
    %1379 = vmatprep.subr.mxu0 0.0
    %1380 = vmatpush1.msra.mxu0 0.0
    %1381 = vmatprep.subr.mxu0 0.0
    %1382 = vmatpush1.msra.mxu0 0.0
    %1383 = vmatprep.subr.mxu0 0.0
    %1384 = vmatpush1.msra.mxu0 0.0
    %1385 = vmatprep.subr.mxu0 0.0
    %1386 = vmatpush1.msra.mxu0 0.0
    %1387 = vmatprep.subr.mxu0 0.0
    %1388 = vmatpush1.msra.mxu0 0.0
    %1389 = vmatprep.subr.mxu0 0.0
    %1390 = vmatpush1.msra.mxu0 0.0
    %1391 = vmatprep.subr.mxu0 0.0
    %1392 = vmatpush1.msra.mxu0 0.0
    %1393 = vmatprep.mubr.f32.mxu0 0.0
    %1394 = vmatmul.mubr.f32.gmra.mrb[0].mxu0 %v1324
    %v1395 = vpop.f32.mrb[0].mxu0
    %v1396 = vadd.f32 0.0, %v1395
    %v1397 = vpop.f32.mrb[0].mxu0
    %1398 = vmatprep.mubr.f32.mxu0 0.0
    %1399 = vmatmul.mubr.f32.gmra.mrb[0].mxu0 %v1327
    %v1400 = vpop.f32.mrb[0].mxu0
    %v1401 = vadd.f32 0.0, %v1400
    %v1402 = vpop.f32.mrb[0].mxu0
    %1403 = vdwg.mxu0
    %v1405 = vsel %vm1072, %v1158, 0
    %v1408 = vsel %vm1072, %v1160, 0
    %1410 = vmatprep.subr.mxu0 0.0
    %1411 = vmatpush1.msra.mxu0 %v351
    %1412 = vmatprep.subr.mxu0 0.0
    %1413 = vmatpush1.msra.mxu0 %v356
    %1414 = vmatprep.subr.mxu0 0.0
    %1415 = vmatpush1.msra.mxu0 0.0
    %1416 = vmatprep.subr.mxu0 0.0
    %1417 = vmatpush1.msra.mxu0 0.0
    %1418 = vmatprep.subr.mxu0 0.0
    %1419 = vmatpush1.msra.mxu0 0.0
    %1420 = vmatprep.subr.mxu0 0.0
    %1421 = vmatpush1.msra.mxu0 0.0
    %1422 = vmatprep.subr.mxu0 0.0
    %1423 = vmatpush1.msra.mxu0 0.0
    %1424 = vmatprep.subr.mxu0 0.0
    %1425 = vmatpush1.msra.mxu0 0.0
    %1426 = vmatprep.subr.mxu0 0.0
    %1427 = vmatpush1.msra.mxu0 0.0
    %1428 = vmatprep.subr.mxu0 0.0
    %1429 = vmatpush1.msra.mxu0 0.0
    %1430 = vmatprep.subr.mxu0 0.0
    %1431 = vmatpush1.msra.mxu0 0.0
    %1432 = vmatprep.subr.mxu0 0.0
    %1433 = vmatpush1.msra.mxu0 0.0
    %1434 = vmatprep.subr.mxu0 0.0
    %1435 = vmatpush1.msra.mxu0 0.0
    %1436 = vmatprep.subr.mxu0 0.0
    %1437 = vmatpush1.msra.mxu0 0.0
    %1438 = vmatprep.subr.mxu0 0.0
    %1439 = vmatpush1.msra.mxu0 0.0
    %1440 = vmatprep.subr.mxu0 0.0
    %1441 = vmatpush1.msra.mxu0 0.0
    %1442 = vmatprep.subr.mxu0 0.0
    %1443 = vmatpush1.msra.mxu0 0.0
    %1444 = vmatprep.subr.mxu0 0.0
    %1445 = vmatpush1.msra.mxu0 0.0
    %1446 = vmatprep.subr.mxu0 0.0
    %1447 = vmatpush1.msra.mxu0 0.0
    %1448 = vmatprep.subr.mxu0 0.0
    %1449 = vmatpush1.msra.mxu0 0.0
    %1450 = vmatprep.subr.mxu0 0.0
    %1451 = vmatpush1.msra.mxu0 0.0
    %1452 = vmatprep.subr.mxu0 0.0
    %1453 = vmatpush1.msra.mxu0 0.0
    %1454 = vmatprep.subr.mxu0 0.0
    %1455 = vmatpush1.msra.mxu0 0.0
    %1456 = vmatprep.subr.mxu0 0.0
    %1457 = vmatpush1.msra.mxu0 0.0
    %1458 = vmatprep.subr.mxu0 0.0
    %1459 = vmatpush1.msra.mxu0 0.0
    %1460 = vmatprep.subr.mxu0 0.0
    %1461 = vmatpush1.msra.mxu0 0.0
    %1462 = vmatprep.subr.mxu0 0.0
    %1463 = vmatpush1.msra.mxu0 0.0
    %1464 = vmatprep.subr.mxu0 0.0
    %1465 = vmatpush1.msra.mxu0 0.0
    %1466 = vmatprep.subr.mxu0 0.0
    %1467 = vmatpush1.msra.mxu0 0.0
    %1468 = vmatprep.subr.mxu0 0.0
    %1469 = vmatpush1.msra.mxu0 0.0
    %1470 = vmatprep.subr.mxu0 0.0
    %1471 = vmatpush1.msra.mxu0 0.0
    %1472 = vmatprep.subr.mxu0 0.0
    %1473 = vmatpush1.msra.mxu0 0.0
    %1474 = vmatprep.mubr.f32.mxu0 0.0
    %1475 = vmatmul.mubr.f32.gmra.mrb[0].mxu0 %v1405
    %v1476 = vpop.f32.mrb[0].mxu0
    %v1477 = vadd.f32 0.0, %v1476
    %v1478 = vpop.f32.mrb[0].mxu0
    %1479 = vmatprep.mubr.f32.mxu0 0.0
    %1480 = vmatmul.mubr.f32.gmra.mrb[0].mxu0 %v1408
    %v1481 = vpop.f32.mrb[0].mxu0
    %v1482 = vadd.f32 0.0, %v1481
    %v1483 = vpop.f32.mrb[0].mxu0
    %1484 = vdwg.mxu0
    %1487 = vrot.lane.b32.xlu0 %v1315, 4
    %v1488 = vpop.permute.xlu0 %1487
    %1489 = vrot.lane.b32.xlu0 %v1320, 4
    %v1490 = vpop.permute.xlu0 %1489
    %1495 = vrot.lane.b32.xlu0 %v1396, 8
    %v1496 = vpop.permute.xlu0 %1495
    %1497 = vrot.lane.b32.xlu0 %v1401, 8
    %v1498 = vpop.permute.xlu0 %1497
    %1503 = vrot.lane.b32.xlu0 %v1477, 12
    %v1504 = vpop.permute.xlu0 %1503
    %1505 = vrot.lane.b32.xlu0 %v1482, 12
    %v1506 = vpop.permute.xlu0 %1505
    %v1509 = vsel %vm359, %v1234, %v1488
    %v1510 = vsel %vm359, %v1239, %v1490
    %v1511 = vsel %vm52, %v1509, %v1496
    %v1512 = vsel %vm52, %v1510, %v1498
    %vm1513 = vcmask 97280
    %v1514 = vsel %vm1513, %v1511, %v1504
    %v1515 = vsel %vm1513, %v1512, %v1506
    %v1516 = vlaneseq
    %v1517 = vshrl.u32 %v1516, 7
    %v1518 = vsub.s32 0, %v1517
    %v1519 = vrot.slane %v51, %v1518
    %v1520 = vadd.f32 %v1514, %v1519
    %v1521 = vadd.f32 %v1515, %v1519
    %vm1522 = vcmp.gt.f32.partialorder %v1520, 0.0
    %vm1523 = vcmp.gt.f32.partialorder %v1521, 0.0
    %v1524 = vmin.f32 %v1520, 0.0
    %v1525 = vmin.f32 %v1521, 0.0
    %v1526 = vmul.f32 %v1524, 1.442695
    %v1527 = vpow.pop %v1526
    %v1528 = vmul.f32 %v1525, 1.442695
    %v1529 = vpow.pop %v1528
    %v1530 = vsub.f32 %v1527, 1.0
    %v1531 = vsub.f32 %v1529, 1.0
    %v1532 = vsel %vm1522, %v1520, %v1530
    %v1533 = vsel %vm1523, %v1521, %v1531
    %v1534 = vld [vmem:[#allocation4 + $0x48] sm:$0xff]
    %v1535 = vld [vmem:[#allocation4 + $0x50] sm:$0xff]
    %v1536 = vld [vmem:[#allocation4 + $0x58] sm:$0xff]
    %v1537 = vld [vmem:[#allocation4 + $0x60] sm:$0xff]
    %v1538 = vld [vmem:[#allocation4 + $0x68] sm:$0xff]
    %v1539 = vld [vmem:[#allocation4 + $0x70] sm:$0xff]
    %v1540 = vld [vmem:[#allocation4 + $0x78] sm:$0xff]
    %v1541 = vld [vmem:[#allocation4 + $0x80] sm:$0xff]
    %v1542 = vld [vmem:[#allocation4 + $0x88] sm:$0xff]
    %v1543 = vld [vmem:[#allocation4 + $0x90] sm:$0xff]
    %v1544 = vld [vmem:[#allocation4 + $0x98] sm:$0xff]
    %v1545 = vld [vmem:[#allocation4 + $0xa0] sm:$0xff]
    %v1546 = vld [vmem:[#allocation4 + $0xa8] sm:$0xff]
    %v1547 = vld [vmem:[#allocation4 + $0xb0] sm:$0xff]
    %v1548 = vld [vmem:[#allocation4 + $0xb8] sm:$0xff]
    %v1549 = vld [vmem:[#allocation4 + $0xc0] sm:$0xff]
    %v1550 = vld [vmem:[#allocation4 + $0xc8] sm:$0xff]
    %v1551 = vld [vmem:[#allocation4 + $0xd0] sm:$0xff]
    %v1552 = vld [vmem:[#allocation4 + $0xd8] sm:$0xff]
    %v1553 = vld [vmem:[#allocation4 + $0xe0] sm:$0xff]
    %v1554 = vld [vmem:[#allocation4 + $0xe8] sm:$0xff]
    %v1555 = vld [vmem:[#allocation4 + $0xf0] sm:$0xff]
    %v1556 = vld [vmem:[#allocation4 + $0xf8] sm:$0xff]
    %v1557 = vld [vmem:[#allocation4 + $0x100] sm:$0xff]
    %v1558 = vld [vmem:[#allocation4 + $0x108] sm:$0x1]
    %v1560 = vsel %vm1072, %v1532, 0
    %v1563 = vsel %vm1072, %v1533, 0
    %1565 = vmatprep.subr.mxu0 0.0
    %1566 = vmatpush1.msra.mxu0 %v1534
    %1567 = vmatprep.subr.mxu0 0.0
    %1568 = vmatpush1.msra.mxu0 %v1535
    %1569 = vmatprep.subr.mxu0 0.0
    %1570 = vmatpush1.msra.mxu0 0.0
    %1571 = vmatprep.subr.mxu0 0.0
    %1572 = vmatpush1.msra.mxu0 0.0
    %1573 = vmatprep.subr.mxu0 0.0
    %1574 = vmatpush1.msra.mxu0 0.0
    %1575 = vmatprep.subr.mxu0 0.0
    %1576 = vmatpush1.msra.mxu0 0.0
    %1577 = vmatprep.subr.mxu0 0.0
    %1578 = vmatpush1.msra.mxu0 0.0
    %1579 = vmatprep.subr.mxu0 0.0
    %1580 = vmatpush1.msra.mxu0 0.0
    %1581 = vmatprep.subr.mxu0 0.0
    %1582 = vmatpush1.msra.mxu0 0.0
    %1583 = vmatprep.subr.mxu0 0.0
    %1584 = vmatpush1.msra.mxu0 0.0
    %1585 = vmatprep.subr.mxu0 0.0
    %1586 = vmatpush1.msra.mxu0 0.0
    %1587 = vmatprep.subr.mxu0 0.0
    %1588 = vmatpush1.msra.mxu0 0.0
    %1589 = vmatprep.subr.mxu0 0.0
    %1590 = vmatpush1.msra.mxu0 0.0
    %1591 = vmatprep.subr.mxu0 0.0
    %1592 = vmatpush1.msra.mxu0 0.0
    %1593 = vmatprep.subr.mxu0 0.0
    %1594 = vmatpush1.msra.mxu0 0.0
    %1595 = vmatprep.subr.mxu0 0.0
    %1596 = vmatpush1.msra.mxu0 0.0
    %1597 = vmatprep.subr.mxu0 0.0
    %1598 = vmatpush1.msra.mxu0 0.0
    %1599 = vmatprep.subr.mxu0 0.0
    %1600 = vmatpush1.msra.mxu0 0.0
    %1601 = vmatprep.subr.mxu0 0.0
    %1602 = vmatpush1.msra.mxu0 0.0
    %1603 = vmatprep.subr.mxu0 0.0
    %1604 = vmatpush1.msra.mxu0 0.0
    %1605 = vmatprep.subr.mxu0 0.0
    %1606 = vmatpush1.msra.mxu0 0.0
    %1607 = vmatprep.subr.mxu0 0.0
    %1608 = vmatpush1.msra.mxu0 0.0
    %1609 = vmatprep.subr.mxu0 0.0
    %1610 = vmatpush1.msra.mxu0 0.0
    %1611 = vmatprep.subr.mxu0 0.0
    %1612 = vmatpush1.msra.mxu0 0.0
    %1613 = vmatprep.subr.mxu0 0.0
    %1614 = vmatpush1.msra.mxu0 0.0
    %1615 = vmatprep.subr.mxu0 0.0
    %1616 = vmatpush1.msra.mxu0 0.0
    %1617 = vmatprep.subr.mxu0 0.0
    %1618 = vmatpush1.msra.mxu0 0.0
    %1619 = vmatprep.subr.mxu0 0.0
    %1620 = vmatpush1.msra.mxu0 0.0
    %1621 = vmatprep.subr.mxu0 0.0
    %1622 = vmatpush1.msra.mxu0 0.0
    %1623 = vmatprep.subr.mxu0 0.0
    %1624 = vmatpush1.msra.mxu0 0.0
    %1625 = vmatprep.subr.mxu0 0.0
    %1626 = vmatpush1.msra.mxu0 0.0
    %1627 = vmatprep.subr.mxu0 0.0
    %1628 = vmatpush1.msra.mxu0 0.0
    %1629 = vmatprep.mubr.f32.mxu0 0.0
    %1630 = vmatmul.mubr.f32.gmra.mrb[0].mxu0 %v1560
    %v1631 = vpop.f32.mrb[0].mxu0
    %v1632 = vadd.f32 0.0, %v1631
    %v1633 = vpop.f32.mrb[0].mxu0
    %1634 = vmatprep.mubr.f32.mxu0 0.0
    %1635 = vmatmul.mubr.f32.gmra.mrb[0].mxu0 %v1563
    %v1636 = vpop.f32.mrb[0].mxu0
    %v1637 = vadd.f32 0.0, %v1636
    %v1638 = vpop.f32.mrb[0].mxu0
    %1639 = vdwg.mxu0
    %1640 = vmatprep.subr.mxu0 0.0
    %1641 = vmatpush1.msra.mxu0 %v1536
    %1642 = vmatprep.subr.mxu0 0.0
    %1643 = vmatpush1.msra.mxu0 %v1537
    %1644 = vmatprep.subr.mxu0 0.0
    %1645 = vmatpush1.msra.mxu0 0.0
    %1646 = vmatprep.subr.mxu0 0.0
    %1647 = vmatpush1.msra.mxu0 0.0
    %1648 = vmatprep.subr.mxu0 0.0
    %1649 = vmatpush1.msra.mxu0 0.0
    %1650 = vmatprep.subr.mxu0 0.0
    %1651 = vmatpush1.msra.mxu0 0.0
    %1652 = vmatprep.subr.mxu0 0.0
    %1653 = vmatpush1.msra.mxu0 0.0
    %1654 = vmatprep.subr.mxu0 0.0
    %1655 = vmatpush1.msra.mxu0 0.0
    %1656 = vmatprep.subr.mxu0 0.0
    %1657 = vmatpush1.msra.mxu0 0.0
    %1658 = vmatprep.subr.mxu0 0.0
    %1659 = vmatpush1.msra.mxu0 0.0
    %1660 = vmatprep.subr.mxu0 0.0
    %1661 = vmatpush1.msra.mxu0 0.0
    %1662 = vmatprep.subr.mxu0 0.0
    %1663 = vmatpush1.msra.mxu0 0.0
    %1664 = vmatprep.subr.mxu0 0.0
    %1665 = vmatpush1.msra.mxu0 0.0
    %1666 = vmatprep.subr.mxu0 0.0
    %1667 = vmatpush1.msra.mxu0 0.0
    %1668 = vmatprep.subr.mxu0 0.0
    %1669 = vmatpush1.msra.mxu0 0.0
    %1670 = vmatprep.subr.mxu0 0.0
    %1671 = vmatpush1.msra.mxu0 0.0
    %1672 = vmatprep.subr.mxu0 0.0
    %1673 = vmatpush1.msra.mxu0 0.0
    %1674 = vmatprep.subr.mxu0 0.0
    %1675 = vmatpush1.msra.mxu0 0.0
    %1676 = vmatprep.subr.mxu0 0.0
    %1677 = vmatpush1.msra.mxu0 0.0
    %1678 = vmatprep.subr.mxu0 0.0
    %1679 = vmatpush1.msra.mxu0 0.0
    %1680 = vmatprep.subr.mxu0 0.0
    %1681 = vmatpush1.msra.mxu0 0.0
    %1682 = vmatprep.subr.mxu0 0.0
    %1683 = vmatpush1.msra.mxu0 0.0
    %1684 = vmatprep.subr.mxu0 0.0
    %1685 = vmatpush1.msra.mxu0 0.0
    %1686 = vmatprep.subr.mxu0 0.0
    %1687 = vmatpush1.msra.mxu0 0.0
    %1688 = vmatprep.subr.mxu0 0.0
    %1689 = vmatpush1.msra.mxu0 0.0
    %1690 = vmatprep.subr.mxu0 0.0
    %1691 = vmatpush1.msra.mxu0 0.0
    %1692 = vmatprep.subr.mxu0 0.0
    %1693 = vmatpush1.msra.mxu0 0.0
    %1694 = vmatprep.subr.mxu0 0.0
    %1695 = vmatpush1.msra.mxu0 0.0
    %1696 = vmatprep.subr.mxu0 0.0
    %1697 = vmatpush1.msra.mxu0 0.0
    %1698 = vmatprep.subr.mxu0 0.0
    %1699 = vmatpush1.msra.mxu0 0.0
    %1700 = vmatprep.subr.mxu0 0.0
    %1701 = vmatpush1.msra.mxu0 0.0
    %1702 = vmatprep.subr.mxu0 0.0
    %1703 = vmatpush1.msra.mxu0 0.0
    %1704 = vmatprep.mubr.f32.mxu0 0.0
    %1705 = vmatmul.mubr.f32.gmra.mrb[0].mxu0 %v1560
    %v1706 = vpop.f32.mrb[0].mxu0
    %v1707 = vadd.f32 0.0, %v1706
    %v1708 = vpop.f32.mrb[0].mxu0
    %1709 = vmatprep.mubr.f32.mxu0 0.0
    %1710 = vmatmul.mubr.f32.gmra.mrb[0].mxu0 %v1563
    %v1711 = vpop.f32.mrb[0].mxu0
    %v1712 = vadd.f32 0.0, %v1711
    %v1713 = vpop.f32.mrb[0].mxu0
    %1714 = vdwg.mxu0
    %1715 = vmatprep.subr.mxu0 0.0
    %1716 = vmatpush1.msra.mxu0 %v1538
    %1717 = vmatprep.subr.mxu0 0.0
    %1718 = vmatpush1.msra.mxu0 %v1539
    %1719 = vmatprep.subr.mxu0 0.0
    %1720 = vmatpush1.msra.mxu0 0.0
    %1721 = vmatprep.subr.mxu0 0.0
    %1722 = vmatpush1.msra.mxu0 0.0
    %1723 = vmatprep.subr.mxu0 0.0
    %1724 = vmatpush1.msra.mxu0 0.0
    %1725 = vmatprep.subr.mxu0 0.0
    %1726 = vmatpush1.msra.mxu0 0.0
    %1727 = vmatprep.subr.mxu0 0.0
    %1728 = vmatpush1.msra.mxu0 0.0
    %1729 = vmatprep.subr.mxu0 0.0
    %1730 = vmatpush1.msra.mxu0 0.0
    %1731 = vmatprep.subr.mxu0 0.0
    %1732 = vmatpush1.msra.mxu0 0.0
    %1733 = vmatprep.subr.mxu0 0.0
    %1734 = vmatpush1.msra.mxu0 0.0
    %1735 = vmatprep.subr.mxu0 0.0
    %1736 = vmatpush1.msra.mxu0 0.0
    %1737 = vmatprep.subr.mxu0 0.0
    %1738 = vmatpush1.msra.mxu0 0.0
    %1739 = vmatprep.subr.mxu0 0.0
    %1740 = vmatpush1.msra.mxu0 0.0
    %1741 = vmatprep.subr.mxu0 0.0
    %1742 = vmatpush1.msra.mxu0 0.0
    %1743 = vmatprep.subr.mxu0 0.0
    %1744 = vmatpush1.msra.mxu0 0.0
    %1745 = vmatprep.subr.mxu0 0.0
    %1746 = vmatpush1.msra.mxu0 0.0
    %1747 = vmatprep.subr.mxu0 0.0
    %1748 = vmatpush1.msra.mxu0 0.0
    %1749 = vmatprep.subr.mxu0 0.0
    %1750 = vmatpush1.msra.mxu0 0.0
    %1751 = vmatprep.subr.mxu0 0.0
    %1752 = vmatpush1.msra.mxu0 0.0
    %1753 = vmatprep.subr.mxu0 0.0
    %1754 = vmatpush1.msra.mxu0 0.0
    %1755 = vmatprep.subr.mxu0 0.0
    %1756 = vmatpush1.msra.mxu0 0.0
    %1757 = vmatprep.subr.mxu0 0.0
    %1758 = vmatpush1.msra.mxu0 0.0
    %1759 = vmatprep.subr.mxu0 0.0
    %1760 = vmatpush1.msra.mxu0 0.0
    %1761 = vmatprep.subr.mxu0 0.0
    %1762 = vmatpush1.msra.mxu0 0.0
    %1763 = vmatprep.subr.mxu0 0.0
    %1764 = vmatpush1.msra.mxu0 0.0
    %1765 = vmatprep.subr.mxu0 0.0
    %1766 = vmatpush1.msra.mxu0 0.0
    %1767 = vmatprep.subr.mxu0 0.0
    %1768 = vmatpush1.msra.mxu0 0.0
    %1769 = vmatprep.subr.mxu0 0.0
    %1770 = vmatpush1.msra.mxu0 0.0
    %1771 = vmatprep.subr.mxu0 0.0
    %1772 = vmatpush1.msra.mxu0 0.0
    %1773 = vmatprep.subr.mxu0 0.0
    %1774 = vmatpush1.msra.mxu0 0.0
    %1775 = vmatprep.subr.mxu0 0.0
    %1776 = vmatpush1.msra.mxu0 0.0
    %1777 = vmatprep.subr.mxu0 0.0
    %1778 = vmatpush1.msra.mxu0 0.0
    %1779 = vmatprep.mubr.f32.mxu0 0.0
    %1780 = vmatmul.mubr.f32.gmra.mrb[0].mxu0 %v1560
    %v1781 = vpop.f32.mrb[0].mxu0
    %v1782 = vadd.f32 0.0, %v1781
    %v1783 = vpop.f32.mrb[0].mxu0
    %1784 = vmatprep.mubr.f32.mxu0 0.0
    %1785 = vmatmul.mubr.f32.gmra.mrb[0].mxu0 %v1563
    %v1786 = vpop.f32.mrb[0].mxu0
    %v1787 = vadd.f32 0.0, %v1786
    %v1788 = vpop.f32.mrb[0].mxu0
    %1789 = vdwg.mxu0
    %1790 = vmatprep.subr.mxu0 0.0
    %1791 = vmatpush1.msra.mxu0 %v1540
    %1792 = vmatprep.subr.mxu0 0.0
    %1793 = vmatpush1.msra.mxu0 %v1541
    %1794 = vmatprep.subr.mxu0 0.0
    %1795 = vmatpush1.msra.mxu0 0.0
    %1796 = vmatprep.subr.mxu0 0.0
    %1797 = vmatpush1.msra.mxu0 0.0
    %1798 = vmatprep.subr.mxu0 0.0
    %1799 = vmatpush1.msra.mxu0 0.0
    %1800 = vmatprep.subr.mxu0 0.0
    %1801 = vmatpush1.msra.mxu0 0.0
    %1802 = vmatprep.subr.mxu0 0.0
    %1803 = vmatpush1.msra.mxu0 0.0
    %1804 = vmatprep.subr.mxu0 0.0
    %1805 = vmatpush1.msra.mxu0 0.0
    %1806 = vmatprep.subr.mxu0 0.0
    %1807 = vmatpush1.msra.mxu0 0.0
    %1808 = vmatprep.subr.mxu0 0.0
    %1809 = vmatpush1.msra.mxu0 0.0
    %1810 = vmatprep.subr.mxu0 0.0
    %1811 = vmatpush1.msra.mxu0 0.0
    %1812 = vmatprep.subr.mxu0 0.0
    %1813 = vmatpush1.msra.mxu0 0.0
    %1814 = vmatprep.subr.mxu0 0.0
    %1815 = vmatpush1.msra.mxu0 0.0
    %1816 = vmatprep.subr.mxu0 0.0
    %1817 = vmatpush1.msra.mxu0 0.0
    %1818 = vmatprep.subr.mxu0 0.0
    %1819 = vmatpush1.msra.mxu0 0.0
    %1820 = vmatprep.subr.mxu0 0.0
    %1821 = vmatpush1.msra.mxu0 0.0
    %1822 = vmatprep.subr.mxu0 0.0
    %1823 = vmatpush1.msra.mxu0 0.0
    %1824 = vmatprep.subr.mxu0 0.0
    %1825 = vmatpush1.msra.mxu0 0.0
    %1826 = vmatprep.subr.mxu0 0.0
    %1827 = vmatpush1.msra.mxu0 0.0
    %1828 = vmatprep.subr.mxu0 0.0
    %1829 = vmatpush1.msra.mxu0 0.0
    %1830 = vmatprep.subr.mxu0 0.0
    %1831 = vmatpush1.msra.mxu0 0.0
    %1832 = vmatprep.subr.mxu0 0.0
    %1833 = vmatpush1.msra.mxu0 0.0
    %1834 = vmatprep.subr.mxu0 0.0
    %1835 = vmatpush1.msra.mxu0 0.0
    %1836 = vmatprep.subr.mxu0 0.0
    %1837 = vmatpush1.msra.mxu0 0.0
    %1838 = vmatprep.subr.mxu0 0.0
    %1839 = vmatpush1.msra.mxu0 0.0
    %1840 = vmatprep.subr.mxu0 0.0
    %1841 = vmatpush1.msra.mxu0 0.0
    %1842 = vmatprep.subr.mxu0 0.0
    %1843 = vmatpush1.msra.mxu0 0.0
    %1844 = vmatprep.subr.mxu0 0.0
    %1845 = vmatpush1.msra.mxu0 0.0
    %1846 = vmatprep.subr.mxu0 0.0
    %1847 = vmatpush1.msra.mxu0 0.0
    %1848 = vmatprep.subr.mxu0 0.0
    %1849 = vmatpush1.msra.mxu0 0.0
    %1850 = vmatprep.subr.mxu0 0.0
    %1851 = vmatpush1.msra.mxu0 0.0
    %1852 = vmatprep.subr.mxu0 0.0
    %1853 = vmatpush1.msra.mxu0 0.0
    %1854 = vmatprep.mubr.f32.mxu0 0.0
    %1855 = vmatmul.mubr.f32.gmra.mrb[0].mxu0 %v1560
    %v1856 = vpop.f32.mrb[0].mxu0
    %v1857 = vadd.f32 0.0, %v1856
    %v1858 = vpop.f32.mrb[0].mxu0
    %1859 = vmatprep.mubr.f32.mxu0 0.0
    %1860 = vmatmul.mubr.f32.gmra.mrb[0].mxu0 %v1563
    %v1861 = vpop.f32.mrb[0].mxu0
    %v1862 = vadd.f32 0.0, %v1861
    %v1863 = vpop.f32.mrb[0].mxu0
    %1864 = vdwg.mxu0
    %1865 = vmatprep.subr.mxu0 0.0
    %1866 = vmatpush1.msra.mxu0 %v1542
    %1867 = vmatprep.subr.mxu0 0.0
    %1868 = vmatpush1.msra.mxu0 %v1543
    %1869 = vmatprep.subr.mxu0 0.0
    %1870 = vmatpush1.msra.mxu0 0.0
    %1871 = vmatprep.subr.mxu0 0.0
    %1872 = vmatpush1.msra.mxu0 0.0
    %1873 = vmatprep.subr.mxu0 0.0
    %1874 = vmatpush1.msra.mxu0 0.0
    %1875 = vmatprep.subr.mxu0 0.0
    %1876 = vmatpush1.msra.mxu0 0.0
    %1877 = vmatprep.subr.mxu0 0.0
    %1878 = vmatpush1.msra.mxu0 0.0
    %1879 = vmatprep.subr.mxu0 0.0
    %1880 = vmatpush1.msra.mxu0 0.0
    %1881 = vmatprep.subr.mxu0 0.0
    %1882 = vmatpush1.msra.mxu0 0.0
    %1883 = vmatprep.subr.mxu0 0.0
    %1884 = vmatpush1.msra.mxu0 0.0
    %1885 = vmatprep.subr.mxu0 0.0
    %1886 = vmatpush1.msra.mxu0 0.0
    %1887 = vmatprep.subr.mxu0 0.0
    %1888 = vmatpush1.msra.mxu0 0.0
    %1889 = vmatprep.subr.mxu0 0.0
    %1890 = vmatpush1.msra.mxu0 0.0
    %1891 = vmatprep.subr.mxu0 0.0
    %1892 = vmatpush1.msra.mxu0 0.0
    %1893 = vmatprep.subr.mxu0 0.0
    %1894 = vmatpush1.msra.mxu0 0.0
    %1895 = vmatprep.subr.mxu0 0.0
    %1896 = vmatpush1.msra.mxu0 0.0
    %1897 = vmatprep.subr.mxu0 0.0
    %1898 = vmatpush1.msra.mxu0 0.0
    %1899 = vmatprep.subr.mxu0 0.0
    %1900 = vmatpush1.msra.mxu0 0.0
    %1901 = vmatprep.subr.mxu0 0.0
    %1902 = vmatpush1.msra.mxu0 0.0
    %1903 = vmatprep.subr.mxu0 0.0
    %1904 = vmatpush1.msra.mxu0 0.0
    %1905 = vmatprep.subr.mxu0 0.0
    %1906 = vmatpush1.msra.mxu0 0.0
    %1907 = vmatprep.subr.mxu0 0.0
    %1908 = vmatpush1.msra.mxu0 0.0
    %1909 = vmatprep.subr.mxu0 0.0
    %1910 = vmatpush1.msra.mxu0 0.0
    %1911 = vmatprep.subr.mxu0 0.0
    %1912 = vmatpush1.msra.mxu0 0.0
    %1913 = vmatprep.subr.mxu0 0.0
    %1914 = vmatpush1.msra.mxu0 0.0
    %1915 = vmatprep.subr.mxu0 0.0
    %1916 = vmatpush1.msra.mxu0 0.0
    %1917 = vmatprep.subr.mxu0 0.0
    %1918 = vmatpush1.msra.mxu0 0.0
    %1919 = vmatprep.subr.mxu0 0.0
    %1920 = vmatpush1.msra.mxu0 0.0
    %1921 = vmatprep.subr.mxu0 0.0
    %1922 = vmatpush1.msra.mxu0 0.0
    %1923 = vmatprep.subr.mxu0 0.0
    %1924 = vmatpush1.msra.mxu0 0.0
    %1925 = vmatprep.subr.mxu0 0.0
    %1926 = vmatpush1.msra.mxu0 0.0
    %1927 = vmatprep.subr.mxu0 0.0
    %1928 = vmatpush1.msra.mxu0 0.0
    %1929 = vmatprep.mubr.f32.mxu0 0.0
    %1930 = vmatmul.mubr.f32.gmra.mrb[0].mxu0 %v1560
    %v1931 = vpop.f32.mrb[0].mxu0
    %v1932 = vadd.f32 0.0, %v1931
    %v1933 = vpop.f32.mrb[0].mxu0
    %1934 = vmatprep.mubr.f32.mxu0 0.0
    %1935 = vmatmul.mubr.f32.gmra.mrb[0].mxu0 %v1563
    %v1936 = vpop.f32.mrb[0].mxu0
    %v1937 = vadd.f32 0.0, %v1936
    %v1938 = vpop.f32.mrb[0].mxu0
    %1939 = vdwg.mxu0
    %1940 = vmatprep.subr.mxu0 0.0
    %1941 = vmatpush1.msra.mxu0 %v1544
    %1942 = vmatprep.subr.mxu0 0.0
    %1943 = vmatpush1.msra.mxu0 %v1545
    %1944 = vmatprep.subr.mxu0 0.0
    %1945 = vmatpush1.msra.mxu0 0.0
    %1946 = vmatprep.subr.mxu0 0.0
    %1947 = vmatpush1.msra.mxu0 0.0
    %1948 = vmatprep.subr.mxu0 0.0
    %1949 = vmatpush1.msra.mxu0 0.0
    %1950 = vmatprep.subr.mxu0 0.0
    %1951 = vmatpush1.msra.mxu0 0.0
    %1952 = vmatprep.subr.mxu0 0.0
    %1953 = vmatpush1.msra.mxu0 0.0
    %1954 = vmatprep.subr.mxu0 0.0
    %1955 = vmatpush1.msra.mxu0 0.0
    %1956 = vmatprep.subr.mxu0 0.0
    %1957 = vmatpush1.msra.mxu0 0.0
    %1958 = vmatprep.subr.mxu0 0.0
    %1959 = vmatpush1.msra.mxu0 0.0
    %1960 = vmatprep.subr.mxu0 0.0
    %1961 = vmatpush1.msra.mxu0 0.0
    %1962 = vmatprep.subr.mxu0 0.0
    %1963 = vmatpush1.msra.mxu0 0.0
    %1964 = vmatprep.subr.mxu0 0.0
    %1965 = vmatpush1.msra.mxu0 0.0
    %1966 = vmatprep.subr.mxu0 0.0
    %1967 = vmatpush1.msra.mxu0 0.0
    %1968 = vmatprep.subr.mxu0 0.0
    %1969 = vmatpush1.msra.mxu0 0.0
    %1970 = vmatprep.subr.mxu0 0.0
    %1971 = vmatpush1.msra.mxu0 0.0
    %1972 = vmatprep.subr.mxu0 0.0
    %1973 = vmatpush1.msra.mxu0 0.0
    %1974 = vmatprep.subr.mxu0 0.0
    %1975 = vmatpush1.msra.mxu0 0.0
    %1976 = vmatprep.subr.mxu0 0.0
    %1977 = vmatpush1.msra.mxu0 0.0
    %1978 = vmatprep.subr.mxu0 0.0
    %1979 = vmatpush1.msra.mxu0 0.0
    %1980 = vmatprep.subr.mxu0 0.0
    %1981 = vmatpush1.msra.mxu0 0.0
    %1982 = vmatprep.subr.mxu0 0.0
    %1983 = vmatpush1.msra.mxu0 0.0
    %1984 = vmatprep.subr.mxu0 0.0
    %1985 = vmatpush1.msra.mxu0 0.0
    %1986 = vmatprep.subr.mxu0 0.0
    %1987 = vmatpush1.msra.mxu0 0.0
    %1988 = vmatprep.subr.mxu0 0.0
    %1989 = vmatpush1.msra.mxu0 0.0
    %1990 = vmatprep.subr.mxu0 0.0
    %1991 = vmatpush1.msra.mxu0 0.0
    %1992 = vmatprep.subr.mxu0 0.0
    %1993 = vmatpush1.msra.mxu0 0.0
    %1994 = vmatprep.subr.mxu0 0.0
    %1995 = vmatpush1.msra.mxu0 0.0
    %1996 = vmatprep.subr.mxu0 0.0
    %1997 = vmatpush1.msra.mxu0 0.0
    %1998 = vmatprep.subr.mxu0 0.0
    %1999 = vmatpush1.msra.mxu0 0.0
    %2000 = vmatprep.subr.mxu0 0.0
    %2001 = vmatpush1.msra.mxu0 0.0
    %2002 = vmatprep.subr.mxu0 0.0
    %2003 = vmatpush1.msra.mxu0 0.0
    %2004 = vmatprep.mubr.f32.mxu0 0.0
    %2005 = vmatmul.mubr.f32.gmra.mrb[0].mxu0 %v1560
    %v2006 = vpop.f32.mrb[0].mxu0
    %v2007 = vadd.f32 0.0, %v2006
    %v2008 = vpop.f32.mrb[0].mxu0
    %2009 = vmatprep.mubr.f32.mxu0 0.0
    %2010 = vmatmul.mubr.f32.gmra.mrb[0].mxu0 %v1563
    %v2011 = vpop.f32.mrb[0].mxu0
    %v2012 = vadd.f32 0.0, %v2011
    %v2013 = vpop.f32.mrb[0].mxu0
    %2014 = vdwg.mxu0
    %2015 = vmatprep.subr.mxu0 0.0
    %2016 = vmatpush1.msra.mxu0 %v1546
    %2017 = vmatprep.subr.mxu0 0.0
    %2018 = vmatpush1.msra.mxu0 %v1547
    %2019 = vmatprep.subr.mxu0 0.0
    %2020 = vmatpush1.msra.mxu0 0.0
    %2021 = vmatprep.subr.mxu0 0.0
    %2022 = vmatpush1.msra.mxu0 0.0
    %2023 = vmatprep.subr.mxu0 0.0
    %2024 = vmatpush1.msra.mxu0 0.0
    %2025 = vmatprep.subr.mxu0 0.0
    %2026 = vmatpush1.msra.mxu0 0.0
    %2027 = vmatprep.subr.mxu0 0.0
    %2028 = vmatpush1.msra.mxu0 0.0
    %2029 = vmatprep.subr.mxu0 0.0
    %2030 = vmatpush1.msra.mxu0 0.0
    %2031 = vmatprep.subr.mxu0 0.0
    %2032 = vmatpush1.msra.mxu0 0.0
    %2033 = vmatprep.subr.mxu0 0.0
    %2034 = vmatpush1.msra.mxu0 0.0
    %2035 = vmatprep.subr.mxu0 0.0
    %2036 = vmatpush1.msra.mxu0 0.0
    %2037 = vmatprep.subr.mxu0 0.0
    %2038 = vmatpush1.msra.mxu0 0.0
    %2039 = vmatprep.subr.mxu0 0.0
    %2040 = vmatpush1.msra.mxu0 0.0
    %2041 = vmatprep.subr.mxu0 0.0
    %2042 = vmatpush1.msra.mxu0 0.0
    %2043 = vmatprep.subr.mxu0 0.0
    %2044 = vmatpush1.msra.mxu0 0.0
    %2045 = vmatprep.subr.mxu0 0.0
    %2046 = vmatpush1.msra.mxu0 0.0
    %2047 = vmatprep.subr.mxu0 0.0
    %2048 = vmatpush1.msra.mxu0 0.0
    %2049 = vmatprep.subr.mxu0 0.0
    %2050 = vmatpush1.msra.mxu0 0.0
    %2051 = vmatprep.subr.mxu0 0.0
    %2052 = vmatpush1.msra.mxu0 0.0
    %2053 = vmatprep.subr.mxu0 0.0
    %2054 = vmatpush1.msra.mxu0 0.0
    %2055 = vmatprep.subr.mxu0 0.0
    %2056 = vmatpush1.msra.mxu0 0.0
    %2057 = vmatprep.subr.mxu0 0.0
    %2058 = vmatpush1.msra.mxu0 0.0
    %2059 = vmatprep.subr.mxu0 0.0
    %2060 = vmatpush1.msra.mxu0 0.0
    %2061 = vmatprep.subr.mxu0 0.0
    %2062 = vmatpush1.msra.mxu0 0.0
    %2063 = vmatprep.subr.mxu0 0.0
    %2064 = vmatpush1.msra.mxu0 0.0
    %2065 = vmatprep.subr.mxu0 0.0
    %2066 = vmatpush1.msra.mxu0 0.0
    %2067 = vmatprep.subr.mxu0 0.0
    %2068 = vmatpush1.msra.mxu0 0.0
    %2069 = vmatprep.subr.mxu0 0.0
    %2070 = vmatpush1.msra.mxu0 0.0
    %2071 = vmatprep.subr.mxu0 0.0
    %2072 = vmatpush1.msra.mxu0 0.0
    %2073 = vmatprep.subr.mxu0 0.0
    %2074 = vmatpush1.msra.mxu0 0.0
    %2075 = vmatprep.subr.mxu0 0.0
    %2076 = vmatpush1.msra.mxu0 0.0
    %2077 = vmatprep.subr.mxu0 0.0
    %2078 = vmatpush1.msra.mxu0 0.0
    %2079 = vmatprep.mubr.f32.mxu0 0.0
    %2080 = vmatmul.mubr.f32.gmra.mrb[0].mxu0 %v1560
    %v2081 = vpop.f32.mrb[0].mxu0
    %v2082 = vadd.f32 0.0, %v2081
    %v2083 = vpop.f32.mrb[0].mxu0
    %2084 = vmatprep.mubr.f32.mxu0 0.0
    %2085 = vmatmul.mubr.f32.gmra.mrb[0].mxu0 %v1563
    %v2086 = vpop.f32.mrb[0].mxu0
    %v2087 = vadd.f32 0.0, %v2086
    %v2088 = vpop.f32.mrb[0].mxu0
    %2089 = vdwg.mxu0
    %2090 = vmatprep.subr.mxu0 0.0
    %2091 = vmatpush1.msra.mxu0 %v1548
    %2092 = vmatprep.subr.mxu0 0.0
    %2093 = vmatpush1.msra.mxu0 %v1549
    %2094 = vmatprep.subr.mxu0 0.0
    %2095 = vmatpush1.msra.mxu0 0.0
    %2096 = vmatprep.subr.mxu0 0.0
    %2097 = vmatpush1.msra.mxu0 0.0
    %2098 = vmatprep.subr.mxu0 0.0
    %2099 = vmatpush1.msra.mxu0 0.0
    %2100 = vmatprep.subr.mxu0 0.0
    %2101 = vmatpush1.msra.mxu0 0.0
    %2102 = vmatprep.subr.mxu0 0.0
    %2103 = vmatpush1.msra.mxu0 0.0
    %2104 = vmatprep.subr.mxu0 0.0
    %2105 = vmatpush1.msra.mxu0 0.0
    %2106 = vmatprep.subr.mxu0 0.0
    %2107 = vmatpush1.msra.mxu0 0.0
    %2108 = vmatprep.subr.mxu0 0.0
    %2109 = vmatpush1.msra.mxu0 0.0
    %2110 = vmatprep.subr.mxu0 0.0
    %2111 = vmatpush1.msra.mxu0 0.0
    %2112 = vmatprep.subr.mxu0 0.0
    %2113 = vmatpush1.msra.mxu0 0.0
    %2114 = vmatprep.subr.mxu0 0.0
    %2115 = vmatpush1.msra.mxu0 0.0
    %2116 = vmatprep.subr.mxu0 0.0
    %2117 = vmatpush1.msra.mxu0 0.0
    %2118 = vmatprep.subr.mxu0 0.0
    %2119 = vmatpush1.msra.mxu0 0.0
    %2120 = vmatprep.subr.mxu0 0.0
    %2121 = vmatpush1.msra.mxu0 0.0
    %2122 = vmatprep.subr.mxu0 0.0
    %2123 = vmatpush1.msra.mxu0 0.0
    %2124 = vmatprep.subr.mxu0 0.0
    %2125 = vmatpush1.msra.mxu0 0.0
    %2126 = vmatprep.subr.mxu0 0.0
    %2127 = vmatpush1.msra.mxu0 0.0
    %2128 = vmatprep.subr.mxu0 0.0
    %2129 = vmatpush1.msra.mxu0 0.0
    %2130 = vmatprep.subr.mxu0 0.0
    %2131 = vmatpush1.msra.mxu0 0.0
    %2132 = vmatprep.subr.mxu0 0.0
    %2133 = vmatpush1.msra.mxu0 0.0
    %2134 = vmatprep.subr.mxu0 0.0
    %2135 = vmatpush1.msra.mxu0 0.0
    %2136 = vmatprep.subr.mxu0 0.0
    %2137 = vmatpush1.msra.mxu0 0.0
    %2138 = vmatprep.subr.mxu0 0.0
    %2139 = vmatpush1.msra.mxu0 0.0
    %2140 = vmatprep.subr.mxu0 0.0
    %2141 = vmatpush1.msra.mxu0 0.0
    %2142 = vmatprep.subr.mxu0 0.0
    %2143 = vmatpush1.msra.mxu0 0.0
    %2144 = vmatprep.subr.mxu0 0.0
    %2145 = vmatpush1.msra.mxu0 0.0
    %2146 = vmatprep.subr.mxu0 0.0
    %2147 = vmatpush1.msra.mxu0 0.0
    %2148 = vmatprep.subr.mxu0 0.0
    %2149 = vmatpush1.msra.mxu0 0.0
    %2150 = vmatprep.subr.mxu0 0.0
    %2151 = vmatpush1.msra.mxu0 0.0
    %2152 = vmatprep.subr.mxu0 0.0
    %2153 = vmatpush1.msra.mxu0 0.0
    %2154 = vmatprep.mubr.f32.mxu0 0.0
    %2155 = vmatmul.mubr.f32.gmra.mrb[0].mxu0 %v1560
    %v2156 = vpop.f32.mrb[0].mxu0
    %v2157 = vadd.f32 0.0, %v2156
    %v2158 = vpop.f32.mrb[0].mxu0
    %2159 = vmatprep.mubr.f32.mxu0 0.0
    %2160 = vmatmul.mubr.f32.gmra.mrb[0].mxu0 %v1563
    %v2161 = vpop.f32.mrb[0].mxu0
    %v2162 = vadd.f32 0.0, %v2161
    %v2163 = vpop.f32.mrb[0].mxu0
    %2164 = vdwg.mxu0
    %v2166 = vsel %vm52, %v1632, 0
    %v2169 = vsel %vm52, %v1637, 0
    %v2172 = vsel %vm52, %v1550, 0
    %2174 = vmatprep.subr.mxu0 0.0
    %2175 = vmatpush1.xpose.msra.mxu0 %v2172
    %2176 = vmatprep.subr.mxu0 0.0
    %2177 = vmatpush1.xpose.msra.mxu0 0.0
    %2178 = vmatprep.subr.mxu0 0.0
    %2179 = vmatpush1.xpose.msra.mxu0 0.0
    %2180 = vmatprep.subr.mxu0 0.0
    %2181 = vmatpush1.xpose.msra.mxu0 0.0
    %2182 = vmatprep.subr.mxu0 0.0
    %2183 = vmatpush1.xpose.msra.mxu0 0.0
    %2184 = vmatprep.subr.mxu0 0.0
    %2185 = vmatpush1.xpose.msra.mxu0 0.0
    %2186 = vmatprep.subr.mxu0 0.0
    %2187 = vmatpush1.xpose.msra.mxu0 0.0
    %2188 = vmatprep.subr.mxu0 0.0
    %2189 = vmatpush1.xpose.msra.mxu0 0.0
    %2190 = vmatprep.subr.mxu0 0.0
    %2191 = vmatpush1.xpose.msra.mxu0 0.0
    %2192 = vmatprep.subr.mxu0 0.0
    %2193 = vmatpush1.xpose.msra.mxu0 0.0
    %2194 = vmatprep.subr.mxu0 0.0
    %2195 = vmatpush1.xpose.msra.mxu0 0.0
    %2196 = vmatprep.subr.mxu0 0.0
    %2197 = vmatpush1.xpose.msra.mxu0 0.0
    %2198 = vmatprep.subr.mxu0 0.0
    %2199 = vmatpush1.xpose.msra.mxu0 0.0
    %2200 = vmatprep.subr.mxu0 0.0
    %2201 = vmatpush1.xpose.msra.mxu0 0.0
    %2202 = vmatprep.subr.mxu0 0.0
    %2203 = vmatpush1.xpose.msra.mxu0 0.0
    %2204 = vmatprep.subr.mxu0 0.0
    %2205 = vmatpush1.xpose.msra.mxu0 0.0
    %2206 = vmatprep.subr.mxu0 0.0
    %2207 = vmatpush1.xpose.msra.mxu0 0.0
    %2208 = vmatprep.subr.mxu0 0.0
    %2209 = vmatpush1.xpose.msra.mxu0 0.0
    %2210 = vmatprep.subr.mxu0 0.0
    %2211 = vmatpush1.xpose.msra.mxu0 0.0
    %2212 = vmatprep.subr.mxu0 0.0
    %2213 = vmatpush1.xpose.msra.mxu0 0.0
    %2214 = vmatprep.subr.mxu0 0.0
    %2215 = vmatpush1.xpose.msra.mxu0 0.0
    %2216 = vmatprep.subr.mxu0 0.0
    %2217 = vmatpush1.xpose.msra.mxu0 0.0
    %2218 = vmatprep.subr.mxu0 0.0
    %2219 = vmatpush1.xpose.msra.mxu0 0.0
    %2220 = vmatprep.subr.mxu0 0.0
    %2221 = vmatpush1.xpose.msra.mxu0 0.0
    %2222 = vmatprep.subr.mxu0 0.0
    %2223 = vmatpush1.xpose.msra.mxu0 0.0
    %2224 = vmatprep.subr.mxu0 0.0
    %2225 = vmatpush1.xpose.msra.mxu0 0.0
    %2226 = vmatprep.subr.mxu0 0.0
    %2227 = vmatpush1.xpose.msra.mxu0 0.0
    %2228 = vmatprep.subr.mxu0 0.0
    %2229 = vmatpush1.xpose.msra.mxu0 0.0
    %2230 = vmatprep.subr.mxu0 0.0
    %2231 = vmatpush1.xpose.msra.mxu0 0.0
    %2232 = vmatprep.subr.mxu0 0.0
    %2233 = vmatpush1.xpose.msra.mxu0 0.0
    %2234 = vmatprep.subr.mxu0 0.0
    %2235 = vmatpush1.xpose.msra.mxu0 0.0
    %2236 = vmatprep.subr.mxu0 0.0
    %2237 = vmatpush1.xpose.msra.mxu0 0.0
    %2238 = vmatprep.mubr.f32.mxu0 0.0
    %2239 = vmatmul.mubr.f32.gmra.mrb[0].mxu0 %v2166
    %v2240 = vpop.f32.mrb[0].mxu0
    %v2241 = vadd.f32 0.0, %v2240
    %v2242 = vpop.f32.mrb[0].mxu0
    %2243 = vmatprep.mubr.f32.mxu0 0.0
    %2244 = vmatmul.mubr.f32.gmra.mrb[0].mxu0 %v2169
    %v2245 = vpop.f32.mrb[0].mxu0
    %v2246 = vadd.f32 0.0, %v2245
    %v2247 = vpop.f32.mrb[0].mxu0
    %2248 = vdwg.mxu0
    %v2250 = vsel %vm52, %v1707, 0
    %v2253 = vsel %vm52, %v1712, 0
    %v2256 = vsel %vm52, %v1551, 0
    %2258 = vmatprep.subr.mxu0 0.0
    %2259 = vmatpush1.xpose.msra.mxu0 %v2256
    %2260 = vmatprep.subr.mxu0 0.0
    %2261 = vmatpush1.xpose.msra.mxu0 0.0
    %2262 = vmatprep.subr.mxu0 0.0
    %2263 = vmatpush1.xpose.msra.mxu0 0.0
    %2264 = vmatprep.subr.mxu0 0.0
    %2265 = vmatpush1.xpose.msra.mxu0 0.0
    %2266 = vmatprep.subr.mxu0 0.0
    %2267 = vmatpush1.xpose.msra.mxu0 0.0
    %2268 = vmatprep.subr.mxu0 0.0
    %2269 = vmatpush1.xpose.msra.mxu0 0.0
    %2270 = vmatprep.subr.mxu0 0.0
    %2271 = vmatpush1.xpose.msra.mxu0 0.0
    %2272 = vmatprep.subr.mxu0 0.0
    %2273 = vmatpush1.xpose.msra.mxu0 0.0
    %2274 = vmatprep.subr.mxu0 0.0
    %2275 = vmatpush1.xpose.msra.mxu0 0.0
    %2276 = vmatprep.subr.mxu0 0.0
    %2277 = vmatpush1.xpose.msra.mxu0 0.0
    %2278 = vmatprep.subr.mxu0 0.0
    %2279 = vmatpush1.xpose.msra.mxu0 0.0
    %2280 = vmatprep.subr.mxu0 0.0
    %2281 = vmatpush1.xpose.msra.mxu0 0.0
    %2282 = vmatprep.subr.mxu0 0.0
    %2283 = vmatpush1.xpose.msra.mxu0 0.0
    %2284 = vmatprep.subr.mxu0 0.0
    %2285 = vmatpush1.xpose.msra.mxu0 0.0
    %2286 = vmatprep.subr.mxu0 0.0
    %2287 = vmatpush1.xpose.msra.mxu0 0.0
    %2288 = vmatprep.subr.mxu0 0.0
    %2289 = vmatpush1.xpose.msra.mxu0 0.0
    %2290 = vmatprep.subr.mxu0 0.0
    %2291 = vmatpush1.xpose.msra.mxu0 0.0
    %2292 = vmatprep.subr.mxu0 0.0
    %2293 = vmatpush1.xpose.msra.mxu0 0.0
    %2294 = vmatprep.subr.mxu0 0.0
    %2295 = vmatpush1.xpose.msra.mxu0 0.0
    %2296 = vmatprep.subr.mxu0 0.0
    %2297 = vmatpush1.xpose.msra.mxu0 0.0
    %2298 = vmatprep.subr.mxu0 0.0
    %2299 = vmatpush1.xpose.msra.mxu0 0.0
    %2300 = vmatprep.subr.mxu0 0.0
    %2301 = vmatpush1.xpose.msra.mxu0 0.0
    %2302 = vmatprep.subr.mxu0 0.0
    %2303 = vmatpush1.xpose.msra.mxu0 0.0
    %2304 = vmatprep.subr.mxu0 0.0
    %2305 = vmatpush1.xpose.msra.mxu0 0.0
    %2306 = vmatprep.subr.mxu0 0.0
    %2307 = vmatpush1.xpose.msra.mxu0 0.0
    %2308 = vmatprep.subr.mxu0 0.0
    %2309 = vmatpush1.xpose.msra.mxu0 0.0
    %2310 = vmatprep.subr.mxu0 0.0
    %2311 = vmatpush1.xpose.msra.mxu0 0.0
    %2312 = vmatprep.subr.mxu0 0.0
    %2313 = vmatpush1.xpose.msra.mxu0 0.0
    %2314 = vmatprep.subr.mxu0 0.0
    %2315 = vmatpush1.xpose.msra.mxu0 0.0
    %2316 = vmatprep.subr.mxu0 0.0
    %2317 = vmatpush1.xpose.msra.mxu0 0.0
    %2318 = vmatprep.subr.mxu0 0.0
    %2319 = vmatpush1.xpose.msra.mxu0 0.0
    %2320 = vmatprep.subr.mxu0 0.0
    %2321 = vmatpush1.xpose.msra.mxu0 0.0
    %2322 = vmatprep.mubr.f32.mxu0 0.0
    %2323 = vmatmul.mubr.f32.gmra.mrb[0].mxu0 %v2250
    %v2324 = vpop.f32.mrb[0].mxu0
    %v2325 = vadd.f32 0.0, %v2324
    %v2326 = vpop.f32.mrb[0].mxu0
    %2327 = vmatprep.mubr.f32.mxu0 0.0
    %2328 = vmatmul.mubr.f32.gmra.mrb[0].mxu0 %v2253
    %v2329 = vpop.f32.mrb[0].mxu0
    %v2330 = vadd.f32 0.0, %v2329
    %v2331 = vpop.f32.mrb[0].mxu0
    %2332 = vdwg.mxu0
    %v2334 = vsel %vm52, %v1782, 0
    %v2337 = vsel %vm52, %v1787, 0
    %v2340 = vsel %vm52, %v1552, 0
    %2342 = vmatprep.subr.mxu0 0.0
    %2343 = vmatpush1.xpose.msra.mxu0 %v2340
    %2344 = vmatprep.subr.mxu0 0.0
    %2345 = vmatpush1.xpose.msra.mxu0 0.0
    %2346 = vmatprep.subr.mxu0 0.0
    %2347 = vmatpush1.xpose.msra.mxu0 0.0
    %2348 = vmatprep.subr.mxu0 0.0
    %2349 = vmatpush1.xpose.msra.mxu0 0.0
    %2350 = vmatprep.subr.mxu0 0.0
    %2351 = vmatpush1.xpose.msra.mxu0 0.0
    %2352 = vmatprep.subr.mxu0 0.0
    %2353 = vmatpush1.xpose.msra.mxu0 0.0
    %2354 = vmatprep.subr.mxu0 0.0
    %2355 = vmatpush1.xpose.msra.mxu0 0.0
    %2356 = vmatprep.subr.mxu0 0.0
    %2357 = vmatpush1.xpose.msra.mxu0 0.0
    %2358 = vmatprep.subr.mxu0 0.0
    %2359 = vmatpush1.xpose.msra.mxu0 0.0
    %2360 = vmatprep.subr.mxu0 0.0
    %2361 = vmatpush1.xpose.msra.mxu0 0.0
    %2362 = vmatprep.subr.mxu0 0.0
    %2363 = vmatpush1.xpose.msra.mxu0 0.0
    %2364 = vmatprep.subr.mxu0 0.0
    %2365 = vmatpush1.xpose.msra.mxu0 0.0
    %2366 = vmatprep.subr.mxu0 0.0
    %2367 = vmatpush1.xpose.msra.mxu0 0.0
    %2368 = vmatprep.subr.mxu0 0.0
    %2369 = vmatpush1.xpose.msra.mxu0 0.0
    %2370 = vmatprep.subr.mxu0 0.0
    %2371 = vmatpush1.xpose.msra.mxu0 0.0
    %2372 = vmatprep.subr.mxu0 0.0
    %2373 = vmatpush1.xpose.msra.mxu0 0.0
    %2374 = vmatprep.subr.mxu0 0.0
    %2375 = vmatpush1.xpose.msra.mxu0 0.0
    %2376 = vmatprep.subr.mxu0 0.0
    %2377 = vmatpush1.xpose.msra.mxu0 0.0
    %2378 = vmatprep.subr.mxu0 0.0
    %2379 = vmatpush1.xpose.msra.mxu0 0.0
    %2380 = vmatprep.subr.mxu0 0.0
    %2381 = vmatpush1.xpose.msra.mxu0 0.0
    %2382 = vmatprep.subr.mxu0 0.0
    %2383 = vmatpush1.xpose.msra.mxu0 0.0
    %2384 = vmatprep.subr.mxu0 0.0
    %2385 = vmatpush1.xpose.msra.mxu0 0.0
    %2386 = vmatprep.subr.mxu0 0.0
    %2387 = vmatpush1.xpose.msra.mxu0 0.0
    %2388 = vmatprep.subr.mxu0 0.0
    %2389 = vmatpush1.xpose.msra.mxu0 0.0
    %2390 = vmatprep.subr.mxu0 0.0
    %2391 = vmatpush1.xpose.msra.mxu0 0.0
    %2392 = vmatprep.subr.mxu0 0.0
    %2393 = vmatpush1.xpose.msra.mxu0 0.0
    %2394 = vmatprep.subr.mxu0 0.0
    %2395 = vmatpush1.xpose.msra.mxu0 0.0
    %2396 = vmatprep.subr.mxu0 0.0
    %2397 = vmatpush1.xpose.msra.mxu0 0.0
    %2398 = vmatprep.subr.mxu0 0.0
    %2399 = vmatpush1.xpose.msra.mxu0 0.0
    %2400 = vmatprep.subr.mxu0 0.0
    %2401 = vmatpush1.xpose.msra.mxu0 0.0
    %2402 = vmatprep.subr.mxu0 0.0
    %2403 = vmatpush1.xpose.msra.mxu0 0.0
    %2404 = vmatprep.subr.mxu0 0.0
    %2405 = vmatpush1.xpose.msra.mxu0 0.0
    %2406 = vmatprep.mubr.f32.mxu0 0.0
    %2407 = vmatmul.mubr.f32.gmra.mrb[0].mxu0 %v2334
    %v2408 = vpop.f32.mrb[0].mxu0
    %v2409 = vadd.f32 0.0, %v2408
    %v2410 = vpop.f32.mrb[0].mxu0
    %2411 = vmatprep.mubr.f32.mxu0 0.0
    %2412 = vmatmul.mubr.f32.gmra.mrb[0].mxu0 %v2337
    %v2413 = vpop.f32.mrb[0].mxu0
    %v2414 = vadd.f32 0.0, %v2413
    %v2415 = vpop.f32.mrb[0].mxu0
    %2416 = vdwg.mxu0
    %v2418 = vsel %vm52, %v1857, 0
    %v2421 = vsel %vm52, %v1862, 0
    %v2424 = vsel %vm52, %v1553, 0
    %2426 = vmatprep.subr.mxu0 0.0
    %2427 = vmatpush1.xpose.msra.mxu0 %v2424
    %2428 = vmatprep.subr.mxu0 0.0
    %2429 = vmatpush1.xpose.msra.mxu0 0.0
    %2430 = vmatprep.subr.mxu0 0.0
    %2431 = vmatpush1.xpose.msra.mxu0 0.0
    %2432 = vmatprep.subr.mxu0 0.0
    %2433 = vmatpush1.xpose.msra.mxu0 0.0
    %2434 = vmatprep.subr.mxu0 0.0
    %2435 = vmatpush1.xpose.msra.mxu0 0.0
    %2436 = vmatprep.subr.mxu0 0.0
    %2437 = vmatpush1.xpose.msra.mxu0 0.0
    %2438 = vmatprep.subr.mxu0 0.0
    %2439 = vmatpush1.xpose.msra.mxu0 0.0
    %2440 = vmatprep.subr.mxu0 0.0
    %2441 = vmatpush1.xpose.msra.mxu0 0.0
    %2442 = vmatprep.subr.mxu0 0.0
    %2443 = vmatpush1.xpose.msra.mxu0 0.0
    %2444 = vmatprep.subr.mxu0 0.0
    %2445 = vmatpush1.xpose.msra.mxu0 0.0
    %2446 = vmatprep.subr.mxu0 0.0
    %2447 = vmatpush1.xpose.msra.mxu0 0.0
    %2448 = vmatprep.subr.mxu0 0.0
    %2449 = vmatpush1.xpose.msra.mxu0 0.0
    %2450 = vmatprep.subr.mxu0 0.0
    %2451 = vmatpush1.xpose.msra.mxu0 0.0
    %2452 = vmatprep.subr.mxu0 0.0
    %2453 = vmatpush1.xpose.msra.mxu0 0.0
    %2454 = vmatprep.subr.mxu0 0.0
    %2455 = vmatpush1.xpose.msra.mxu0 0.0
    %2456 = vmatprep.subr.mxu0 0.0
    %2457 = vmatpush1.xpose.msra.mxu0 0.0
    %2458 = vmatprep.subr.mxu0 0.0
    %2459 = vmatpush1.xpose.msra.mxu0 0.0
    %2460 = vmatprep.subr.mxu0 0.0
    %2461 = vmatpush1.xpose.msra.mxu0 0.0
    %2462 = vmatprep.subr.mxu0 0.0
    %2463 = vmatpush1.xpose.msra.mxu0 0.0
    %2464 = vmatprep.subr.mxu0 0.0
    %2465 = vmatpush1.xpose.msra.mxu0 0.0
    %2466 = vmatprep.subr.mxu0 0.0
    %2467 = vmatpush1.xpose.msra.mxu0 0.0
    %2468 = vmatprep.subr.mxu0 0.0
    %2469 = vmatpush1.xpose.msra.mxu0 0.0
    %2470 = vmatprep.subr.mxu0 0.0
    %2471 = vmatpush1.xpose.msra.mxu0 0.0
    %2472 = vmatprep.subr.mxu0 0.0
    %2473 = vmatpush1.xpose.msra.mxu0 0.0
    %2474 = vmatprep.subr.mxu0 0.0
    %2475 = vmatpush1.xpose.msra.mxu0 0.0
    %2476 = vmatprep.subr.mxu0 0.0
    %2477 = vmatpush1.xpose.msra.mxu0 0.0
    %2478 = vmatprep.subr.mxu0 0.0
    %2479 = vmatpush1.xpose.msra.mxu0 0.0
    %2480 = vmatprep.subr.mxu0 0.0
    %2481 = vmatpush1.xpose.msra.mxu0 0.0
    %2482 = vmatprep.subr.mxu0 0.0
    %2483 = vmatpush1.xpose.msra.mxu0 0.0
    %2484 = vmatprep.subr.mxu0 0.0
    %2485 = vmatpush1.xpose.msra.mxu0 0.0
    %2486 = vmatprep.subr.mxu0 0.0
    %2487 = vmatpush1.xpose.msra.mxu0 0.0
    %2488 = vmatprep.subr.mxu0 0.0
    %2489 = vmatpush1.xpose.msra.mxu0 0.0
    %2490 = vmatprep.mubr.f32.mxu0 0.0
    %2491 = vmatmul.mubr.f32.gmra.mrb[0].mxu0 %v2418
    %v2492 = vpop.f32.mrb[0].mxu0
    %v2493 = vadd.f32 0.0, %v2492
    %v2494 = vpop.f32.mrb[0].mxu0
    %2495 = vmatprep.mubr.f32.mxu0 0.0
    %2496 = vmatmul.mubr.f32.gmra.mrb[0].mxu0 %v2421
    %v2497 = vpop.f32.mrb[0].mxu0
    %v2498 = vadd.f32 0.0, %v2497
    %v2499 = vpop.f32.mrb[0].mxu0
    %2500 = vdwg.mxu0
    %v2502 = vsel %vm52, %v1932, 0
    %v2505 = vsel %vm52, %v1937, 0
    %v2508 = vsel %vm52, %v1554, 0
    %2510 = vmatprep.subr.mxu0 0.0
    %2511 = vmatpush1.xpose.msra.mxu0 %v2508
    %2512 = vmatprep.subr.mxu0 0.0
    %2513 = vmatpush1.xpose.msra.mxu0 0.0
    %2514 = vmatprep.subr.mxu0 0.0
    %2515 = vmatpush1.xpose.msra.mxu0 0.0
    %2516 = vmatprep.subr.mxu0 0.0
    %2517 = vmatpush1.xpose.msra.mxu0 0.0
    %2518 = vmatprep.subr.mxu0 0.0
    %2519 = vmatpush1.xpose.msra.mxu0 0.0
    %2520 = vmatprep.subr.mxu0 0.0
    %2521 = vmatpush1.xpose.msra.mxu0 0.0
    %2522 = vmatprep.subr.mxu0 0.0
    %2523 = vmatpush1.xpose.msra.mxu0 0.0
    %2524 = vmatprep.subr.mxu0 0.0
    %2525 = vmatpush1.xpose.msra.mxu0 0.0
    %2526 = vmatprep.subr.mxu0 0.0
    %2527 = vmatpush1.xpose.msra.mxu0 0.0
    %2528 = vmatprep.subr.mxu0 0.0
    %2529 = vmatpush1.xpose.msra.mxu0 0.0
    %2530 = vmatprep.subr.mxu0 0.0
    %2531 = vmatpush1.xpose.msra.mxu0 0.0
    %2532 = vmatprep.subr.mxu0 0.0
    %2533 = vmatpush1.xpose.msra.mxu0 0.0
    %2534 = vmatprep.subr.mxu0 0.0
    %2535 = vmatpush1.xpose.msra.mxu0 0.0
    %2536 = vmatprep.subr.mxu0 0.0
    %2537 = vmatpush1.xpose.msra.mxu0 0.0
    %2538 = vmatprep.subr.mxu0 0.0
    %2539 = vmatpush1.xpose.msra.mxu0 0.0
    %2540 = vmatprep.subr.mxu0 0.0
    %2541 = vmatpush1.xpose.msra.mxu0 0.0
    %2542 = vmatprep.subr.mxu0 0.0
    %2543 = vmatpush1.xpose.msra.mxu0 0.0
    %2544 = vmatprep.subr.mxu0 0.0
    %2545 = vmatpush1.xpose.msra.mxu0 0.0
    %2546 = vmatprep.subr.mxu0 0.0
    %2547 = vmatpush1.xpose.msra.mxu0 0.0
    %2548 = vmatprep.subr.mxu0 0.0
    %2549 = vmatpush1.xpose.msra.mxu0 0.0
    %2550 = vmatprep.subr.mxu0 0.0
    %2551 = vmatpush1.xpose.msra.mxu0 0.0
    %2552 = vmatprep.subr.mxu0 0.0
    %2553 = vmatpush1.xpose.msra.mxu0 0.0
    %2554 = vmatprep.subr.mxu0 0.0
    %2555 = vmatpush1.xpose.msra.mxu0 0.0
    %2556 = vmatprep.subr.mxu0 0.0
    %2557 = vmatpush1.xpose.msra.mxu0 0.0
    %2558 = vmatprep.subr.mxu0 0.0
    %2559 = vmatpush1.xpose.msra.mxu0 0.0
    %2560 = vmatprep.subr.mxu0 0.0
    %2561 = vmatpush1.xpose.msra.mxu0 0.0
    %2562 = vmatprep.subr.mxu0 0.0
    %2563 = vmatpush1.xpose.msra.mxu0 0.0
    %2564 = vmatprep.subr.mxu0 0.0
    %2565 = vmatpush1.xpose.msra.mxu0 0.0
    %2566 = vmatprep.subr.mxu0 0.0
    %2567 = vmatpush1.xpose.msra.mxu0 0.0
    %2568 = vmatprep.subr.mxu0 0.0
    %2569 = vmatpush1.xpose.msra.mxu0 0.0
    %2570 = vmatprep.subr.mxu0 0.0
    %2571 = vmatpush1.xpose.msra.mxu0 0.0
    %2572 = vmatprep.subr.mxu0 0.0
    %2573 = vmatpush1.xpose.msra.mxu0 0.0
    %2574 = vmatprep.mubr.f32.mxu0 0.0
    %2575 = vmatmul.mubr.f32.gmra.mrb[0].mxu0 %v2502
    %v2576 = vpop.f32.mrb[0].mxu0
    %v2577 = vadd.f32 0.0, %v2576
    %v2578 = vpop.f32.mrb[0].mxu0
    %2579 = vmatprep.mubr.f32.mxu0 0.0
    %2580 = vmatmul.mubr.f32.gmra.mrb[0].mxu0 %v2505
    %v2581 = vpop.f32.mrb[0].mxu0
    %v2582 = vadd.f32 0.0, %v2581
    %v2583 = vpop.f32.mrb[0].mxu0
    %2584 = vdwg.mxu0
    %v2586 = vsel %vm52, %v2007, 0
    %v2589 = vsel %vm52, %v2012, 0
    %v2592 = vsel %vm52, %v1555, 0
    %2594 = vmatprep.subr.mxu0 0.0
    %2595 = vmatpush1.xpose.msra.mxu0 %v2592
    %2596 = vmatprep.subr.mxu0 0.0
    %2597 = vmatpush1.xpose.msra.mxu0 0.0
    %2598 = vmatprep.subr.mxu0 0.0
    %2599 = vmatpush1.xpose.msra.mxu0 0.0
    %2600 = vmatprep.subr.mxu0 0.0
    %2601 = vmatpush1.xpose.msra.mxu0 0.0
    %2602 = vmatprep.subr.mxu0 0.0
    %2603 = vmatpush1.xpose.msra.mxu0 0.0
    %2604 = vmatprep.subr.mxu0 0.0
    %2605 = vmatpush1.xpose.msra.mxu0 0.0
    %2606 = vmatprep.subr.mxu0 0.0
    %2607 = vmatpush1.xpose.msra.mxu0 0.0
    %2608 = vmatprep.subr.mxu0 0.0
    %2609 = vmatpush1.xpose.msra.mxu0 0.0
    %2610 = vmatprep.subr.mxu0 0.0
    %2611 = vmatpush1.xpose.msra.mxu0 0.0
    %2612 = vmatprep.subr.mxu0 0.0
    %2613 = vmatpush1.xpose.msra.mxu0 0.0
    %2614 = vmatprep.subr.mxu0 0.0
    %2615 = vmatpush1.xpose.msra.mxu0 0.0
    %2616 = vmatprep.subr.mxu0 0.0
    %2617 = vmatpush1.xpose.msra.mxu0 0.0
    %2618 = vmatprep.subr.mxu0 0.0
    %2619 = vmatpush1.xpose.msra.mxu0 0.0
    %2620 = vmatprep.subr.mxu0 0.0
    %2621 = vmatpush1.xpose.msra.mxu0 0.0
    %2622 = vmatprep.subr.mxu0 0.0
    %2623 = vmatpush1.xpose.msra.mxu0 0.0
    %2624 = vmatprep.subr.mxu0 0.0
    %2625 = vmatpush1.xpose.msra.mxu0 0.0
    %2626 = vmatprep.subr.mxu0 0.0
    %2627 = vmatpush1.xpose.msra.mxu0 0.0
    %2628 = vmatprep.subr.mxu0 0.0
    %2629 = vmatpush1.xpose.msra.mxu0 0.0
    %2630 = vmatprep.subr.mxu0 0.0
    %2631 = vmatpush1.xpose.msra.mxu0 0.0
    %2632 = vmatprep.subr.mxu0 0.0
    %2633 = vmatpush1.xpose.msra.mxu0 0.0
    %2634 = vmatprep.subr.mxu0 0.0
    %2635 = vmatpush1.xpose.msra.mxu0 0.0
    %2636 = vmatprep.subr.mxu0 0.0
    %2637 = vmatpush1.xpose.msra.mxu0 0.0
    %2638 = vmatprep.subr.mxu0 0.0
    %2639 = vmatpush1.xpose.msra.mxu0 0.0
    %2640 = vmatprep.subr.mxu0 0.0
    %2641 = vmatpush1.xpose.msra.mxu0 0.0
    %2642 = vmatprep.subr.mxu0 0.0
    %2643 = vmatpush1.xpose.msra.mxu0 0.0
    %2644 = vmatprep.subr.mxu0 0.0
    %2645 = vmatpush1.xpose.msra.mxu0 0.0
    %2646 = vmatprep.subr.mxu0 0.0
    %2647 = vmatpush1.xpose.msra.mxu0 0.0
    %2648 = vmatprep.subr.mxu0 0.0
    %2649 = vmatpush1.xpose.msra.mxu0 0.0
    %2650 = vmatprep.subr.mxu0 0.0
    %2651 = vmatpush1.xpose.msra.mxu0 0.0
    %2652 = vmatprep.subr.mxu0 0.0
    %2653 = vmatpush1.xpose.msra.mxu0 0.0
    %2654 = vmatprep.subr.mxu0 0.0
    %2655 = vmatpush1.xpose.msra.mxu0 0.0
    %2656 = vmatprep.subr.mxu0 0.0
    %2657 = vmatpush1.xpose.msra.mxu0 0.0
    %2658 = vmatprep.mubr.f32.mxu0 0.0
    %2659 = vmatmul.mubr.f32.gmra.mrb[0].mxu0 %v2586
    %v2660 = vpop.f32.mrb[0].mxu0
    %v2661 = vadd.f32 0.0, %v2660
    %v2662 = vpop.f32.mrb[0].mxu0
    %2663 = vmatprep.mubr.f32.mxu0 0.0
    %2664 = vmatmul.mubr.f32.gmra.mrb[0].mxu0 %v2589
    %v2665 = vpop.f32.mrb[0].mxu0
    %v2666 = vadd.f32 0.0, %v2665
    %v2667 = vpop.f32.mrb[0].mxu0
    %2668 = vdwg.mxu0
    %v2670 = vsel %vm52, %v2082, 0
    %v2673 = vsel %vm52, %v2087, 0
    %v2676 = vsel %vm52, %v1556, 0
    %2678 = vmatprep.subr.mxu0 0.0
    %2679 = vmatpush1.xpose.msra.mxu0 %v2676
    %2680 = vmatprep.subr.mxu0 0.0
    %2681 = vmatpush1.xpose.msra.mxu0 0.0
    %2682 = vmatprep.subr.mxu0 0.0
    %2683 = vmatpush1.xpose.msra.mxu0 0.0
    %2684 = vmatprep.subr.mxu0 0.0
    %2685 = vmatpush1.xpose.msra.mxu0 0.0
    %2686 = vmatprep.subr.mxu0 0.0
    %2687 = vmatpush1.xpose.msra.mxu0 0.0
    %2688 = vmatprep.subr.mxu0 0.0
    %2689 = vmatpush1.xpose.msra.mxu0 0.0
    %2690 = vmatprep.subr.mxu0 0.0
    %2691 = vmatpush1.xpose.msra.mxu0 0.0
    %2692 = vmatprep.subr.mxu0 0.0
    %2693 = vmatpush1.xpose.msra.mxu0 0.0
    %2694 = vmatprep.subr.mxu0 0.0
    %2695 = vmatpush1.xpose.msra.mxu0 0.0
    %2696 = vmatprep.subr.mxu0 0.0
    %2697 = vmatpush1.xpose.msra.mxu0 0.0
    %2698 = vmatprep.subr.mxu0 0.0
    %2699 = vmatpush1.xpose.msra.mxu0 0.0
    %2700 = vmatprep.subr.mxu0 0.0
    %2701 = vmatpush1.xpose.msra.mxu0 0.0
    %2702 = vmatprep.subr.mxu0 0.0
    %2703 = vmatpush1.xpose.msra.mxu0 0.0
    %2704 = vmatprep.subr.mxu0 0.0
    %2705 = vmatpush1.xpose.msra.mxu0 0.0
    %2706 = vmatprep.subr.mxu0 0.0
    %2707 = vmatpush1.xpose.msra.mxu0 0.0
    %2708 = vmatprep.subr.mxu0 0.0
    %2709 = vmatpush1.xpose.msra.mxu0 0.0
    %2710 = vmatprep.subr.mxu0 0.0
    %2711 = vmatpush1.xpose.msra.mxu0 0.0
    %2712 = vmatprep.subr.mxu0 0.0
    %2713 = vmatpush1.xpose.msra.mxu0 0.0
    %2714 = vmatprep.subr.mxu0 0.0
    %2715 = vmatpush1.xpose.msra.mxu0 0.0
    %2716 = vmatprep.subr.mxu0 0.0
    %2717 = vmatpush1.xpose.msra.mxu0 0.0
    %2718 = vmatprep.subr.mxu0 0.0
    %2719 = vmatpush1.xpose.msra.mxu0 0.0
    %2720 = vmatprep.subr.mxu0 0.0
    %2721 = vmatpush1.xpose.msra.mxu0 0.0
    %2722 = vmatprep.subr.mxu0 0.0
    %2723 = vmatpush1.xpose.msra.mxu0 0.0
    %2724 = vmatprep.subr.mxu0 0.0
    %2725 = vmatpush1.xpose.msra.mxu0 0.0
    %2726 = vmatprep.subr.mxu0 0.0
    %2727 = vmatpush1.xpose.msra.mxu0 0.0
    %2728 = vmatprep.subr.mxu0 0.0
    %2729 = vmatpush1.xpose.msra.mxu0 0.0
    %2730 = vmatprep.subr.mxu0 0.0
    %2731 = vmatpush1.xpose.msra.mxu0 0.0
    %2732 = vmatprep.subr.mxu0 0.0
    %2733 = vmatpush1.xpose.msra.mxu0 0.0
    %2734 = vmatprep.subr.mxu0 0.0
    %2735 = vmatpush1.xpose.msra.mxu0 0.0
    %2736 = vmatprep.subr.mxu0 0.0
    %2737 = vmatpush1.xpose.msra.mxu0 0.0
    %2738 = vmatprep.subr.mxu0 0.0
    %2739 = vmatpush1.xpose.msra.mxu0 0.0
    %2740 = vmatprep.subr.mxu0 0.0
    %2741 = vmatpush1.xpose.msra.mxu0 0.0
    %2742 = vmatprep.mubr.f32.mxu0 0.0
    %2743 = vmatmul.mubr.f32.gmra.mrb[0].mxu0 %v2670
    %v2744 = vpop.f32.mrb[0].mxu0
    %v2745 = vadd.f32 0.0, %v2744
    %v2746 = vpop.f32.mrb[0].mxu0
    %2747 = vmatprep.mubr.f32.mxu0 0.0
    %2748 = vmatmul.mubr.f32.gmra.mrb[0].mxu0 %v2673
    %v2749 = vpop.f32.mrb[0].mxu0
    %v2750 = vadd.f32 0.0, %v2749
    %v2751 = vpop.f32.mrb[0].mxu0
    %2752 = vdwg.mxu0
    %v2754 = vsel %vm52, %v2157, 0
    %v2757 = vsel %vm52, %v2162, 0
    %v2760 = vsel %vm52, %v1557, 0
    %2762 = vmatprep.subr.mxu0 0.0
    %2763 = vmatpush1.xpose.msra.mxu0 %v2760
    %2764 = vmatprep.subr.mxu0 0.0
    %2765 = vmatpush1.xpose.msra.mxu0 0.0
    %2766 = vmatprep.subr.mxu0 0.0
    %2767 = vmatpush1.xpose.msra.mxu0 0.0
    %2768 = vmatprep.subr.mxu0 0.0
    %2769 = vmatpush1.xpose.msra.mxu0 0.0
    %2770 = vmatprep.subr.mxu0 0.0
    %2771 = vmatpush1.xpose.msra.mxu0 0.0
    %2772 = vmatprep.subr.mxu0 0.0
    %2773 = vmatpush1.xpose.msra.mxu0 0.0
    %2774 = vmatprep.subr.mxu0 0.0
    %2775 = vmatpush1.xpose.msra.mxu0 0.0
    %2776 = vmatprep.subr.mxu0 0.0
    %2777 = vmatpush1.xpose.msra.mxu0 0.0
    %2778 = vmatprep.subr.mxu0 0.0
    %2779 = vmatpush1.xpose.msra.mxu0 0.0
    %2780 = vmatprep.subr.mxu0 0.0
    %2781 = vmatpush1.xpose.msra.mxu0 0.0
    %2782 = vmatprep.subr.mxu0 0.0
    %2783 = vmatpush1.xpose.msra.mxu0 0.0
    %2784 = vmatprep.subr.mxu0 0.0
    %2785 = vmatpush1.xpose.msra.mxu0 0.0
    %2786 = vmatprep.subr.mxu0 0.0
    %2787 = vmatpush1.xpose.msra.mxu0 0.0
    %2788 = vmatprep.subr.mxu0 0.0
    %2789 = vmatpush1.xpose.msra.mxu0 0.0
    %2790 = vmatprep.subr.mxu0 0.0
    %2791 = vmatpush1.xpose.msra.mxu0 0.0
    %2792 = vmatprep.subr.mxu0 0.0
    %2793 = vmatpush1.xpose.msra.mxu0 0.0
    %2794 = vmatprep.subr.mxu0 0.0
    %2795 = vmatpush1.xpose.msra.mxu0 0.0
    %2796 = vmatprep.subr.mxu0 0.0
    %2797 = vmatpush1.xpose.msra.mxu0 0.0
    %2798 = vmatprep.subr.mxu0 0.0
    %2799 = vmatpush1.xpose.msra.mxu0 0.0
    %2800 = vmatprep.subr.mxu0 0.0
    %2801 = vmatpush1.xpose.msra.mxu0 0.0
    %2802 = vmatprep.subr.mxu0 0.0
    %2803 = vmatpush1.xpose.msra.mxu0 0.0
    %2804 = vmatprep.subr.mxu0 0.0
    %2805 = vmatpush1.xpose.msra.mxu0 0.0
    %2806 = vmatprep.subr.mxu0 0.0
    %2807 = vmatpush1.xpose.msra.mxu0 0.0
    %2808 = vmatprep.subr.mxu0 0.0
    %2809 = vmatpush1.xpose.msra.mxu0 0.0
    %2810 = vmatprep.subr.mxu0 0.0
    %2811 = vmatpush1.xpose.msra.mxu0 0.0
    %2812 = vmatprep.subr.mxu0 0.0
    %2813 = vmatpush1.xpose.msra.mxu0 0.0
    %2814 = vmatprep.subr.mxu0 0.0
    %2815 = vmatpush1.xpose.msra.mxu0 0.0
    %2816 = vmatprep.subr.mxu0 0.0
    %2817 = vmatpush1.xpose.msra.mxu0 0.0
    %2818 = vmatprep.subr.mxu0 0.0
    %2819 = vmatpush1.xpose.msra.mxu0 0.0
    %2820 = vmatprep.subr.mxu0 0.0
    %2821 = vmatpush1.xpose.msra.mxu0 0.0
    %2822 = vmatprep.subr.mxu0 0.0
    %2823 = vmatpush1.xpose.msra.mxu0 0.0
    %2824 = vmatprep.subr.mxu0 0.0
    %2825 = vmatpush1.xpose.msra.mxu0 0.0
    %2826 = vmatprep.mubr.f32.mxu0 0.0
    %2827 = vmatmul.mubr.f32.gmra.mrb[0].mxu0 %v2754
    %v2828 = vpop.f32.mrb[0].mxu0
    %v2829 = vadd.f32 0.0, %v2828
    %v2830 = vpop.f32.mrb[0].mxu0
    %2831 = vmatprep.mubr.f32.mxu0 0.0
    %2832 = vmatmul.mubr.f32.gmra.mrb[0].mxu0 %v2757
    %v2833 = vpop.f32.mrb[0].mxu0
    %v2834 = vadd.f32 0.0, %v2833
    %v2835 = vpop.f32.mrb[0].mxu0
    %2836 = vdwg.mxu0
    %2837 = vmatprep.subr.mxu0 0.0
    %2838 = vmatpush1.xpose.msra.mxu0 %v2166
    %2839 = vmatprep.subr.mxu0 0.0
    %2840 = vmatpush1.xpose.msra.mxu0 %v2169
    %2841 = vmatprep.subr.mxu0 0.0
    %2842 = vmatpush1.xpose.msra.mxu0 0.0
    %2843 = vmatprep.subr.mxu0 0.0
    %2844 = vmatpush1.xpose.msra.mxu0 0.0
    %2845 = vmatprep.subr.mxu0 0.0
    %2846 = vmatpush1.xpose.msra.mxu0 0.0
    %2847 = vmatprep.subr.mxu0 0.0
    %2848 = vmatpush1.xpose.msra.mxu0 0.0
    %2849 = vmatprep.subr.mxu0 0.0
    %2850 = vmatpush1.xpose.msra.mxu0 0.0
    %2851 = vmatprep.subr.mxu0 0.0
    %2852 = vmatpush1.xpose.msra.mxu0 0.0
    %2853 = vmatprep.subr.mxu0 0.0
    %2854 = vmatpush1.xpose.msra.mxu0 0.0
    %2855 = vmatprep.subr.mxu0 0.0
    %2856 = vmatpush1.xpose.msra.mxu0 0.0
    %2857 = vmatprep.subr.mxu0 0.0
    %2858 = vmatpush1.xpose.msra.mxu0 0.0
    %2859 = vmatprep.subr.mxu0 0.0
    %2860 = vmatpush1.xpose.msra.mxu0 0.0
    %2861 = vmatprep.subr.mxu0 0.0
    %2862 = vmatpush1.xpose.msra.mxu0 0.0
    %2863 = vmatprep.subr.mxu0 0.0
    %2864 = vmatpush1.xpose.msra.mxu0 0.0
    %2865 = vmatprep.subr.mxu0 0.0
    %2866 = vmatpush1.xpose.msra.mxu0 0.0
    %2867 = vmatprep.subr.mxu0 0.0
    %2868 = vmatpush1.xpose.msra.mxu0 0.0
    %2869 = vmatprep.subr.mxu0 0.0
    %2870 = vmatpush1.xpose.msra.mxu0 0.0
    %2871 = vmatprep.subr.mxu0 0.0
    %2872 = vmatpush1.xpose.msra.mxu0 0.0
    %2873 = vmatprep.subr.mxu0 0.0
    %2874 = vmatpush1.xpose.msra.mxu0 0.0
    %2875 = vmatprep.subr.mxu0 0.0
    %2876 = vmatpush1.xpose.msra.mxu0 0.0
    %2877 = vmatprep.subr.mxu0 0.0
    %2878 = vmatpush1.xpose.msra.mxu0 0.0
    %2879 = vmatprep.subr.mxu0 0.0
    %2880 = vmatpush1.xpose.msra.mxu0 0.0
    %2881 = vmatprep.subr.mxu0 0.0
    %2882 = vmatpush1.xpose.msra.mxu0 0.0
    %2883 = vmatprep.subr.mxu0 0.0
    %2884 = vmatpush1.xpose.msra.mxu0 0.0
    %2885 = vmatprep.subr.mxu0 0.0
    %2886 = vmatpush1.xpose.msra.mxu0 0.0
    %2887 = vmatprep.subr.mxu0 0.0
    %2888 = vmatpush1.xpose.msra.mxu0 0.0
    %2889 = vmatprep.subr.mxu0 0.0
    %2890 = vmatpush1.xpose.msra.mxu0 0.0
    %2891 = vmatprep.subr.mxu0 0.0
    %2892 = vmatpush1.xpose.msra.mxu0 0.0
    %2893 = vmatprep.subr.mxu0 0.0
    %2894 = vmatpush1.xpose.msra.mxu0 0.0
    %2895 = vmatprep.subr.mxu0 0.0
    %2896 = vmatpush1.xpose.msra.mxu0 0.0
    %2897 = vmatprep.subr.mxu0 0.0
    %2898 = vmatpush1.xpose.msra.mxu0 0.0
    %2899 = vmatprep.subr.mxu0 0.0
    %2900 = vmatpush1.xpose.msra.mxu0 0.0
    %2901 = vmatprep.mubr.f32.mxu0 0.0
    %2902 = vmatmul.mubr.f32.gmra.mrb[0].mxu0 %v2172
    %v2903 = vpop.f32.mrb[0].mxu0
    %v2904 = vadd.f32 0.0, %v2903
    %v2905 = vpop.f32.mrb[0].mxu0
    %2906 = vdwg.mxu0
    %2907 = vmatprep.subr.mxu0 0.0
    %2908 = vmatpush1.xpose.msra.mxu0 %v2250
    %2909 = vmatprep.subr.mxu0 0.0
    %2910 = vmatpush1.xpose.msra.mxu0 %v2253
    %2911 = vmatprep.subr.mxu0 0.0
    %2912 = vmatpush1.xpose.msra.mxu0 0.0
    %2913 = vmatprep.subr.mxu0 0.0
    %2914 = vmatpush1.xpose.msra.mxu0 0.0
    %2915 = vmatprep.subr.mxu0 0.0
    %2916 = vmatpush1.xpose.msra.mxu0 0.0
    %2917 = vmatprep.subr.mxu0 0.0
    %2918 = vmatpush1.xpose.msra.mxu0 0.0
    %2919 = vmatprep.subr.mxu0 0.0
    %2920 = vmatpush1.xpose.msra.mxu0 0.0
    %2921 = vmatprep.subr.mxu0 0.0
    %2922 = vmatpush1.xpose.msra.mxu0 0.0
    %2923 = vmatprep.subr.mxu0 0.0
    %2924 = vmatpush1.xpose.msra.mxu0 0.0
    %2925 = vmatprep.subr.mxu0 0.0
    %2926 = vmatpush1.xpose.msra.mxu0 0.0
    %2927 = vmatprep.subr.mxu0 0.0
    %2928 = vmatpush1.xpose.msra.mxu0 0.0
    %2929 = vmatprep.subr.mxu0 0.0
    %2930 = vmatpush1.xpose.msra.mxu0 0.0
    %2931 = vmatprep.subr.mxu0 0.0
    %2932 = vmatpush1.xpose.msra.mxu0 0.0
    %2933 = vmatprep.subr.mxu0 0.0
    %2934 = vmatpush1.xpose.msra.mxu0 0.0
    %2935 = vmatprep.subr.mxu0 0.0
    %2936 = vmatpush1.xpose.msra.mxu0 0.0
    %2937 = vmatprep.subr.mxu0 0.0
    %2938 = vmatpush1.xpose.msra.mxu0 0.0
    %2939 = vmatprep.subr.mxu0 0.0
    %2940 = vmatpush1.xpose.msra.mxu0 0.0
    %2941 = vmatprep.subr.mxu0 0.0
    %2942 = vmatpush1.xpose.msra.mxu0 0.0
    %2943 = vmatprep.subr.mxu0 0.0
    %2944 = vmatpush1.xpose.msra.mxu0 0.0
    %2945 = vmatprep.subr.mxu0 0.0
    %2946 = vmatpush1.xpose.msra.mxu0 0.0
    %2947 = vmatprep.subr.mxu0 0.0
    %2948 = vmatpush1.xpose.msra.mxu0 0.0
    %2949 = vmatprep.subr.mxu0 0.0
    %2950 = vmatpush1.xpose.msra.mxu0 0.0
    %2951 = vmatprep.subr.mxu0 0.0
    %2952 = vmatpush1.xpose.msra.mxu0 0.0
    %2953 = vmatprep.subr.mxu0 0.0
    %2954 = vmatpush1.xpose.msra.mxu0 0.0
    %2955 = vmatprep.subr.mxu0 0.0
    %2956 = vmatpush1.xpose.msra.mxu0 0.0
    %2957 = vmatprep.subr.mxu0 0.0
    %2958 = vmatpush1.xpose.msra.mxu0 0.0
    %2959 = vmatprep.subr.mxu0 0.0
    %2960 = vmatpush1.xpose.msra.mxu0 0.0
    %2961 = vmatprep.subr.mxu0 0.0
    %2962 = vmatpush1.xpose.msra.mxu0 0.0
    %2963 = vmatprep.subr.mxu0 0.0
    %2964 = vmatpush1.xpose.msra.mxu0 0.0
    %2965 = vmatprep.subr.mxu0 0.0
    %2966 = vmatpush1.xpose.msra.mxu0 0.0
    %2967 = vmatprep.subr.mxu0 0.0
    %2968 = vmatpush1.xpose.msra.mxu0 0.0
    %2969 = vmatprep.subr.mxu0 0.0
    %2970 = vmatpush1.xpose.msra.mxu0 0.0
    %2971 = vmatprep.mubr.f32.mxu0 0.0
    %2972 = vmatmul.mubr.f32.gmra.mrb[0].mxu0 %v2256
    %v2973 = vpop.f32.mrb[0].mxu0
    %v2974 = vadd.f32 0.0, %v2973
    %v2975 = vpop.f32.mrb[0].mxu0
    %2976 = vdwg.mxu0
    %2977 = vmatprep.subr.mxu0 0.0
    %2978 = vmatpush1.xpose.msra.mxu0 %v2334
    %2979 = vmatprep.subr.mxu0 0.0
    %2980 = vmatpush1.xpose.msra.mxu0 %v2337
    %2981 = vmatprep.subr.mxu0 0.0
    %2982 = vmatpush1.xpose.msra.mxu0 0.0
    %2983 = vmatprep.subr.mxu0 0.0
    %2984 = vmatpush1.xpose.msra.mxu0 0.0
    %2985 = vmatprep.subr.mxu0 0.0
    %2986 = vmatpush1.xpose.msra.mxu0 0.0
    %2987 = vmatprep.subr.mxu0 0.0
    %2988 = vmatpush1.xpose.msra.mxu0 0.0
    %2989 = vmatprep.subr.mxu0 0.0
    %2990 = vmatpush1.xpose.msra.mxu0 0.0
    %2991 = vmatprep.subr.mxu0 0.0
    %2992 = vmatpush1.xpose.msra.mxu0 0.0
    %2993 = vmatprep.subr.mxu0 0.0
    %2994 = vmatpush1.xpose.msra.mxu0 0.0
    %2995 = vmatprep.subr.mxu0 0.0
    %2996 = vmatpush1.xpose.msra.mxu0 0.0
    %2997 = vmatprep.subr.mxu0 0.0
    %2998 = vmatpush1.xpose.msra.mxu0 0.0
    %2999 = vmatprep.subr.mxu0 0.0
    %3000 = vmatpush1.xpose.msra.mxu0 0.0
    %3001 = vmatprep.subr.mxu0 0.0
    %3002 = vmatpush1.xpose.msra.mxu0 0.0
    %3003 = vmatprep.subr.mxu0 0.0
    %3004 = vmatpush1.xpose.msra.mxu0 0.0
    %3005 = vmatprep.subr.mxu0 0.0
    %3006 = vmatpush1.xpose.msra.mxu0 0.0
    %3007 = vmatprep.subr.mxu0 0.0
    %3008 = vmatpush1.xpose.msra.mxu0 0.0
    %3009 = vmatprep.subr.mxu0 0.0
    %3010 = vmatpush1.xpose.msra.mxu0 0.0
    %3011 = vmatprep.subr.mxu0 0.0
    %3012 = vmatpush1.xpose.msra.mxu0 0.0
    %3013 = vmatprep.subr.mxu0 0.0
    %3014 = vmatpush1.xpose.msra.mxu0 0.0
    %3015 = vmatprep.subr.mxu0 0.0
    %3016 = vmatpush1.xpose.msra.mxu0 0.0
    %3017 = vmatprep.subr.mxu0 0.0
    %3018 = vmatpush1.xpose.msra.mxu0 0.0
    %3019 = vmatprep.subr.mxu0 0.0
    %3020 = vmatpush1.xpose.msra.mxu0 0.0
    %3021 = vmatprep.subr.mxu0 0.0
    %3022 = vmatpush1.xpose.msra.mxu0 0.0
    %3023 = vmatprep.subr.mxu0 0.0
    %3024 = vmatpush1.xpose.msra.mxu0 0.0
    %3025 = vmatprep.subr.mxu0 0.0
    %3026 = vmatpush1.xpose.msra.mxu0 0.0
    %3027 = vmatprep.subr.mxu0 0.0
    %3028 = vmatpush1.xpose.msra.mxu0 0.0
    %3029 = vmatprep.subr.mxu0 0.0
    %3030 = vmatpush1.xpose.msra.mxu0 0.0
    %3031 = vmatprep.subr.mxu0 0.0
    %3032 = vmatpush1.xpose.msra.mxu0 0.0
    %3033 = vmatprep.subr.mxu0 0.0
    %3034 = vmatpush1.xpose.msra.mxu0 0.0
    %3035 = vmatprep.subr.mxu0 0.0
    %3036 = vmatpush1.xpose.msra.mxu0 0.0
    %3037 = vmatprep.subr.mxu0 0.0
    %3038 = vmatpush1.xpose.msra.mxu0 0.0
    %3039 = vmatprep.subr.mxu0 0.0
    %3040 = vmatpush1.xpose.msra.mxu0 0.0
    %3041 = vmatprep.mubr.f32.mxu0 0.0
    %3042 = vmatmul.mubr.f32.gmra.mrb[0].mxu0 %v2340
    %v3043 = vpop.f32.mrb[0].mxu0
    %v3044 = vadd.f32 0.0, %v3043
    %v3045 = vpop.f32.mrb[0].mxu0
    %3046 = vdwg.mxu0
    %3047 = vmatprep.subr.mxu0 0.0
    %3048 = vmatpush1.xpose.msra.mxu0 %v2418
    %3049 = vmatprep.subr.mxu0 0.0
    %3050 = vmatpush1.xpose.msra.mxu0 %v2421
    %3051 = vmatprep.subr.mxu0 0.0
    %3052 = vmatpush1.xpose.msra.mxu0 0.0
    %3053 = vmatprep.subr.mxu0 0.0
    %3054 = vmatpush1.xpose.msra.mxu0 0.0
    %3055 = vmatprep.subr.mxu0 0.0
    %3056 = vmatpush1.xpose.msra.mxu0 0.0
    %3057 = vmatprep.subr.mxu0 0.0
    %3058 = vmatpush1.xpose.msra.mxu0 0.0
    %3059 = vmatprep.subr.mxu0 0.0
    %3060 = vmatpush1.xpose.msra.mxu0 0.0
    %3061 = vmatprep.subr.mxu0 0.0
    %3062 = vmatpush1.xpose.msra.mxu0 0.0
    %3063 = vmatprep.subr.mxu0 0.0
    %3064 = vmatpush1.xpose.msra.mxu0 0.0
    %3065 = vmatprep.subr.mxu0 0.0
    %3066 = vmatpush1.xpose.msra.mxu0 0.0
    %3067 = vmatprep.subr.mxu0 0.0
    %3068 = vmatpush1.xpose.msra.mxu0 0.0
    %3069 = vmatprep.subr.mxu0 0.0
    %3070 = vmatpush1.xpose.msra.mxu0 0.0
    %3071 = vmatprep.subr.mxu0 0.0
    %3072 = vmatpush1.xpose.msra.mxu0 0.0
    %3073 = vmatprep.subr.mxu0 0.0
    %3074 = vmatpush1.xpose.msra.mxu0 0.0
    %3075 = vmatprep.subr.mxu0 0.0
    %3076 = vmatpush1.xpose.msra.mxu0 0.0
    %3077 = vmatprep.subr.mxu0 0.0
    %3078 = vmatpush1.xpose.msra.mxu0 0.0
    %3079 = vmatprep.subr.mxu0 0.0
    %3080 = vmatpush1.xpose.msra.mxu0 0.0
    %3081 = vmatprep.subr.mxu0 0.0
    %3082 = vmatpush1.xpose.msra.mxu0 0.0
    %3083 = vmatprep.subr.mxu0 0.0
    %3084 = vmatpush1.xpose.msra.mxu0 0.0
    %3085 = vmatprep.subr.mxu0 0.0
    %3086 = vmatpush1.xpose.msra.mxu0 0.0
    %3087 = vmatprep.subr.mxu0 0.0
    %3088 = vmatpush1.xpose.msra.mxu0 0.0
    %3089 = vmatprep.subr.mxu0 0.0
    %3090 = vmatpush1.xpose.msra.mxu0 0.0
    %3091 = vmatprep.subr.mxu0 0.0
    %3092 = vmatpush1.xpose.msra.mxu0 0.0
    %3093 = vmatprep.subr.mxu0 0.0
    %3094 = vmatpush1.xpose.msra.mxu0 0.0
    %3095 = vmatprep.subr.mxu0 0.0
    %3096 = vmatpush1.xpose.msra.mxu0 0.0
    %3097 = vmatprep.subr.mxu0 0.0
    %3098 = vmatpush1.xpose.msra.mxu0 0.0
    %3099 = vmatprep.subr.mxu0 0.0
    %3100 = vmatpush1.xpose.msra.mxu0 0.0
    %3101 = vmatprep.subr.mxu0 0.0
    %3102 = vmatpush1.xpose.msra.mxu0 0.0
    %3103 = vmatprep.subr.mxu0 0.0
    %3104 = vmatpush1.xpose.msra.mxu0 0.0
    %3105 = vmatprep.subr.mxu0 0.0
    %3106 = vmatpush1.xpose.msra.mxu0 0.0
    %3107 = vmatprep.subr.mxu0 0.0
    %3108 = vmatpush1.xpose.msra.mxu0 0.0
    %3109 = vmatprep.subr.mxu0 0.0
    %3110 = vmatpush1.xpose.msra.mxu0 0.0
    %3111 = vmatprep.mubr.f32.mxu0 0.0
    %3112 = vmatmul.mubr.f32.gmra.mrb[0].mxu0 %v2424
    %v3113 = vpop.f32.mrb[0].mxu0
    %v3114 = vadd.f32 0.0, %v3113
    %v3115 = vpop.f32.mrb[0].mxu0
    %3116 = vdwg.mxu0
    %3117 = vmatprep.subr.mxu0 0.0
    %3118 = vmatpush1.xpose.msra.mxu0 %v2502
    %3119 = vmatprep.subr.mxu0 0.0
    %3120 = vmatpush1.xpose.msra.mxu0 %v2505
    %3121 = vmatprep.subr.mxu0 0.0
    %3122 = vmatpush1.xpose.msra.mxu0 0.0
    %3123 = vmatprep.subr.mxu0 0.0
    %3124 = vmatpush1.xpose.msra.mxu0 0.0
    %3125 = vmatprep.subr.mxu0 0.0
    %3126 = vmatpush1.xpose.msra.mxu0 0.0
    %3127 = vmatprep.subr.mxu0 0.0
    %3128 = vmatpush1.xpose.msra.mxu0 0.0
    %3129 = vmatprep.subr.mxu0 0.0
    %3130 = vmatpush1.xpose.msra.mxu0 0.0
    %3131 = vmatprep.subr.mxu0 0.0
    %3132 = vmatpush1.xpose.msra.mxu0 0.0
    %3133 = vmatprep.subr.mxu0 0.0
    %3134 = vmatpush1.xpose.msra.mxu0 0.0
    %3135 = vmatprep.subr.mxu0 0.0
    %3136 = vmatpush1.xpose.msra.mxu0 0.0
    %3137 = vmatprep.subr.mxu0 0.0
    %3138 = vmatpush1.xpose.msra.mxu0 0.0
    %3139 = vmatprep.subr.mxu0 0.0
    %3140 = vmatpush1.xpose.msra.mxu0 0.0
    %3141 = vmatprep.subr.mxu0 0.0
    %3142 = vmatpush1.xpose.msra.mxu0 0.0
    %3143 = vmatprep.subr.mxu0 0.0
    %3144 = vmatpush1.xpose.msra.mxu0 0.0
    %3145 = vmatprep.subr.mxu0 0.0
    %3146 = vmatpush1.xpose.msra.mxu0 0.0
    %3147 = vmatprep.subr.mxu0 0.0
    %3148 = vmatpush1.xpose.msra.mxu0 0.0
    %3149 = vmatprep.subr.mxu0 0.0
    %3150 = vmatpush1.xpose.msra.mxu0 0.0
    %3151 = vmatprep.subr.mxu0 0.0
    %3152 = vmatpush1.xpose.msra.mxu0 0.0
    %3153 = vmatprep.subr.mxu0 0.0
    %3154 = vmatpush1.xpose.msra.mxu0 0.0
    %3155 = vmatprep.subr.mxu0 0.0
    %3156 = vmatpush1.xpose.msra.mxu0 0.0
    %3157 = vmatprep.subr.mxu0 0.0
    %3158 = vmatpush1.xpose.msra.mxu0 0.0
    %3159 = vmatprep.subr.mxu0 0.0
    %3160 = vmatpush1.xpose.msra.mxu0 0.0
    %3161 = vmatprep.subr.mxu0 0.0
    %3162 = vmatpush1.xpose.msra.mxu0 0.0
    %3163 = vmatprep.subr.mxu0 0.0
    %3164 = vmatpush1.xpose.msra.mxu0 0.0
    %3165 = vmatprep.subr.mxu0 0.0
    %3166 = vmatpush1.xpose.msra.mxu0 0.0
    %3167 = vmatprep.subr.mxu0 0.0
    %3168 = vmatpush1.xpose.msra.mxu0 0.0
    %3169 = vmatprep.subr.mxu0 0.0
    %3170 = vmatpush1.xpose.msra.mxu0 0.0
    %3171 = vmatprep.subr.mxu0 0.0
    %3172 = vmatpush1.xpose.msra.mxu0 0.0
    %3173 = vmatprep.subr.mxu0 0.0
    %3174 = vmatpush1.xpose.msra.mxu0 0.0
    %3175 = vmatprep.subr.mxu0 0.0
    %3176 = vmatpush1.xpose.msra.mxu0 0.0
    %3177 = vmatprep.subr.mxu0 0.0
    %3178 = vmatpush1.xpose.msra.mxu0 0.0
    %3179 = vmatprep.subr.mxu0 0.0
    %3180 = vmatpush1.xpose.msra.mxu0 0.0
    %3181 = vmatprep.mubr.f32.mxu0 0.0
    %3182 = vmatmul.mubr.f32.gmra.mrb[0].mxu0 %v2508
    %v3183 = vpop.f32.mrb[0].mxu0
    %v3184 = vadd.f32 0.0, %v3183
    %v3185 = vpop.f32.mrb[0].mxu0
    %3186 = vdwg.mxu0
    %3187 = vmatprep.subr.mxu0 0.0
    %3188 = vmatpush1.xpose.msra.mxu0 %v2586
    %3189 = vmatprep.subr.mxu0 0.0
    %3190 = vmatpush1.xpose.msra.mxu0 %v2589
    %3191 = vmatprep.subr.mxu0 0.0
    %3192 = vmatpush1.xpose.msra.mxu0 0.0
    %3193 = vmatprep.subr.mxu0 0.0
    %3194 = vmatpush1.xpose.msra.mxu0 0.0
    %3195 = vmatprep.subr.mxu0 0.0
    %3196 = vmatpush1.xpose.msra.mxu0 0.0
    %3197 = vmatprep.subr.mxu0 0.0
    %3198 = vmatpush1.xpose.msra.mxu0 0.0
    %3199 = vmatprep.subr.mxu0 0.0
    %3200 = vmatpush1.xpose.msra.mxu0 0.0
    %3201 = vmatprep.subr.mxu0 0.0
    %3202 = vmatpush1.xpose.msra.mxu0 0.0
    %3203 = vmatprep.subr.mxu0 0.0
    %3204 = vmatpush1.xpose.msra.mxu0 0.0
    %3205 = vmatprep.subr.mxu0 0.0
    %3206 = vmatpush1.xpose.msra.mxu0 0.0
    %3207 = vmatprep.subr.mxu0 0.0
    %3208 = vmatpush1.xpose.msra.mxu0 0.0
    %3209 = vmatprep.subr.mxu0 0.0
    %3210 = vmatpush1.xpose.msra.mxu0 0.0
    %3211 = vmatprep.subr.mxu0 0.0
    %3212 = vmatpush1.xpose.msra.mxu0 0.0
    %3213 = vmatprep.subr.mxu0 0.0
    %3214 = vmatpush1.xpose.msra.mxu0 0.0
    %3215 = vmatprep.subr.mxu0 0.0
    %3216 = vmatpush1.xpose.msra.mxu0 0.0
    %3217 = vmatprep.subr.mxu0 0.0
    %3218 = vmatpush1.xpose.msra.mxu0 0.0
    %3219 = vmatprep.subr.mxu0 0.0
    %3220 = vmatpush1.xpose.msra.mxu0 0.0
    %3221 = vmatprep.subr.mxu0 0.0
    %3222 = vmatpush1.xpose.msra.mxu0 0.0
    %3223 = vmatprep.subr.mxu0 0.0
    %3224 = vmatpush1.xpose.msra.mxu0 0.0
    %3225 = vmatprep.subr.mxu0 0.0
    %3226 = vmatpush1.xpose.msra.mxu0 0.0
    %3227 = vmatprep.subr.mxu0 0.0
    %3228 = vmatpush1.xpose.msra.mxu0 0.0
    %3229 = vmatprep.subr.mxu0 0.0
    %3230 = vmatpush1.xpose.msra.mxu0 0.0
    %3231 = vmatprep.subr.mxu0 0.0
    %3232 = vmatpush1.xpose.msra.mxu0 0.0
    %3233 = vmatprep.subr.mxu0 0.0
    %3234 = vmatpush1.xpose.msra.mxu0 0.0
    %3235 = vmatprep.subr.mxu0 0.0
    %3236 = vmatpush1.xpose.msra.mxu0 0.0
    %3237 = vmatprep.subr.mxu0 0.0
    %3238 = vmatpush1.xpose.msra.mxu0 0.0
    %3239 = vmatprep.subr.mxu0 0.0
    %3240 = vmatpush1.xpose.msra.mxu0 0.0
    %3241 = vmatprep.subr.mxu0 0.0
    %3242 = vmatpush1.xpose.msra.mxu0 0.0
    %3243 = vmatprep.subr.mxu0 0.0
    %3244 = vmatpush1.xpose.msra.mxu0 0.0
    %3245 = vmatprep.subr.mxu0 0.0
    %3246 = vmatpush1.xpose.msra.mxu0 0.0
    %3247 = vmatprep.subr.mxu0 0.0
    %3248 = vmatpush1.xpose.msra.mxu0 0.0
    %3249 = vmatprep.subr.mxu0 0.0
    %3250 = vmatpush1.xpose.msra.mxu0 0.0
    %3251 = vmatprep.mubr.f32.mxu0 0.0
    %3252 = vmatmul.mubr.f32.gmra.mrb[0].mxu0 %v2592
    %v3253 = vpop.f32.mrb[0].mxu0
    %v3254 = vadd.f32 0.0, %v3253
    %v3255 = vpop.f32.mrb[0].mxu0
    %3256 = vdwg.mxu0
    %3257 = vmatprep.subr.mxu0 0.0
    %3258 = vmatpush1.xpose.msra.mxu0 %v2670
    %3259 = vmatprep.subr.mxu0 0.0
    %3260 = vmatpush1.xpose.msra.mxu0 %v2673
    %3261 = vmatprep.subr.mxu0 0.0
    %3262 = vmatpush1.xpose.msra.mxu0 0.0
    %3263 = vmatprep.subr.mxu0 0.0
    %3264 = vmatpush1.xpose.msra.mxu0 0.0
    %3265 = vmatprep.subr.mxu0 0.0
    %3266 = vmatpush1.xpose.msra.mxu0 0.0
    %3267 = vmatprep.subr.mxu0 0.0
    %3268 = vmatpush1.xpose.msra.mxu0 0.0
    %3269 = vmatprep.subr.mxu0 0.0
    %3270 = vmatpush1.xpose.msra.mxu0 0.0
    %3271 = vmatprep.subr.mxu0 0.0
    %3272 = vmatpush1.xpose.msra.mxu0 0.0
    %3273 = vmatprep.subr.mxu0 0.0
    %3274 = vmatpush1.xpose.msra.mxu0 0.0
    %3275 = vmatprep.subr.mxu0 0.0
    %3276 = vmatpush1.xpose.msra.mxu0 0.0
    %3277 = vmatprep.subr.mxu0 0.0
    %3278 = vmatpush1.xpose.msra.mxu0 0.0
    %3279 = vmatprep.subr.mxu0 0.0
    %3280 = vmatpush1.xpose.msra.mxu0 0.0
    %3281 = vmatprep.subr.mxu0 0.0
    %3282 = vmatpush1.xpose.msra.mxu0 0.0
    %3283 = vmatprep.subr.mxu0 0.0
    %3284 = vmatpush1.xpose.msra.mxu0 0.0
    %3285 = vmatprep.subr.mxu0 0.0
    %3286 = vmatpush1.xpose.msra.mxu0 0.0
    %3287 = vmatprep.subr.mxu0 0.0
    %3288 = vmatpush1.xpose.msra.mxu0 0.0
    %3289 = vmatprep.subr.mxu0 0.0
    %3290 = vmatpush1.xpose.msra.mxu0 0.0
    %3291 = vmatprep.subr.mxu0 0.0
    %3292 = vmatpush1.xpose.msra.mxu0 0.0
    %3293 = vmatprep.subr.mxu0 0.0
    %3294 = vmatpush1.xpose.msra.mxu0 0.0
    %3295 = vmatprep.subr.mxu0 0.0
    %3296 = vmatpush1.xpose.msra.mxu0 0.0
    %3297 = vmatprep.subr.mxu0 0.0
    %3298 = vmatpush1.xpose.msra.mxu0 0.0
    %3299 = vmatprep.subr.mxu0 0.0
    %3300 = vmatpush1.xpose.msra.mxu0 0.0
    %3301 = vmatprep.subr.mxu0 0.0
    %3302 = vmatpush1.xpose.msra.mxu0 0.0
    %3303 = vmatprep.subr.mxu0 0.0
    %3304 = vmatpush1.xpose.msra.mxu0 0.0
    %3305 = vmatprep.subr.mxu0 0.0
    %3306 = vmatpush1.xpose.msra.mxu0 0.0
    %3307 = vmatprep.subr.mxu0 0.0
    %3308 = vmatpush1.xpose.msra.mxu0 0.0
    %3309 = vmatprep.subr.mxu0 0.0
    %3310 = vmatpush1.xpose.msra.mxu0 0.0
    %3311 = vmatprep.subr.mxu0 0.0
    %3312 = vmatpush1.xpose.msra.mxu0 0.0
    %3313 = vmatprep.subr.mxu0 0.0
    %3314 = vmatpush1.xpose.msra.mxu0 0.0
    %3315 = vmatprep.subr.mxu0 0.0
    %3316 = vmatpush1.xpose.msra.mxu0 0.0
    %3317 = vmatprep.subr.mxu0 0.0
    %3318 = vmatpush1.xpose.msra.mxu0 0.0
    %3319 = vmatprep.subr.mxu0 0.0
    %3320 = vmatpush1.xpose.msra.mxu0 0.0
    %3321 = vmatprep.mubr.f32.mxu0 0.0
    %3322 = vmatmul.mubr.f32.gmra.mrb[0].mxu0 %v2676
    %v3323 = vpop.f32.mrb[0].mxu0
    %v3324 = vadd.f32 0.0, %v3323
    %v3325 = vpop.f32.mrb[0].mxu0
    %3326 = vdwg.mxu0
    %3327 = vmatprep.subr.mxu0 0.0
    %3328 = vmatpush1.xpose.msra.mxu0 %v2754
    %3329 = vmatprep.subr.mxu0 0.0
    %3330 = vmatpush1.xpose.msra.mxu0 %v2757
    %3331 = vmatprep.subr.mxu0 0.0
    %3332 = vmatpush1.xpose.msra.mxu0 0.0
    %3333 = vmatprep.subr.mxu0 0.0
    %3334 = vmatpush1.xpose.msra.mxu0 0.0
    %3335 = vmatprep.subr.mxu0 0.0
    %3336 = vmatpush1.xpose.msra.mxu0 0.0
    %3337 = vmatprep.subr.mxu0 0.0
    %3338 = vmatpush1.xpose.msra.mxu0 0.0
    %3339 = vmatprep.subr.mxu0 0.0
    %3340 = vmatpush1.xpose.msra.mxu0 0.0
    %3341 = vmatprep.subr.mxu0 0.0
    %3342 = vmatpush1.xpose.msra.mxu0 0.0
    %3343 = vmatprep.subr.mxu0 0.0
    %3344 = vmatpush1.xpose.msra.mxu0 0.0
    %3345 = vmatprep.subr.mxu0 0.0
    %3346 = vmatpush1.xpose.msra.mxu0 0.0
    %3347 = vmatprep.subr.mxu0 0.0
    %3348 = vmatpush1.xpose.msra.mxu0 0.0
    %3349 = vmatprep.subr.mxu0 0.0
    %3350 = vmatpush1.xpose.msra.mxu0 0.0
    %3351 = vmatprep.subr.mxu0 0.0
    %3352 = vmatpush1.xpose.msra.mxu0 0.0
    %3353 = vmatprep.subr.mxu0 0.0
    %3354 = vmatpush1.xpose.msra.mxu0 0.0
    %3355 = vmatprep.subr.mxu0 0.0
    %3356 = vmatpush1.xpose.msra.mxu0 0.0
    %3357 = vmatprep.subr.mxu0 0.0
    %3358 = vmatpush1.xpose.msra.mxu0 0.0
    %3359 = vmatprep.subr.mxu0 0.0
    %3360 = vmatpush1.xpose.msra.mxu0 0.0
    %3361 = vmatprep.subr.mxu0 0.0
    %3362 = vmatpush1.xpose.msra.mxu0 0.0
    %3363 = vmatprep.subr.mxu0 0.0
    %3364 = vmatpush1.xpose.msra.mxu0 0.0
    %3365 = vmatprep.subr.mxu0 0.0
    %3366 = vmatpush1.xpose.msra.mxu0 0.0
    %3367 = vmatprep.subr.mxu0 0.0
    %3368 = vmatpush1.xpose.msra.mxu0 0.0
    %3369 = vmatprep.subr.mxu0 0.0
    %3370 = vmatpush1.xpose.msra.mxu0 0.0
    %3371 = vmatprep.subr.mxu0 0.0
    %3372 = vmatpush1.xpose.msra.mxu0 0.0
    %3373 = vmatprep.subr.mxu0 0.0
    %3374 = vmatpush1.xpose.msra.mxu0 0.0
    %3375 = vmatprep.subr.mxu0 0.0
    %3376 = vmatpush1.xpose.msra.mxu0 0.0
    %3377 = vmatprep.subr.mxu0 0.0
    %3378 = vmatpush1.xpose.msra.mxu0 0.0
    %3379 = vmatprep.subr.mxu0 0.0
    %3380 = vmatpush1.xpose.msra.mxu0 0.0
    %3381 = vmatprep.subr.mxu0 0.0
    %3382 = vmatpush1.xpose.msra.mxu0 0.0
    %3383 = vmatprep.subr.mxu0 0.0
    %3384 = vmatpush1.xpose.msra.mxu0 0.0
    %3385 = vmatprep.subr.mxu0 0.0
    %3386 = vmatpush1.xpose.msra.mxu0 0.0
    %3387 = vmatprep.subr.mxu0 0.0
    %3388 = vmatpush1.xpose.msra.mxu0 0.0
    %3389 = vmatprep.subr.mxu0 0.0
    %3390 = vmatpush1.xpose.msra.mxu0 0.0
    %3391 = vmatprep.mubr.f32.mxu0 0.0
    %3392 = vmatmul.mubr.f32.gmra.mrb[0].mxu0 %v2760
    %v3393 = vpop.f32.mrb[0].mxu0
    %v3394 = vadd.f32 0.0, %v3393
    %v3395 = vpop.f32.mrb[0].mxu0
    %3396 = vdwg.mxu0
    %3398 = vset.pattern.permute.xlu0 0
    %3399 = vperm.xlu0 %3398, %v2241
    %v3400 = vpop.permute.xlu0 %3399
    %3403 = vset.pattern.permute.xlu0 0
    %3404 = vperm.xlu0 %3403, %v2246
    %v3405 = vpop.permute.xlu0 %3404
    %3408 = vset.pattern.permute.xlu0 0
    %3409 = vperm.xlu0 %3408, %v2325
    %v3410 = vpop.permute.xlu0 %3409
    %3413 = vset.pattern.permute.xlu0 0
    %3414 = vperm.xlu0 %3413, %v2330
    %v3415 = vpop.permute.xlu0 %3414
    %3418 = vset.pattern.permute.xlu0 0
    %3419 = vperm.xlu0 %3418, %v2409
    %v3420 = vpop.permute.xlu0 %3419
    %3423 = vset.pattern.permute.xlu0 0
    %3424 = vperm.xlu0 %3423, %v2414
    %v3425 = vpop.permute.xlu0 %3424
    %3428 = vset.pattern.permute.xlu0 0
    %3429 = vperm.xlu0 %3428, %v2493
    %v3430 = vpop.permute.xlu0 %3429
    %3433 = vset.pattern.permute.xlu0 0
    %3434 = vperm.xlu0 %3433, %v2498
    %v3435 = vpop.permute.xlu0 %3434
    %3438 = vset.pattern.permute.xlu0 0
    %3439 = vperm.xlu0 %3438, %v2577
    %v3440 = vpop.permute.xlu0 %3439
    %3443 = vset.pattern.permute.xlu0 0
    %3444 = vperm.xlu0 %3443, %v2582
    %v3445 = vpop.permute.xlu0 %3444
    %3448 = vset.pattern.permute.xlu0 0
    %3449 = vperm.xlu0 %3448, %v2661
    %v3450 = vpop.permute.xlu0 %3449
    %3453 = vset.pattern.permute.xlu0 0
    %3454 = vperm.xlu0 %3453, %v2666
    %v3455 = vpop.permute.xlu0 %3454
    %3458 = vset.pattern.permute.xlu0 0
    %3459 = vperm.xlu0 %3458, %v2745
    %v3460 = vpop.permute.xlu0 %3459
    %3463 = vset.pattern.permute.xlu0 0
    %3464 = vperm.xlu0 %3463, %v2750
    %v3465 = vpop.permute.xlu0 %3464
    %3468 = vset.pattern.permute.xlu0 0
    %3469 = vperm.xlu0 %3468, %v2829
    %v3470 = vpop.permute.xlu0 %3469
    %3473 = vset.pattern.permute.xlu0 0
    %3474 = vperm.xlu0 %3473, %v2834
    %v3475 = vpop.permute.xlu0 %3474
    %v3477 = vlaneseq
    %v3478 = vshrl.u32 %v3477, 7
    %v3479 = vsub.s32 1, %v3478
    %v3480 = vrot.slane %v2904, %v3479
    %v3481 = vlaneseq
    %v3482 = vshrl.u32 %v3481, 7
    %v3483 = vsub.s32 1, %v3482
    %v3484 = vrot.slane %v2974, %v3483
    %v3485 = vlaneseq
    %v3486 = vshrl.u32 %v3485, 7
    %v3487 = vsub.s32 1, %v3486
    %v3488 = vrot.slane %v3044, %v3487
    %v3489 = vlaneseq
    %v3490 = vshrl.u32 %v3489, 7
    %v3491 = vsub.s32 1, %v3490
    %v3492 = vrot.slane %v3114, %v3491
    %v3493 = vlaneseq
    %v3494 = vshrl.u32 %v3493, 7
    %v3495 = vsub.s32 1, %v3494
    %v3496 = vrot.slane %v3184, %v3495
    %v3497 = vlaneseq
    %v3498 = vshrl.u32 %v3497, 7
    %v3499 = vsub.s32 1, %v3498
    %v3500 = vrot.slane %v3254, %v3499
    %v3501 = vlaneseq
    %v3502 = vshrl.u32 %v3501, 7
    %v3503 = vsub.s32 1, %v3502
    %v3504 = vrot.slane %v3324, %v3503
    %v3505 = vlaneseq
    %v3506 = vshrl.u32 %v3505, 7
    %v3507 = vsub.s32 1, %v3506
    %v3508 = vrot.slane %v3394, %v3507
    %v3509 = vadd.f32 %v3400, %v3480
    %v3510 = vadd.f32 %v3405, %v3480
    %v3511 = vadd.f32 %v3410, %v3484
    %v3512 = vadd.f32 %v3415, %v3484
    %v3513 = vadd.f32 %v3420, %v3488
    %v3514 = vadd.f32 %v3425, %v3488
    %v3515 = vadd.f32 %v3430, %v3492
    %v3516 = vadd.f32 %v3435, %v3492
    %v3517 = vadd.f32 %v3440, %v3496
    %v3518 = vadd.f32 %v3445, %v3496
    %v3519 = vadd.f32 %v3450, %v3500
    %v3520 = vadd.f32 %v3455, %v3500
    %v3521 = vadd.f32 %v3460, %v3504
    %v3522 = vadd.f32 %v3465, %v3504
    %v3523 = vadd.f32 %v3470, %v3508
    %v3524 = vadd.f32 %v3475, %v3508
    %vm3525 = vcmp.gt.f32.partialorder %v3509, 0.0
    %vm3526 = vcmp.gt.f32.partialorder %v3510, 0.0
    %vm3527 = vcmp.gt.f32.partialorder %v3511, 0.0
    %vm3528 = vcmp.gt.f32.partialorder %v3512, 0.0
    %vm3529 = vcmp.gt.f32.partialorder %v3513, 0.0
    %vm3530 = vcmp.gt.f32.partialorder %v3514, 0.0
    %vm3531 = vcmp.gt.f32.partialorder %v3515, 0.0
    %vm3532 = vcmp.gt.f32.partialorder %v3516, 0.0
    %vm3533 = vcmp.gt.f32.partialorder %v3517, 0.0
    %vm3534 = vcmp.gt.f32.partialorder %v3518, 0.0
    %vm3535 = vcmp.gt.f32.partialorder %v3519, 0.0
    %vm3536 = vcmp.gt.f32.partialorder %v3520, 0.0
    %vm3537 = vcmp.gt.f32.partialorder %v3521, 0.0
    %vm3538 = vcmp.gt.f32.partialorder %v3522, 0.0
    %vm3539 = vcmp.gt.f32.partialorder %v3523, 0.0
    %vm3540 = vcmp.gt.f32.partialorder %v3524, 0.0
    %v3541 = vmul.f32 %v3509, 0.2
    %v3542 = vmul.f32 %v3510, 0.2
    %v3543 = vmul.f32 %v3511, 0.2
    %v3544 = vmul.f32 %v3512, 0.2
    %v3545 = vmul.f32 %v3513, 0.2
    %v3546 = vmul.f32 %v3514, 0.2
    %v3547 = vmul.f32 %v3515, 0.2
    %v3548 = vmul.f32 %v3516, 0.2
    %v3549 = vmul.f32 %v3517, 0.2
    %v3550 = vmul.f32 %v3518, 0.2
    %v3551 = vmul.f32 %v3519, 0.2
    %v3552 = vmul.f32 %v3520, 0.2
    %v3553 = vmul.f32 %v3521, 0.2
    %v3554 = vmul.f32 %v3522, 0.2
    %v3555 = vmul.f32 %v3523, 0.2
    %v3556 = vmul.f32 %v3524, 0.2
    %v3557 = vsel %vm3525, %v3509, %v3541
    %v3558 = vsel %vm3526, %v3510, %v3542
    %v3559 = vsel %vm3527, %v3511, %v3543
    %v3560 = vsel %vm3528, %v3512, %v3544
    %v3561 = vsel %vm3529, %v3513, %v3545
    %v3562 = vsel %vm3530, %v3514, %v3546
    %v3563 = vsel %vm3531, %v3515, %v3547
    %v3564 = vsel %vm3532, %v3516, %v3548
    %v3565 = vsel %vm3533, %v3517, %v3549
    %v3566 = vsel %vm3534, %v3518, %v3550
    %v3567 = vsel %vm3535, %v3519, %v3551
    %v3568 = vsel %vm3536, %v3520, %v3552
    %v3569 = vsel %vm3537, %v3521, %v3553
    %v3570 = vsel %vm3538, %v3522, %v3554
    %v3571 = vsel %vm3539, %v3523, %v3555
    %v3572 = vsel %vm3540, %v3524, %v3556
    %v3573 = vadd.f32 %v3557, %v41
    %v3574 = vadd.f32 %v3558, %v42
    %v3575 = vadd.f32 %v3559, %v41
    %v3576 = vadd.f32 %v3560, %v42
    %v3577 = vadd.f32 %v3561, %v41
    %v3578 = vadd.f32 %v3562, %v42
    %v3579 = vadd.f32 %v3563, %v41
    %v3580 = vadd.f32 %v3564, %v42
    %v3581 = vadd.f32 %v3565, %v41
    %v3582 = vadd.f32 %v3566, %v42
    %v3583 = vadd.f32 %v3567, %v41
    %v3584 = vadd.f32 %v3568, %v42
    %v3585 = vadd.f32 %v3569, %v41
    %v3586 = vadd.f32 %v3570, %v42
    %v3587 = vadd.f32 %v3571, %v41
    %v3588 = vadd.f32 %v3572, %v42
    %v3589 = vsel %vm1072, %v3573, -inf
    %3590 = vmax.xlane.f32.xlu0 %v3589
    %v3591 = vpop.xlane.xlu0 %3590
    %v3592 = vsel %vm1072, %v3574, -inf
    %3593 = vmax.xlane.f32.xlu0 %v3592
    %v3594 = vpop.xlane.xlu0 %3593
    %v3595 = vsel %vm1072, %v3575, -inf
    %3596 = vmax.xlane.f32.xlu0 %v3595
    %v3597 = vpop.xlane.xlu0 %3596
    %v3598 = vsel %vm1072, %v3576, -inf
    %3599 = vmax.xlane.f32.xlu0 %v3598
    %v3600 = vpop.xlane.xlu0 %3599
    %v3601 = vsel %vm1072, %v3577, -inf
    %3602 = vmax.xlane.f32.xlu0 %v3601
    %v3603 = vpop.xlane.xlu0 %3602
    %v3604 = vsel %vm1072, %v3578, -inf
    %3605 = vmax.xlane.f32.xlu0 %v3604
    %v3606 = vpop.xlane.xlu0 %3605
    %v3607 = vsel %vm1072, %v3579, -inf
    %3608 = vmax.xlane.f32.xlu0 %v3607
    %v3609 = vpop.xlane.xlu0 %3608
    %v3610 = vsel %vm1072, %v3580, -inf
    %3611 = vmax.xlane.f32.xlu0 %v3610
    %v3612 = vpop.xlane.xlu0 %3611
    %v3613 = vsel %vm1072, %v3581, -inf
    %3614 = vmax.xlane.f32.xlu0 %v3613
    %v3615 = vpop.xlane.xlu0 %3614
    %v3616 = vsel %vm1072, %v3582, -inf
    %3617 = vmax.xlane.f32.xlu0 %v3616
    %v3618 = vpop.xlane.xlu0 %3617
    %v3619 = vsel %vm1072, %v3583, -inf
    %3620 = vmax.xlane.f32.xlu0 %v3619
    %v3621 = vpop.xlane.xlu0 %3620
    %v3622 = vsel %vm1072, %v3584, -inf
    %3623 = vmax.xlane.f32.xlu0 %v3622
    %v3624 = vpop.xlane.xlu0 %3623
    %v3625 = vsel %vm1072, %v3585, -inf
    %3626 = vmax.xlane.f32.xlu0 %v3625
    %v3627 = vpop.xlane.xlu0 %3626
    %v3628 = vsel %vm1072, %v3586, -inf
    %3629 = vmax.xlane.f32.xlu0 %v3628
    %v3630 = vpop.xlane.xlu0 %3629
    %v3631 = vsel %vm1072, %v3587, -inf
    %3632 = vmax.xlane.f32.xlu0 %v3631
    %v3633 = vpop.xlane.xlu0 %3632
    %v3634 = vsel %vm1072, %v3588, -inf
    %3635 = vmax.xlane.f32.xlu0 %v3634
    %v3636 = vpop.xlane.xlu0 %3635
    %v3637 = vsub.f32 %v3573, %v3591
    %v3638 = vsub.f32 %v3574, %v3594
    %v3639 = vsub.f32 %v3575, %v3597
    %v3640 = vsub.f32 %v3576, %v3600
    %v3641 = vsub.f32 %v3577, %v3603
    %v3642 = vsub.f32 %v3578, %v3606
    %v3643 = vsub.f32 %v3579, %v3609
    %v3644 = vsub.f32 %v3580, %v3612
    %v3645 = vsub.f32 %v3581, %v3615
    %v3646 = vsub.f32 %v3582, %v3618
    %v3647 = vsub.f32 %v3583, %v3621
    %v3648 = vsub.f32 %v3584, %v3624
    %v3649 = vsub.f32 %v3585, %v3627
    %v3650 = vsub.f32 %v3586, %v3630
    %v3651 = vsub.f32 %v3587, %v3633
    %v3652 = vsub.f32 %v3588, %v3636
    %v3653 = vmul.f32 %v3637, 1.442695
    %v3654 = vpow.pop %v3653
    %v3655 = vmul.f32 %v3638, 1.442695
    %v3656 = vpow.pop %v3655
    %v3657 = vmul.f32 %v3639, 1.442695
    %v3658 = vpow.pop %v3657
    %v3659 = vmul.f32 %v3640, 1.442695
    %v3660 = vpow.pop %v3659
    %v3661 = vmul.f32 %v3641, 1.442695
    %v3662 = vpow.pop %v3661
    %v3663 = vmul.f32 %v3642, 1.442695
    %v3664 = vpow.pop %v3663
    %v3665 = vmul.f32 %v3643, 1.442695
    %v3666 = vpow.pop %v3665
    %v3667 = vmul.f32 %v3644, 1.442695
    %v3668 = vpow.pop %v3667
    %v3669 = vmul.f32 %v3645, 1.442695
    %v3670 = vpow.pop %v3669
    %v3671 = vmul.f32 %v3646, 1.442695
    %v3672 = vpow.pop %v3671
    %v3673 = vmul.f32 %v3647, 1.442695
    %v3674 = vpow.pop %v3673
    %v3675 = vmul.f32 %v3648, 1.442695
    %v3676 = vpow.pop %v3675
    %v3677 = vmul.f32 %v3649, 1.442695
    %v3678 = vpow.pop %v3677
    %v3679 = vmul.f32 %v3650, 1.442695
    %v3680 = vpow.pop %v3679
    %v3681 = vmul.f32 %v3651, 1.442695
    %v3682 = vpow.pop %v3681
    %v3683 = vmul.f32 %v3652, 1.442695
    %v3684 = vpow.pop %v3683
    %v3685 = vsel %vm1072, %v3654, 0.0
    %3686 = vadd.xlane.f32.xlu0 %v3685
    %v3687 = vpop.xlane.xlu0 %3686
    %v3688 = vsel %vm1072, %v3656, 0.0
    %3689 = vadd.xlane.f32.xlu0 %v3688
    %v3690 = vpop.xlane.xlu0 %3689
    %v3691 = vsel %vm1072, %v3658, 0.0
    %3692 = vadd.xlane.f32.xlu0 %v3691
    %v3693 = vpop.xlane.xlu0 %3692
    %v3694 = vsel %vm1072, %v3660, 0.0
    %3695 = vadd.xlane.f32.xlu0 %v3694
    %v3696 = vpop.xlane.xlu0 %3695
    %v3697 = vsel %vm1072, %v3662, 0.0
    %3698 = vadd.xlane.f32.xlu0 %v3697
    %v3699 = vpop.xlane.xlu0 %3698
    %v3700 = vsel %vm1072, %v3664, 0.0
    %3701 = vadd.xlane.f32.xlu0 %v3700
    %v3702 = vpop.xlane.xlu0 %3701
    %v3703 = vsel %vm1072, %v3666, 0.0
    %3704 = vadd.xlane.f32.xlu0 %v3703
    %v3705 = vpop.xlane.xlu0 %3704
    %v3706 = vsel %vm1072, %v3668, 0.0
    %3707 = vadd.xlane.f32.xlu0 %v3706
    %v3708 = vpop.xlane.xlu0 %3707
    %v3709 = vsel %vm1072, %v3670, 0.0
    %3710 = vadd.xlane.f32.xlu0 %v3709
    %v3711 = vpop.xlane.xlu0 %3710
    %v3712 = vsel %vm1072, %v3672, 0.0
    %3713 = vadd.xlane.f32.xlu0 %v3712
    %v3714 = vpop.xlane.xlu0 %3713
    %v3715 = vsel %vm1072, %v3674, 0.0
    %3716 = vadd.xlane.f32.xlu0 %v3715
    %v3717 = vpop.xlane.xlu0 %3716
    %v3718 = vsel %vm1072, %v3676, 0.0
    %3719 = vadd.xlane.f32.xlu0 %v3718
    %v3720 = vpop.xlane.xlu0 %3719
    %v3721 = vsel %vm1072, %v3678, 0.0
    %3722 = vadd.xlane.f32.xlu0 %v3721
    %v3723 = vpop.xlane.xlu0 %3722
    %v3724 = vsel %vm1072, %v3680, 0.0
    %3725 = vadd.xlane.f32.xlu0 %v3724
    %v3726 = vpop.xlane.xlu0 %3725
    %v3727 = vsel %vm1072, %v3682, 0.0
    %3728 = vadd.xlane.f32.xlu0 %v3727
    %v3729 = vpop.xlane.xlu0 %3728
    %v3730 = vsel %vm1072, %v3684, 0.0
    %3731 = vadd.xlane.f32.xlu0 %v3730
    %v3732 = vpop.xlane.xlu0 %3731
    %v3733 = vrcp.pop %v3687
    %v3734 = vmul.f32 %v3654, %v3733
    %v3735 = vrcp.pop %v3690
    %v3736 = vmul.f32 %v3656, %v3735
    %v3737 = vrcp.pop %v3693
    %v3738 = vmul.f32 %v3658, %v3737
    %v3739 = vrcp.pop %v3696
    %v3740 = vmul.f32 %v3660, %v3739
    %v3741 = vrcp.pop %v3699
    %v3742 = vmul.f32 %v3662, %v3741
    %v3743 = vrcp.pop %v3702
    %v3744 = vmul.f32 %v3664, %v3743
    %v3745 = vrcp.pop %v3705
    %v3746 = vmul.f32 %v3666, %v3745
    %v3747 = vrcp.pop %v3708
    %v3748 = vmul.f32 %v3668, %v3747
    %v3749 = vrcp.pop %v3711
    %v3750 = vmul.f32 %v3670, %v3749
    %v3751 = vrcp.pop %v3714
    %v3752 = vmul.f32 %v3672, %v3751
    %v3753 = vrcp.pop %v3717
    %v3754 = vmul.f32 %v3674, %v3753
    %v3755 = vrcp.pop %v3720
    %v3756 = vmul.f32 %v3676, %v3755
    %v3757 = vrcp.pop %v3723
    %v3758 = vmul.f32 %v3678, %v3757
    %v3759 = vrcp.pop %v3726
    %v3760 = vmul.f32 %v3680, %v3759
    %v3761 = vrcp.pop %v3729
    %v3762 = vmul.f32 %v3682, %v3761
    %v3763 = vrcp.pop %v3732
    %v3764 = vmul.f32 %v3684, %v3763
    %v3766 = vsel %vm1072, %v3734, 0
    %v3769 = vsel %vm1072, %v3736, 0
    %3771 = vmatprep.subr.mxu0 0.0
    %3772 = vmatpush1.msra.mxu0 %v1632
    %3773 = vmatprep.subr.mxu0 0.0
    %3774 = vmatpush1.msra.mxu0 %v1637
    %3775 = vmatprep.subr.mxu0 0.0
    %3776 = vmatpush1.msra.mxu0 0.0
    %3777 = vmatprep.subr.mxu0 0.0
    %3778 = vmatpush1.msra.mxu0 0.0
    %3779 = vmatprep.subr.mxu0 0.0
    %3780 = vmatpush1.msra.mxu0 0.0
    %3781 = vmatprep.subr.mxu0 0.0
    %3782 = vmatpush1.msra.mxu0 0.0
    %3783 = vmatprep.subr.mxu0 0.0
    %3784 = vmatpush1.msra.mxu0 0.0
    %3785 = vmatprep.subr.mxu0 0.0
    %3786 = vmatpush1.msra.mxu0 0.0
    %3787 = vmatprep.subr.mxu0 0.0
    %3788 = vmatpush1.msra.mxu0 0.0
    %3789 = vmatprep.subr.mxu0 0.0
    %3790 = vmatpush1.msra.mxu0 0.0
    %3791 = vmatprep.subr.mxu0 0.0
    %3792 = vmatpush1.msra.mxu0 0.0
    %3793 = vmatprep.subr.mxu0 0.0
    %3794 = vmatpush1.msra.mxu0 0.0
    %3795 = vmatprep.subr.mxu0 0.0
    %3796 = vmatpush1.msra.mxu0 0.0
    %3797 = vmatprep.subr.mxu0 0.0
    %3798 = vmatpush1.msra.mxu0 0.0
    %3799 = vmatprep.subr.mxu0 0.0
    %3800 = vmatpush1.msra.mxu0 0.0
    %3801 = vmatprep.subr.mxu0 0.0
    %3802 = vmatpush1.msra.mxu0 0.0
    %3803 = vmatprep.subr.mxu0 0.0
    %3804 = vmatpush1.msra.mxu0 0.0
    %3805 = vmatprep.subr.mxu0 0.0
    %3806 = vmatpush1.msra.mxu0 0.0
    %3807 = vmatprep.subr.mxu0 0.0
    %3808 = vmatpush1.msra.mxu0 0.0
    %3809 = vmatprep.subr.mxu0 0.0
    %3810 = vmatpush1.msra.mxu0 0.0
    %3811 = vmatprep.subr.mxu0 0.0
    %3812 = vmatpush1.msra.mxu0 0.0
    %3813 = vmatprep.subr.mxu0 0.0
    %3814 = vmatpush1.msra.mxu0 0.0
    %3815 = vmatprep.subr.mxu0 0.0
    %3816 = vmatpush1.msra.mxu0 0.0
    %3817 = vmatprep.subr.mxu0 0.0
    %3818 = vmatpush1.msra.mxu0 0.0
    %3819 = vmatprep.subr.mxu0 0.0
    %3820 = vmatpush1.msra.mxu0 0.0
    %3821 = vmatprep.subr.mxu0 0.0
    %3822 = vmatpush1.msra.mxu0 0.0
    %3823 = vmatprep.subr.mxu0 0.0
    %3824 = vmatpush1.msra.mxu0 0.0
    %3825 = vmatprep.subr.mxu0 0.0
    %3826 = vmatpush1.msra.mxu0 0.0
    %3827 = vmatprep.subr.mxu0 0.0
    %3828 = vmatpush1.msra.mxu0 0.0
    %3829 = vmatprep.subr.mxu0 0.0
    %3830 = vmatpush1.msra.mxu0 0.0
    %3831 = vmatprep.subr.mxu0 0.0
    %3832 = vmatpush1.msra.mxu0 0.0
    %3833 = vmatprep.subr.mxu0 0.0
    %3834 = vmatpush1.msra.mxu0 0.0
    %3835 = vmatprep.mubr.f32.mxu0 0.0
    %3836 = vmatmul.mubr.f32.gmra.mrb[0].mxu0 %v3766
    %v3837 = vpop.f32.mrb[0].mxu0
    %v3838 = vadd.f32 0.0, %v3837
    %v3839 = vpop.f32.mrb[0].mxu0
    %3840 = vmatprep.mubr.f32.mxu0 0.0
    %3841 = vmatmul.mubr.f32.gmra.mrb[0].mxu0 %v3769
    %v3842 = vpop.f32.mrb[0].mxu0
    %v3843 = vadd.f32 0.0, %v3842
    %v3844 = vpop.f32.mrb[0].mxu0
    %3845 = vdwg.mxu0
    %v3847 = vsel %vm1072, %v3738, 0
    %v3850 = vsel %vm1072, %v3740, 0
    %3852 = vmatprep.subr.mxu0 0.0
    %3853 = vmatpush1.msra.mxu0 %v1707
    %3854 = vmatprep.subr.mxu0 0.0
    %3855 = vmatpush1.msra.mxu0 %v1712
    %3856 = vmatprep.subr.mxu0 0.0
    %3857 = vmatpush1.msra.mxu0 0.0
    %3858 = vmatprep.subr.mxu0 0.0
    %3859 = vmatpush1.msra.mxu0 0.0
    %3860 = vmatprep.subr.mxu0 0.0
    %3861 = vmatpush1.msra.mxu0 0.0
    %3862 = vmatprep.subr.mxu0 0.0
    %3863 = vmatpush1.msra.mxu0 0.0
    %3864 = vmatprep.subr.mxu0 0.0
    %3865 = vmatpush1.msra.mxu0 0.0
    %3866 = vmatprep.subr.mxu0 0.0
    %3867 = vmatpush1.msra.mxu0 0.0
    %3868 = vmatprep.subr.mxu0 0.0
    %3869 = vmatpush1.msra.mxu0 0.0
    %3870 = vmatprep.subr.mxu0 0.0
    %3871 = vmatpush1.msra.mxu0 0.0
    %3872 = vmatprep.subr.mxu0 0.0
    %3873 = vmatpush1.msra.mxu0 0.0
    %3874 = vmatprep.subr.mxu0 0.0
    %3875 = vmatpush1.msra.mxu0 0.0
    %3876 = vmatprep.subr.mxu0 0.0
    %3877 = vmatpush1.msra.mxu0 0.0
    %3878 = vmatprep.subr.mxu0 0.0
    %3879 = vmatpush1.msra.mxu0 0.0
    %3880 = vmatprep.subr.mxu0 0.0
    %3881 = vmatpush1.msra.mxu0 0.0
    %3882 = vmatprep.subr.mxu0 0.0
    %3883 = vmatpush1.msra.mxu0 0.0
    %3884 = vmatprep.subr.mxu0 0.0
    %3885 = vmatpush1.msra.mxu0 0.0
    %3886 = vmatprep.subr.mxu0 0.0
    %3887 = vmatpush1.msra.mxu0 0.0
    %3888 = vmatprep.subr.mxu0 0.0
    %3889 = vmatpush1.msra.mxu0 0.0
    %3890 = vmatprep.subr.mxu0 0.0
    %3891 = vmatpush1.msra.mxu0 0.0
    %3892 = vmatprep.subr.mxu0 0.0
    %3893 = vmatpush1.msra.mxu0 0.0
    %3894 = vmatprep.subr.mxu0 0.0
    %3895 = vmatpush1.msra.mxu0 0.0
    %3896 = vmatprep.subr.mxu0 0.0
    %3897 = vmatpush1.msra.mxu0 0.0
    %3898 = vmatprep.subr.mxu0 0.0
    %3899 = vmatpush1.msra.mxu0 0.0
    %3900 = vmatprep.subr.mxu0 0.0
    %3901 = vmatpush1.msra.mxu0 0.0
    %3902 = vmatprep.subr.mxu0 0.0
    %3903 = vmatpush1.msra.mxu0 0.0
    %3904 = vmatprep.subr.mxu0 0.0
    %3905 = vmatpush1.msra.mxu0 0.0
    %3906 = vmatprep.subr.mxu0 0.0
    %3907 = vmatpush1.msra.mxu0 0.0
    %3908 = vmatprep.subr.mxu0 0.0
    %3909 = vmatpush1.msra.mxu0 0.0
    %3910 = vmatprep.subr.mxu0 0.0
    %3911 = vmatpush1.msra.mxu0 0.0
    %3912 = vmatprep.subr.mxu0 0.0
    %3913 = vmatpush1.msra.mxu0 0.0
    %3914 = vmatprep.subr.mxu0 0.0
    %3915 = vmatpush1.msra.mxu0 0.0
    %3916 = vmatprep.mubr.f32.mxu0 0.0
    %3917 = vmatmul.mubr.f32.gmra.mrb[0].mxu0 %v3847
    %v3918 = vpop.f32.mrb[0].mxu0
    %v3919 = vadd.f32 0.0, %v3918
    %v3920 = vpop.f32.mrb[0].mxu0
    %3921 = vmatprep.mubr.f32.mxu0 0.0
    %3922 = vmatmul.mubr.f32.gmra.mrb[0].mxu0 %v3850
    %v3923 = vpop.f32.mrb[0].mxu0
    %v3924 = vadd.f32 0.0, %v3923
    %v3925 = vpop.f32.mrb[0].mxu0
    %3926 = vdwg.mxu0
    %v3928 = vsel %vm1072, %v3742, 0
    %v3931 = vsel %vm1072, %v3744, 0
    %3933 = vmatprep.subr.mxu0 0.0
    %3934 = vmatpush1.msra.mxu0 %v1782
    %3935 = vmatprep.subr.mxu0 0.0
    %3936 = vmatpush1.msra.mxu0 %v1787
    %3937 = vmatprep.subr.mxu0 0.0
    %3938 = vmatpush1.msra.mxu0 0.0
    %3939 = vmatprep.subr.mxu0 0.0
    %3940 = vmatpush1.msra.mxu0 0.0
    %3941 = vmatprep.subr.mxu0 0.0
    %3942 = vmatpush1.msra.mxu0 0.0
    %3943 = vmatprep.subr.mxu0 0.0
    %3944 = vmatpush1.msra.mxu0 0.0
    %3945 = vmatprep.subr.mxu0 0.0
    %3946 = vmatpush1.msra.mxu0 0.0
    %3947 = vmatprep.subr.mxu0 0.0
    %3948 = vmatpush1.msra.mxu0 0.0
    %3949 = vmatprep.subr.mxu0 0.0
    %3950 = vmatpush1.msra.mxu0 0.0
    %3951 = vmatprep.subr.mxu0 0.0
    %3952 = vmatpush1.msra.mxu0 0.0
    %3953 = vmatprep.subr.mxu0 0.0
    %3954 = vmatpush1.msra.mxu0 0.0
    %3955 = vmatprep.subr.mxu0 0.0
    %3956 = vmatpush1.msra.mxu0 0.0
    %3957 = vmatprep.subr.mxu0 0.0
    %3958 = vmatpush1.msra.mxu0 0.0
    %3959 = vmatprep.subr.mxu0 0.0
    %3960 = vmatpush1.msra.mxu0 0.0
    %3961 = vmatprep.subr.mxu0 0.0
    %3962 = vmatpush1.msra.mxu0 0.0
    %3963 = vmatprep.subr.mxu0 0.0
    %3964 = vmatpush1.msra.mxu0 0.0
    %3965 = vmatprep.subr.mxu0 0.0
    %3966 = vmatpush1.msra.mxu0 0.0
    %3967 = vmatprep.subr.mxu0 0.0
    %3968 = vmatpush1.msra.mxu0 0.0
    %3969 = vmatprep.subr.mxu0 0.0
    %3970 = vmatpush1.msra.mxu0 0.0
    %3971 = vmatprep.subr.mxu0 0.0
    %3972 = vmatpush1.msra.mxu0 0.0
    %3973 = vmatprep.subr.mxu0 0.0
    %3974 = vmatpush1.msra.mxu0 0.0
    %3975 = vmatprep.subr.mxu0 0.0
    %3976 = vmatpush1.msra.mxu0 0.0
    %3977 = vmatprep.subr.mxu0 0.0
    %3978 = vmatpush1.msra.mxu0 0.0
    %3979 = vmatprep.subr.mxu0 0.0
    %3980 = vmatpush1.msra.mxu0 0.0
    %3981 = vmatprep.subr.mxu0 0.0
    %3982 = vmatpush1.msra.mxu0 0.0
    %3983 = vmatprep.subr.mxu0 0.0
    %3984 = vmatpush1.msra.mxu0 0.0
    %3985 = vmatprep.subr.mxu0 0.0
    %3986 = vmatpush1.msra.mxu0 0.0
    %3987 = vmatprep.subr.mxu0 0.0
    %3988 = vmatpush1.msra.mxu0 0.0
    %3989 = vmatprep.subr.mxu0 0.0
    %3990 = vmatpush1.msra.mxu0 0.0
    %3991 = vmatprep.subr.mxu0 0.0
    %3992 = vmatpush1.msra.mxu0 0.0
    %3993 = vmatprep.subr.mxu0 0.0
    %3994 = vmatpush1.msra.mxu0 0.0
    %3995 = vmatprep.subr.mxu0 0.0
    %3996 = vmatpush1.msra.mxu0 0.0
    %3997 = vmatprep.mubr.f32.mxu0 0.0
    %3998 = vmatmul.mubr.f32.gmra.mrb[0].mxu0 %v3928
    %v3999 = vpop.f32.mrb[0].mxu0
    %v4000 = vadd.f32 0.0, %v3999
    %v4001 = vpop.f32.mrb[0].mxu0
    %4002 = vmatprep.mubr.f32.mxu0 0.0
    %4003 = vmatmul.mubr.f32.gmra.mrb[0].mxu0 %v3931
    %v4004 = vpop.f32.mrb[0].mxu0
    %v4005 = vadd.f32 0.0, %v4004
    %v4006 = vpop.f32.mrb[0].mxu0
    %4007 = vdwg.mxu0
    %v4009 = vsel %vm1072, %v3746, 0
    %v4012 = vsel %vm1072, %v3748, 0
    %4014 = vmatprep.subr.mxu0 0.0
    %4015 = vmatpush1.msra.mxu0 %v1857
    %4016 = vmatprep.subr.mxu0 0.0
    %4017 = vmatpush1.msra.mxu0 %v1862
    %4018 = vmatprep.subr.mxu0 0.0
    %4019 = vmatpush1.msra.mxu0 0.0
    %4020 = vmatprep.subr.mxu0 0.0
    %4021 = vmatpush1.msra.mxu0 0.0
    %4022 = vmatprep.subr.mxu0 0.0
    %4023 = vmatpush1.msra.mxu0 0.0
    %4024 = vmatprep.subr.mxu0 0.0
    %4025 = vmatpush1.msra.mxu0 0.0
    %4026 = vmatprep.subr.mxu0 0.0
    %4027 = vmatpush1.msra.mxu0 0.0
    %4028 = vmatprep.subr.mxu0 0.0
    %4029 = vmatpush1.msra.mxu0 0.0
    %4030 = vmatprep.subr.mxu0 0.0
    %4031 = vmatpush1.msra.mxu0 0.0
    %4032 = vmatprep.subr.mxu0 0.0
    %4033 = vmatpush1.msra.mxu0 0.0
    %4034 = vmatprep.subr.mxu0 0.0
    %4035 = vmatpush1.msra.mxu0 0.0
    %4036 = vmatprep.subr.mxu0 0.0
    %4037 = vmatpush1.msra.mxu0 0.0
    %4038 = vmatprep.subr.mxu0 0.0
    %4039 = vmatpush1.msra.mxu0 0.0
    %4040 = vmatprep.subr.mxu0 0.0
    %4041 = vmatpush1.msra.mxu0 0.0
    %4042 = vmatprep.subr.mxu0 0.0
    %4043 = vmatpush1.msra.mxu0 0.0
    %4044 = vmatprep.subr.mxu0 0.0
    %4045 = vmatpush1.msra.mxu0 0.0
    %4046 = vmatprep.subr.mxu0 0.0
    %4047 = vmatpush1.msra.mxu0 0.0
    %4048 = vmatprep.subr.mxu0 0.0
    %4049 = vmatpush1.msra.mxu0 0.0
    %4050 = vmatprep.subr.mxu0 0.0
    %4051 = vmatpush1.msra.mxu0 0.0
    %4052 = vmatprep.subr.mxu0 0.0
    %4053 = vmatpush1.msra.mxu0 0.0
    %4054 = vmatprep.subr.mxu0 0.0
    %4055 = vmatpush1.msra.mxu0 0.0
    %4056 = vmatprep.subr.mxu0 0.0
    %4057 = vmatpush1.msra.mxu0 0.0
    %4058 = vmatprep.subr.mxu0 0.0
    %4059 = vmatpush1.msra.mxu0 0.0
    %4060 = vmatprep.subr.mxu0 0.0
    %4061 = vmatpush1.msra.mxu0 0.0
    %4062 = vmatprep.subr.mxu0 0.0
    %4063 = vmatpush1.msra.mxu0 0.0
    %4064 = vmatprep.subr.mxu0 0.0
    %4065 = vmatpush1.msra.mxu0 0.0
    %4066 = vmatprep.subr.mxu0 0.0
    %4067 = vmatpush1.msra.mxu0 0.0
    %4068 = vmatprep.subr.mxu0 0.0
    %4069 = vmatpush1.msra.mxu0 0.0
    %4070 = vmatprep.subr.mxu0 0.0
    %4071 = vmatpush1.msra.mxu0 0.0
    %4072 = vmatprep.subr.mxu0 0.0
    %4073 = vmatpush1.msra.mxu0 0.0
    %4074 = vmatprep.subr.mxu0 0.0
    %4075 = vmatpush1.msra.mxu0 0.0
    %4076 = vmatprep.subr.mxu0 0.0
    %4077 = vmatpush1.msra.mxu0 0.0
    %4078 = vmatprep.mubr.f32.mxu0 0.0
    %4079 = vmatmul.mubr.f32.gmra.mrb[0].mxu0 %v4009
    %v4080 = vpop.f32.mrb[0].mxu0
    %v4081 = vadd.f32 0.0, %v4080
    %v4082 = vpop.f32.mrb[0].mxu0
    %4083 = vmatprep.mubr.f32.mxu0 0.0
    %4084 = vmatmul.mubr.f32.gmra.mrb[0].mxu0 %v4012
    %v4085 = vpop.f32.mrb[0].mxu0
    %v4086 = vadd.f32 0.0, %v4085
    %v4087 = vpop.f32.mrb[0].mxu0
    %4088 = vdwg.mxu0
    %v4090 = vsel %vm1072, %v3750, 0
    %v4093 = vsel %vm1072, %v3752, 0
    %4095 = vmatprep.subr.mxu0 0.0
    %4096 = vmatpush1.msra.mxu0 %v1932
    %4097 = vmatprep.subr.mxu0 0.0
    %4098 = vmatpush1.msra.mxu0 %v1937
    %4099 = vmatprep.subr.mxu0 0.0
    %4100 = vmatpush1.msra.mxu0 0.0
    %4101 = vmatprep.subr.mxu0 0.0
    %4102 = vmatpush1.msra.mxu0 0.0
    %4103 = vmatprep.subr.mxu0 0.0
    %4104 = vmatpush1.msra.mxu0 0.0
    %4105 = vmatprep.subr.mxu0 0.0
    %4106 = vmatpush1.msra.mxu0 0.0
    %4107 = vmatprep.subr.mxu0 0.0
    %4108 = vmatpush1.msra.mxu0 0.0
    %4109 = vmatprep.subr.mxu0 0.0
    %4110 = vmatpush1.msra.mxu0 0.0
    %4111 = vmatprep.subr.mxu0 0.0
    %4112 = vmatpush1.msra.mxu0 0.0
    %4113 = vmatprep.subr.mxu0 0.0
    %4114 = vmatpush1.msra.mxu0 0.0
    %4115 = vmatprep.subr.mxu0 0.0
    %4116 = vmatpush1.msra.mxu0 0.0
    %4117 = vmatprep.subr.mxu0 0.0
    %4118 = vmatpush1.msra.mxu0 0.0
    %4119 = vmatprep.subr.mxu0 0.0
    %4120 = vmatpush1.msra.mxu0 0.0
    %4121 = vmatprep.subr.mxu0 0.0
    %4122 = vmatpush1.msra.mxu0 0.0
    %4123 = vmatprep.subr.mxu0 0.0
    %4124 = vmatpush1.msra.mxu0 0.0
    %4125 = vmatprep.subr.mxu0 0.0
    %4126 = vmatpush1.msra.mxu0 0.0
    %4127 = vmatprep.subr.mxu0 0.0
    %4128 = vmatpush1.msra.mxu0 0.0
    %4129 = vmatprep.subr.mxu0 0.0
    %4130 = vmatpush1.msra.mxu0 0.0
    %4131 = vmatprep.subr.mxu0 0.0
    %4132 = vmatpush1.msra.mxu0 0.0
    %4133 = vmatprep.subr.mxu0 0.0
    %4134 = vmatpush1.msra.mxu0 0.0
    %4135 = vmatprep.subr.mxu0 0.0
    %4136 = vmatpush1.msra.mxu0 0.0
    %4137 = vmatprep.subr.mxu0 0.0
    %4138 = vmatpush1.msra.mxu0 0.0
    %4139 = vmatprep.subr.mxu0 0.0
    %4140 = vmatpush1.msra.mxu0 0.0
    %4141 = vmatprep.subr.mxu0 0.0
    %4142 = vmatpush1.msra.mxu0 0.0
    %4143 = vmatprep.subr.mxu0 0.0
    %4144 = vmatpush1.msra.mxu0 0.0
    %4145 = vmatprep.subr.mxu0 0.0
    %4146 = vmatpush1.msra.mxu0 0.0
    %4147 = vmatprep.subr.mxu0 0.0
    %4148 = vmatpush1.msra.mxu0 0.0
    %4149 = vmatprep.subr.mxu0 0.0
    %4150 = vmatpush1.msra.mxu0 0.0
    %4151 = vmatprep.subr.mxu0 0.0
    %4152 = vmatpush1.msra.mxu0 0.0
    %4153 = vmatprep.subr.mxu0 0.0
    %4154 = vmatpush1.msra.mxu0 0.0
    %4155 = vmatprep.subr.mxu0 0.0
    %4156 = vmatpush1.msra.mxu0 0.0
    %4157 = vmatprep.subr.mxu0 0.0
    %4158 = vmatpush1.msra.mxu0 0.0
    %4159 = vmatprep.mubr.f32.mxu0 0.0
    %4160 = vmatmul.mubr.f32.gmra.mrb[0].mxu0 %v4090
    %v4161 = vpop.f32.mrb[0].mxu0
    %v4162 = vadd.f32 0.0, %v4161
    %v4163 = vpop.f32.mrb[0].mxu0
    %4164 = vmatprep.mubr.f32.mxu0 0.0
    %4165 = vmatmul.mubr.f32.gmra.mrb[0].mxu0 %v4093
    %v4166 = vpop.f32.mrb[0].mxu0
    %v4167 = vadd.f32 0.0, %v4166
    %v4168 = vpop.f32.mrb[0].mxu0
    %4169 = vdwg.mxu0
    %v4171 = vsel %vm1072, %v3754, 0
    %v4174 = vsel %vm1072, %v3756, 0
    %4176 = vmatprep.subr.mxu0 0.0
    %4177 = vmatpush1.msra.mxu0 %v2007
    %4178 = vmatprep.subr.mxu0 0.0
    %4179 = vmatpush1.msra.mxu0 %v2012
    %4180 = vmatprep.subr.mxu0 0.0
    %4181 = vmatpush1.msra.mxu0 0.0
    %4182 = vmatprep.subr.mxu0 0.0
    %4183 = vmatpush1.msra.mxu0 0.0
    %4184 = vmatprep.subr.mxu0 0.0
    %4185 = vmatpush1.msra.mxu0 0.0
    %4186 = vmatprep.subr.mxu0 0.0
    %4187 = vmatpush1.msra.mxu0 0.0
    %4188 = vmatprep.subr.mxu0 0.0
    %4189 = vmatpush1.msra.mxu0 0.0
    %4190 = vmatprep.subr.mxu0 0.0
    %4191 = vmatpush1.msra.mxu0 0.0
    %4192 = vmatprep.subr.mxu0 0.0
    %4193 = vmatpush1.msra.mxu0 0.0
    %4194 = vmatprep.subr.mxu0 0.0
    %4195 = vmatpush1.msra.mxu0 0.0
    %4196 = vmatprep.subr.mxu0 0.0
    %4197 = vmatpush1.msra.mxu0 0.0
    %4198 = vmatprep.subr.mxu0 0.0
    %4199 = vmatpush1.msra.mxu0 0.0
    %4200 = vmatprep.subr.mxu0 0.0
    %4201 = vmatpush1.msra.mxu0 0.0
    %4202 = vmatprep.subr.mxu0 0.0
    %4203 = vmatpush1.msra.mxu0 0.0
    %4204 = vmatprep.subr.mxu0 0.0
    %4205 = vmatpush1.msra.mxu0 0.0
    %4206 = vmatprep.subr.mxu0 0.0
    %4207 = vmatpush1.msra.mxu0 0.0
    %4208 = vmatprep.subr.mxu0 0.0
    %4209 = vmatpush1.msra.mxu0 0.0
    %4210 = vmatprep.subr.mxu0 0.0
    %4211 = vmatpush1.msra.mxu0 0.0
    %4212 = vmatprep.subr.mxu0 0.0
    %4213 = vmatpush1.msra.mxu0 0.0
    %4214 = vmatprep.subr.mxu0 0.0
    %4215 = vmatpush1.msra.mxu0 0.0
    %4216 = vmatprep.subr.mxu0 0.0
    %4217 = vmatpush1.msra.mxu0 0.0
    %4218 = vmatprep.subr.mxu0 0.0
    %4219 = vmatpush1.msra.mxu0 0.0
    %4220 = vmatprep.subr.mxu0 0.0
    %4221 = vmatpush1.msra.mxu0 0.0
    %4222 = vmatprep.subr.mxu0 0.0
    %4223 = vmatpush1.msra.mxu0 0.0
    %4224 = vmatprep.subr.mxu0 0.0
    %4225 = vmatpush1.msra.mxu0 0.0
    %4226 = vmatprep.subr.mxu0 0.0
    %4227 = vmatpush1.msra.mxu0 0.0
    %4228 = vmatprep.subr.mxu0 0.0
    %4229 = vmatpush1.msra.mxu0 0.0
    %4230 = vmatprep.subr.mxu0 0.0
    %4231 = vmatpush1.msra.mxu0 0.0
    %4232 = vmatprep.subr.mxu0 0.0
    %4233 = vmatpush1.msra.mxu0 0.0
    %4234 = vmatprep.subr.mxu0 0.0
    %4235 = vmatpush1.msra.mxu0 0.0
    %4236 = vmatprep.subr.mxu0 0.0
    %4237 = vmatpush1.msra.mxu0 0.0
    %4238 = vmatprep.subr.mxu0 0.0
    %4239 = vmatpush1.msra.mxu0 0.0
    %4240 = vmatprep.mubr.f32.mxu0 0.0
    %4241 = vmatmul.mubr.f32.gmra.mrb[0].mxu0 %v4171
    %v4242 = vpop.f32.mrb[0].mxu0
    %v4243 = vadd.f32 0.0, %v4242
    %v4244 = vpop.f32.mrb[0].mxu0
    %4245 = vmatprep.mubr.f32.mxu0 0.0
    %4246 = vmatmul.mubr.f32.gmra.mrb[0].mxu0 %v4174
    %v4247 = vpop.f32.mrb[0].mxu0
    %v4248 = vadd.f32 0.0, %v4247
    %v4249 = vpop.f32.mrb[0].mxu0
    %4250 = vdwg.mxu0
    %v4252 = vsel %vm1072, %v3758, 0
    %v4255 = vsel %vm1072, %v3760, 0
    %4257 = vmatprep.subr.mxu0 0.0
    %4258 = vmatpush1.msra.mxu0 %v2082
    %4259 = vmatprep.subr.mxu0 0.0
    %4260 = vmatpush1.msra.mxu0 %v2087
    %4261 = vmatprep.subr.mxu0 0.0
    %4262 = vmatpush1.msra.mxu0 0.0
    %4263 = vmatprep.subr.mxu0 0.0
    %4264 = vmatpush1.msra.mxu0 0.0
    %4265 = vmatprep.subr.mxu0 0.0
    %4266 = vmatpush1.msra.mxu0 0.0
    %4267 = vmatprep.subr.mxu0 0.0
    %4268 = vmatpush1.msra.mxu0 0.0
    %4269 = vmatprep.subr.mxu0 0.0
    %4270 = vmatpush1.msra.mxu0 0.0
    %4271 = vmatprep.subr.mxu0 0.0
    %4272 = vmatpush1.msra.mxu0 0.0
    %4273 = vmatprep.subr.mxu0 0.0
    %4274 = vmatpush1.msra.mxu0 0.0
    %4275 = vmatprep.subr.mxu0 0.0
    %4276 = vmatpush1.msra.mxu0 0.0
    %4277 = vmatprep.subr.mxu0 0.0
    %4278 = vmatpush1.msra.mxu0 0.0
    %4279 = vmatprep.subr.mxu0 0.0
    %4280 = vmatpush1.msra.mxu0 0.0
    %4281 = vmatprep.subr.mxu0 0.0
    %4282 = vmatpush1.msra.mxu0 0.0
    %4283 = vmatprep.subr.mxu0 0.0
    %4284 = vmatpush1.msra.mxu0 0.0
    %4285 = vmatprep.subr.mxu0 0.0
    %4286 = vmatpush1.msra.mxu0 0.0
    %4287 = vmatprep.subr.mxu0 0.0
    %4288 = vmatpush1.msra.mxu0 0.0
    %4289 = vmatprep.subr.mxu0 0.0
    %4290 = vmatpush1.msra.mxu0 0.0
    %4291 = vmatprep.subr.mxu0 0.0
    %4292 = vmatpush1.msra.mxu0 0.0
    %4293 = vmatprep.subr.mxu0 0.0
    %4294 = vmatpush1.msra.mxu0 0.0
    %4295 = vmatprep.subr.mxu0 0.0
    %4296 = vmatpush1.msra.mxu0 0.0
    %4297 = vmatprep.subr.mxu0 0.0
    %4298 = vmatpush1.msra.mxu0 0.0
    %4299 = vmatprep.subr.mxu0 0.0
    %4300 = vmatpush1.msra.mxu0 0.0
    %4301 = vmatprep.subr.mxu0 0.0
    %4302 = vmatpush1.msra.mxu0 0.0
    %4303 = vmatprep.subr.mxu0 0.0
    %4304 = vmatpush1.msra.mxu0 0.0
    %4305 = vmatprep.subr.mxu0 0.0
    %4306 = vmatpush1.msra.mxu0 0.0
    %4307 = vmatprep.subr.mxu0 0.0
    %4308 = vmatpush1.msra.mxu0 0.0
    %4309 = vmatprep.subr.mxu0 0.0
    %4310 = vmatpush1.msra.mxu0 0.0
    %4311 = vmatprep.subr.mxu0 0.0
    %4312 = vmatpush1.msra.mxu0 0.0
    %4313 = vmatprep.subr.mxu0 0.0
    %4314 = vmatpush1.msra.mxu0 0.0
    %4315 = vmatprep.subr.mxu0 0.0
    %4316 = vmatpush1.msra.mxu0 0.0
    %4317 = vmatprep.subr.mxu0 0.0
    %4318 = vmatpush1.msra.mxu0 0.0
    %4319 = vmatprep.subr.mxu0 0.0
    %4320 = vmatpush1.msra.mxu0 0.0
    %4321 = vmatprep.mubr.f32.mxu0 0.0
    %4322 = vmatmul.mubr.f32.gmra.mrb[0].mxu0 %v4252
    %v4323 = vpop.f32.mrb[0].mxu0
    %v4324 = vadd.f32 0.0, %v4323
    %v4325 = vpop.f32.mrb[0].mxu0
    %4326 = vmatprep.mubr.f32.mxu0 0.0
    %4327 = vmatmul.mubr.f32.gmra.mrb[0].mxu0 %v4255
    %v4328 = vpop.f32.mrb[0].mxu0
    %v4329 = vadd.f32 0.0, %v4328
    %v4330 = vpop.f32.mrb[0].mxu0
    %4331 = vdwg.mxu0
    %v4333 = vsel %vm1072, %v3762, 0
    %v4336 = vsel %vm1072, %v3764, 0
    %4338 = vmatprep.subr.mxu0 0.0
    %4339 = vmatpush1.msra.mxu0 %v2157
    %4340 = vmatprep.subr.mxu0 0.0
    %4341 = vmatpush1.msra.mxu0 %v2162
    %4342 = vmatprep.subr.mxu0 0.0
    %4343 = vmatpush1.msra.mxu0 0.0
    %4344 = vmatprep.subr.mxu0 0.0
    %4345 = vmatpush1.msra.mxu0 0.0
    %4346 = vmatprep.subr.mxu0 0.0
    %4347 = vmatpush1.msra.mxu0 0.0
    %4348 = vmatprep.subr.mxu0 0.0
    %4349 = vmatpush1.msra.mxu0 0.0
    %4350 = vmatprep.subr.mxu0 0.0
    %4351 = vmatpush1.msra.mxu0 0.0
    %4352 = vmatprep.subr.mxu0 0.0
    %4353 = vmatpush1.msra.mxu0 0.0
    %4354 = vmatprep.subr.mxu0 0.0
    %4355 = vmatpush1.msra.mxu0 0.0
    %4356 = vmatprep.subr.mxu0 0.0
    %4357 = vmatpush1.msra.mxu0 0.0
    %4358 = vmatprep.subr.mxu0 0.0
    %4359 = vmatpush1.msra.mxu0 0.0
    %4360 = vmatprep.subr.mxu0 0.0
    %4361 = vmatpush1.msra.mxu0 0.0
    %4362 = vmatprep.subr.mxu0 0.0
    %4363 = vmatpush1.msra.mxu0 0.0
    %4364 = vmatprep.subr.mxu0 0.0
    %4365 = vmatpush1.msra.mxu0 0.0
    %4366 = vmatprep.subr.mxu0 0.0
    %4367 = vmatpush1.msra.mxu0 0.0
    %4368 = vmatprep.subr.mxu0 0.0
    %4369 = vmatpush1.msra.mxu0 0.0
    %4370 = vmatprep.subr.mxu0 0.0
    %4371 = vmatpush1.msra.mxu0 0.0
    %4372 = vmatprep.subr.mxu0 0.0
    %4373 = vmatpush1.msra.mxu0 0.0
    %4374 = vmatprep.subr.mxu0 0.0
    %4375 = vmatpush1.msra.mxu0 0.0
    %4376 = vmatprep.subr.mxu0 0.0
    %4377 = vmatpush1.msra.mxu0 0.0
    %4378 = vmatprep.subr.mxu0 0.0
    %4379 = vmatpush1.msra.mxu0 0.0
    %4380 = vmatprep.subr.mxu0 0.0
    %4381 = vmatpush1.msra.mxu0 0.0
    %4382 = vmatprep.subr.mxu0 0.0
    %4383 = vmatpush1.msra.mxu0 0.0
    %4384 = vmatprep.subr.mxu0 0.0
    %4385 = vmatpush1.msra.mxu0 0.0
    %4386 = vmatprep.subr.mxu0 0.0
    %4387 = vmatpush1.msra.mxu0 0.0
    %4388 = vmatprep.subr.mxu0 0.0
    %4389 = vmatpush1.msra.mxu0 0.0
    %4390 = vmatprep.subr.mxu0 0.0
    %4391 = vmatpush1.msra.mxu0 0.0
    %4392 = vmatprep.subr.mxu0 0.0
    %4393 = vmatpush1.msra.mxu0 0.0
    %4394 = vmatprep.subr.mxu0 0.0
    %4395 = vmatpush1.msra.mxu0 0.0
    %4396 = vmatprep.subr.mxu0 0.0
    %4397 = vmatpush1.msra.mxu0 0.0
    %4398 = vmatprep.subr.mxu0 0.0
    %4399 = vmatpush1.msra.mxu0 0.0
    %4400 = vmatprep.subr.mxu0 0.0
    %4401 = vmatpush1.msra.mxu0 0.0
    %4402 = vmatprep.mubr.f32.mxu0 0.0
    %4403 = vmatmul.mubr.f32.gmra.mrb[0].mxu0 %v4333
    %v4404 = vpop.f32.mrb[0].mxu0
    %v4405 = vadd.f32 0.0, %v4404
    %v4406 = vpop.f32.mrb[0].mxu0
    %4407 = vmatprep.mubr.f32.mxu0 0.0
    %4408 = vmatmul.mubr.f32.gmra.mrb[0].mxu0 %v4336
    %v4409 = vpop.f32.mrb[0].mxu0
    %v4410 = vadd.f32 0.0, %v4409
    %v4411 = vpop.f32.mrb[0].mxu0
    %4412 = vdwg.mxu0
    %4415 = vrot.lane.b32.xlu0 %v3919, 8
    %v4416 = vpop.permute.xlu0 %4415
    %4417 = vrot.lane.b32.xlu0 %v3924, 8
    %v4418 = vpop.permute.xlu0 %4417
    %4423 = vrot.lane.b32.xlu0 %v4000, 16
    %v4424 = vpop.permute.xlu0 %4423
    %4425 = vrot.lane.b32.xlu0 %v4005, 16
    %v4426 = vpop.permute.xlu0 %4425
    %4431 = vrot.lane.b32.xlu0 %v4081, 24
    %v4432 = vpop.permute.xlu0 %4431
    %4433 = vrot.lane.b32.xlu0 %v4086, 24
    %v4434 = vpop.permute.xlu0 %4433
    %4439 = vrot.lane.b32.xlu0 %v4162, 32
    %v4440 = vpop.permute.xlu0 %4439
    %4441 = vrot.lane.b32.xlu0 %v4167, 32
    %v4442 = vpop.permute.xlu0 %4441
    %4447 = vrot.lane.b32.xlu0 %v4243, 40
    %v4448 = vpop.permute.xlu0 %4447
    %4449 = vrot.lane.b32.xlu0 %v4248, 40
    %v4450 = vpop.permute.xlu0 %4449
    %4455 = vrot.lane.b32.xlu0 %v4324, 48
    %v4456 = vpop.permute.xlu0 %4455
    %4457 = vrot.lane.b32.xlu0 %v4329, 48
    %v4458 = vpop.permute.xlu0 %4457
    %4463 = vrot.lane.b32.xlu0 %v4405, 56
    %v4464 = vpop.permute.xlu0 %4463
    %4465 = vrot.lane.b32.xlu0 %v4410, 56
    %v4466 = vpop.permute.xlu0 %4465
    %v4469 = vsel %vm52, %v3838, %v4416
    %v4470 = vsel %vm52, %v3843, %v4418
    %v4471 = vsel %vm1072, %v4469, %v4424
    %v4472 = vsel %vm1072, %v4470, %v4426
    %vm4473 = vcmask 195584
    %v4474 = vsel %vm4473, %v4471, %v4432
    %v4475 = vsel %vm4473, %v4472, %v4434
    %vm4476 = vcmask 261120
    %v4477 = vsel %vm4476, %v4474, %v4440
    %v4478 = vsel %vm4476, %v4475, %v4442
    %vm4479 = vcmask 326656
    %v4480 = vsel %vm4479, %v4477, %v4448
    %v4481 = vsel %vm4479, %v4478, %v4450
    %vm4482 = vcmask 392192
    %v4483 = vsel %vm4482, %v4480, %v4456
    %v4484 = vsel %vm4482, %v4481, %v4458
    %vm4485 = vcmask 457728
    %v4486 = vsel %vm4485, %v4483, %v4464
    %v4487 = vsel %vm4485, %v4484, %v4466
    %v4488 = vlaneseq
    %v4489 = vshrl.u32 %v4488, 7
    %v4490 = vsub.s32 0, %v4489
    %v4491 = vrot.slane %v1558, %v4490
    %v4492 = vadd.f32 %v4486, %v4491
    %v4493 = vadd.f32 %v4487, %v4491
    %vm4494 = vcmp.gt.f32.partialorder %v4492, 0.0
    %vm4495 = vcmp.gt.f32.partialorder %v4493, 0.0
    %v4496 = vmin.f32 %v4492, 0.0
    %v4497 = vmin.f32 %v4493, 0.0
    %v4498 = vmul.f32 %v4496, 1.442695
    %v4499 = vpow.pop %v4498
    %v4500 = vmul.f32 %v4497, 1.442695
    %v4501 = vpow.pop %v4500
    %v4502 = vsub.f32 %v4499, 1.0
    %v4503 = vsub.f32 %v4501, 1.0
    %v4504 = vsel %vm4494, %v4492, %v4502
    %v4505 = vsel %vm4495, %v4493, %v4503
    %v4506 = vld [vmem:[#allocation4 + $0x110] sm:$0xff]
    %v4507 = vld [vmem:[#allocation4 + $0x118] sm:$0xff]
    %v4508 = vld [vmem:[#allocation4 + $0x120] sm:$0xff]
    %v4509 = vld [vmem:[#allocation4 + $0x128] sm:$0xff]
    %v4510 = vld [vmem:[#allocation4 + $0x130] sm:$0xff]
    %v4511 = vld [vmem:[#allocation4 + $0x138] sm:$0xff]
    %v4512 = vld [vmem:[#allocation4 + $0x140] sm:$0xff]
    %v4513 = vld [vmem:[#allocation4 + $0x148] sm:$0xff]
    %v4514 = vld [vmem:[#allocation4 + $0x150] sm:$0xff]
    %v4515 = vld [vmem:[#allocation4 + $0x158] sm:$0x1]
    %vm4516 = vcmask 523264
    %v4518 = vsel %vm4516, %v4504, 0
    %v4521 = vsel %vm4516, %v4505, 0
    %4523 = vmatprep.subr.mxu0 0.0
    %4524 = vmatpush1.msra.mxu0 %v4506
    %4525 = vmatprep.subr.mxu0 0.0
    %4526 = vmatpush1.msra.mxu0 %v4507
    %4527 = vmatprep.subr.mxu0 0.0
    %4528 = vmatpush1.msra.mxu0 %v4508
    %4529 = vmatprep.subr.mxu0 0.0
    %4530 = vmatpush1.msra.mxu0 %v4509
    %4531 = vmatprep.subr.mxu0 0.0
    %4532 = vmatpush1.msra.mxu0 %v4510
    %4533 = vmatprep.subr.mxu0 0.0
    %4534 = vmatpush1.msra.mxu0 %v4511
    %4535 = vmatprep.subr.mxu0 0.0
    %4536 = vmatpush1.msra.mxu0 %v4512
    %4537 = vmatprep.subr.mxu0 0.0
    %4538 = vmatpush1.msra.mxu0 %v4513
    %4539 = vmatprep.subr.mxu0 0.0
    %4540 = vmatpush1.msra.mxu0 0.0
    %4541 = vmatprep.subr.mxu0 0.0
    %4542 = vmatpush1.msra.mxu0 0.0
    %4543 = vmatprep.subr.mxu0 0.0
    %4544 = vmatpush1.msra.mxu0 0.0
    %4545 = vmatprep.subr.mxu0 0.0
    %4546 = vmatpush1.msra.mxu0 0.0
    %4547 = vmatprep.subr.mxu0 0.0
    %4548 = vmatpush1.msra.mxu0 0.0
    %4549 = vmatprep.subr.mxu0 0.0
    %4550 = vmatpush1.msra.mxu0 0.0
    %4551 = vmatprep.subr.mxu0 0.0
    %4552 = vmatpush1.msra.mxu0 0.0
    %4553 = vmatprep.subr.mxu0 0.0
    %4554 = vmatpush1.msra.mxu0 0.0
    %4555 = vmatprep.subr.mxu0 0.0
    %4556 = vmatpush1.msra.mxu0 0.0
    %4557 = vmatprep.subr.mxu0 0.0
    %4558 = vmatpush1.msra.mxu0 0.0
    %4559 = vmatprep.subr.mxu0 0.0
    %4560 = vmatpush1.msra.mxu0 0.0
    %4561 = vmatprep.subr.mxu0 0.0
    %4562 = vmatpush1.msra.mxu0 0.0
    %4563 = vmatprep.subr.mxu0 0.0
    %4564 = vmatpush1.msra.mxu0 0.0
    %4565 = vmatprep.subr.mxu0 0.0
    %4566 = vmatpush1.msra.mxu0 0.0
    %4567 = vmatprep.subr.mxu0 0.0
    %4568 = vmatpush1.msra.mxu0 0.0
    %4569 = vmatprep.subr.mxu0 0.0
    %4570 = vmatpush1.msra.mxu0 0.0
    %4571 = vmatprep.subr.mxu0 0.0
    %4572 = vmatpush1.msra.mxu0 0.0
    %4573 = vmatprep.subr.mxu0 0.0
    %4574 = vmatpush1.msra.mxu0 0.0
    %4575 = vmatprep.subr.mxu0 0.0
    %4576 = vmatpush1.msra.mxu0 0.0
    %4577 = vmatprep.subr.mxu0 0.0
    %4578 = vmatpush1.msra.mxu0 0.0
    %4579 = vmatprep.subr.mxu0 0.0
    %4580 = vmatpush1.msra.mxu0 0.0
    %4581 = vmatprep.subr.mxu0 0.0
    %4582 = vmatpush1.msra.mxu0 0.0
    %4583 = vmatprep.subr.mxu0 0.0
    %4584 = vmatpush1.msra.mxu0 0.0
    %4585 = vmatprep.subr.mxu0 0.0
    %4586 = vmatpush1.msra.mxu0 0.0
    %4587 = vmatprep.mubr.f32.mxu0 0.0
    %4588 = vmatmul.mubr.f32.gmra.mrb[0].mxu0 %v4518
    %v4589 = vpop.f32.mrb[0].mxu0
    %v4590 = vadd.f32 0.0, %v4589
    %v4591 = vpop.f32.mrb[0].mxu0
    %4592 = vmatprep.mubr.f32.mxu0 0.0
    %4593 = vmatmul.mubr.f32.gmra.mrb[0].mxu0 %v4521
    %v4594 = vpop.f32.mrb[0].mxu0
    %v4595 = vadd.f32 0.0, %v4594
    %v4596 = vpop.f32.mrb[0].mxu0
    %4597 = vdwg.mxu0
    %vm4598 = vcmask 48128
    %v4600 = vsel %vm4598, %v4590, 0
    %v4603 = vsel %vm4598, %v4595, 0
    %v4606 = vsel %vm4598, %v4514, 0
    %4608 = vmatprep.subr.mxu0 0.0
    %4609 = vmatpush1.xpose.msra.mxu0 %v4606
    %4610 = vmatprep.subr.mxu0 0.0
    %4611 = vmatpush1.xpose.msra.mxu0 0.0
    %4612 = vmatprep.subr.mxu0 0.0
    %4613 = vmatpush1.xpose.msra.mxu0 0.0
    %4614 = vmatprep.subr.mxu0 0.0
    %4615 = vmatpush1.xpose.msra.mxu0 0.0
    %4616 = vmatprep.subr.mxu0 0.0
    %4617 = vmatpush1.xpose.msra.mxu0 0.0
    %4618 = vmatprep.subr.mxu0 0.0
    %4619 = vmatpush1.xpose.msra.mxu0 0.0
    %4620 = vmatprep.subr.mxu0 0.0
    %4621 = vmatpush1.xpose.msra.mxu0 0.0
    %4622 = vmatprep.subr.mxu0 0.0
    %4623 = vmatpush1.xpose.msra.mxu0 0.0
    %4624 = vmatprep.subr.mxu0 0.0
    %4625 = vmatpush1.xpose.msra.mxu0 0.0
    %4626 = vmatprep.subr.mxu0 0.0
    %4627 = vmatpush1.xpose.msra.mxu0 0.0
    %4628 = vmatprep.subr.mxu0 0.0
    %4629 = vmatpush1.xpose.msra.mxu0 0.0
    %4630 = vmatprep.subr.mxu0 0.0
    %4631 = vmatpush1.xpose.msra.mxu0 0.0
    %4632 = vmatprep.subr.mxu0 0.0
    %4633 = vmatpush1.xpose.msra.mxu0 0.0
    %4634 = vmatprep.subr.mxu0 0.0
    %4635 = vmatpush1.xpose.msra.mxu0 0.0
    %4636 = vmatprep.subr.mxu0 0.0
    %4637 = vmatpush1.xpose.msra.mxu0 0.0
    %4638 = vmatprep.subr.mxu0 0.0
    %4639 = vmatpush1.xpose.msra.mxu0 0.0
    %4640 = vmatprep.subr.mxu0 0.0
    %4641 = vmatpush1.xpose.msra.mxu0 0.0
    %4642 = vmatprep.subr.mxu0 0.0
    %4643 = vmatpush1.xpose.msra.mxu0 0.0
    %4644 = vmatprep.subr.mxu0 0.0
    %4645 = vmatpush1.xpose.msra.mxu0 0.0
    %4646 = vmatprep.subr.mxu0 0.0
    %4647 = vmatpush1.xpose.msra.mxu0 0.0
    %4648 = vmatprep.subr.mxu0 0.0
    %4649 = vmatpush1.xpose.msra.mxu0 0.0
    %4650 = vmatprep.subr.mxu0 0.0
    %4651 = vmatpush1.xpose.msra.mxu0 0.0
    %4652 = vmatprep.subr.mxu0 0.0
    %4653 = vmatpush1.xpose.msra.mxu0 0.0
    %4654 = vmatprep.subr.mxu0 0.0
    %4655 = vmatpush1.xpose.msra.mxu0 0.0
    %4656 = vmatprep.subr.mxu0 0.0
    %4657 = vmatpush1.xpose.msra.mxu0 0.0
    %4658 = vmatprep.subr.mxu0 0.0
    %4659 = vmatpush1.xpose.msra.mxu0 0.0
    %4660 = vmatprep.subr.mxu0 0.0
    %4661 = vmatpush1.xpose.msra.mxu0 0.0
    %4662 = vmatprep.subr.mxu0 0.0
    %4663 = vmatpush1.xpose.msra.mxu0 0.0
    %4664 = vmatprep.subr.mxu0 0.0
    %4665 = vmatpush1.xpose.msra.mxu0 0.0
    %4666 = vmatprep.subr.mxu0 0.0
    %4667 = vmatpush1.xpose.msra.mxu0 0.0
    %4668 = vmatprep.subr.mxu0 0.0
    %4669 = vmatpush1.xpose.msra.mxu0 0.0
    %4670 = vmatprep.subr.mxu0 0.0
    %4671 = vmatpush1.xpose.msra.mxu0 0.0
    %4672 = vmatprep.mubr.f32.mxu0 0.0
    %4673 = vmatmul.mubr.f32.gmra.mrb[0].mxu0 %v4600
    %v4674 = vpop.f32.mrb[0].mxu0
    %v4675 = vadd.f32 0.0, %v4674
    %v4676 = vpop.f32.mrb[0].mxu0
    %4677 = vmatprep.mubr.f32.mxu0 0.0
    %4678 = vmatmul.mubr.f32.gmra.mrb[0].mxu0 %v4603
    %v4679 = vpop.f32.mrb[0].mxu0
    %v4680 = vadd.f32 0.0, %v4679
    %v4681 = vpop.f32.mrb[0].mxu0
    %4682 = vdwg.mxu0
    %4683 = vmatprep.subr.mxu0 0.0
    %4684 = vmatpush1.xpose.msra.mxu0 %v4600
    %4685 = vmatprep.subr.mxu0 0.0
    %4686 = vmatpush1.xpose.msra.mxu0 %v4603
    %4687 = vmatprep.subr.mxu0 0.0
    %4688 = vmatpush1.xpose.msra.mxu0 0.0
    %4689 = vmatprep.subr.mxu0 0.0
    %4690 = vmatpush1.xpose.msra.mxu0 0.0
    %4691 = vmatprep.subr.mxu0 0.0
    %4692 = vmatpush1.xpose.msra.mxu0 0.0
    %4693 = vmatprep.subr.mxu0 0.0
    %4694 = vmatpush1.xpose.msra.mxu0 0.0
    %4695 = vmatprep.subr.mxu0 0.0
    %4696 = vmatpush1.xpose.msra.mxu0 0.0
    %4697 = vmatprep.subr.mxu0 0.0
    %4698 = vmatpush1.xpose.msra.mxu0 0.0
    %4699 = vmatprep.subr.mxu0 0.0
    %4700 = vmatpush1.xpose.msra.mxu0 0.0
    %4701 = vmatprep.subr.mxu0 0.0
    %4702 = vmatpush1.xpose.msra.mxu0 0.0
    %4703 = vmatprep.subr.mxu0 0.0
    %4704 = vmatpush1.xpose.msra.mxu0 0.0
    %4705 = vmatprep.subr.mxu0 0.0
    %4706 = vmatpush1.xpose.msra.mxu0 0.0
    %4707 = vmatprep.subr.mxu0 0.0
    %4708 = vmatpush1.xpose.msra.mxu0 0.0
    %4709 = vmatprep.subr.mxu0 0.0
    %4710 = vmatpush1.xpose.msra.mxu0 0.0
    %4711 = vmatprep.subr.mxu0 0.0
    %4712 = vmatpush1.xpose.msra.mxu0 0.0
    %4713 = vmatprep.subr.mxu0 0.0
    %4714 = vmatpush1.xpose.msra.mxu0 0.0
    %4715 = vmatprep.subr.mxu0 0.0
    %4716 = vmatpush1.xpose.msra.mxu0 0.0
    %4717 = vmatprep.subr.mxu0 0.0
    %4718 = vmatpush1.xpose.msra.mxu0 0.0
    %4719 = vmatprep.subr.mxu0 0.0
    %4720 = vmatpush1.xpose.msra.mxu0 0.0
    %4721 = vmatprep.subr.mxu0 0.0
    %4722 = vmatpush1.xpose.msra.mxu0 0.0
    %4723 = vmatprep.subr.mxu0 0.0
    %4724 = vmatpush1.xpose.msra.mxu0 0.0
    %4725 = vmatprep.subr.mxu0 0.0
    %4726 = vmatpush1.xpose.msra.mxu0 0.0
    %4727 = vmatprep.subr.mxu0 0.0
    %4728 = vmatpush1.xpose.msra.mxu0 0.0
    %4729 = vmatprep.subr.mxu0 0.0
    %4730 = vmatpush1.xpose.msra.mxu0 0.0
    %4731 = vmatprep.subr.mxu0 0.0
    %4732 = vmatpush1.xpose.msra.mxu0 0.0
    %4733 = vmatprep.subr.mxu0 0.0
    %4734 = vmatpush1.xpose.msra.mxu0 0.0
    %4735 = vmatprep.subr.mxu0 0.0
    %4736 = vmatpush1.xpose.msra.mxu0 0.0
    %4737 = vmatprep.subr.mxu0 0.0
    %4738 = vmatpush1.xpose.msra.mxu0 0.0
    %4739 = vmatprep.subr.mxu0 0.0
    %4740 = vmatpush1.xpose.msra.mxu0 0.0
    %4741 = vmatprep.subr.mxu0 0.0
    %4742 = vmatpush1.xpose.msra.mxu0 0.0
    %4743 = vmatprep.subr.mxu0 0.0
    %4744 = vmatpush1.xpose.msra.mxu0 0.0
    %4745 = vmatprep.subr.mxu0 0.0
    %4746 = vmatpush1.xpose.msra.mxu0 0.0
    %4747 = vmatprep.mubr.f32.mxu0 0.0
    %4748 = vmatmul.mubr.f32.gmra.mrb[0].mxu0 %v4606
    %v4749 = vpop.f32.mrb[0].mxu0
    %v4750 = vadd.f32 0.0, %v4749
    %v4751 = vpop.f32.mrb[0].mxu0
    %4752 = vdwg.mxu0
    %4754 = vset.pattern.permute.xlu0 0
    %4755 = vperm.xlu0 %4754, %v4675
    %v4756 = vpop.permute.xlu0 %4755
    %4759 = vset.pattern.permute.xlu0 0
    %4760 = vperm.xlu0 %4759, %v4680
    %v4761 = vpop.permute.xlu0 %4760
    %v4763 = vlaneseq
    %v4764 = vshrl.u32 %v4763, 7
    %v4765 = vsub.s32 1, %v4764
    %v4766 = vrot.slane %v4750, %v4765
    %v4767 = vadd.f32 %v4756, %v4766
    %v4768 = vadd.f32 %v4761, %v4766
    %vm4769 = vcmp.gt.f32.partialorder %v4767, 0.0
    %vm4770 = vcmp.gt.f32.partialorder %v4768, 0.0
    %v4771 = vmul.f32 %v4767, 0.2
    %v4772 = vmul.f32 %v4768, 0.2
    %v4773 = vsel %vm4769, %v4767, %v4771
    %v4774 = vsel %vm4770, %v4768, %v4772
    %v4775 = vadd.f32 %v4773, %v41
    %v4776 = vadd.f32 %v4774, %v42
    %v4777 = vsel %vm1072, %v4775, -inf
    %4778 = vmax.xlane.f32.xlu0 %v4777
    %v4779 = vpop.xlane.xlu0 %4778
    %v4780 = vsel %vm1072, %v4776, -inf
    %4781 = vmax.xlane.f32.xlu0 %v4780
    %v4782 = vpop.xlane.xlu0 %4781
    %v4783 = vsub.f32 %v4775, %v4779
    %v4784 = vsub.f32 %v4776, %v4782
    %v4785 = vmul.f32 %v4783, 1.442695
    %v4786 = vpow.pop %v4785
    %v4787 = vmul.f32 %v4784, 1.442695
    %v4788 = vpow.pop %v4787
    %v4789 = vsel %vm1072, %v4786, 0.0
    %4790 = vadd.xlane.f32.xlu0 %v4789
    %v4791 = vpop.xlane.xlu0 %4790
    %v4792 = vsel %vm1072, %v4788, 0.0
    %4793 = vadd.xlane.f32.xlu0 %v4792
    %v4794 = vpop.xlane.xlu0 %4793
    %v4795 = vrcp.pop %v4791
    %v4796 = vmul.f32 %v4786, %v4795
    %v4797 = vrcp.pop %v4794
    %v4798 = vmul.f32 %v4788, %v4797
    %v4799 = vlaneseq
    %v4800 = vshrl.u32 %v4799, 7
    %v4801 = vsub.s32 0, %v4800
    %v4802 = vrot.slane %v4515, %v4801
    %v4804 = vsel %vm1072, %v4796, 0
    %v4807 = vsel %vm1072, %v4798, 0
    %4809 = vmatprep.subr.mxu0 0.0
    %4810 = vmatpush1.msra.mxu0 %v4590
    %4811 = vmatprep.subr.mxu0 0.0
    %4812 = vmatpush1.msra.mxu0 %v4595
    %4813 = vmatprep.subr.mxu0 0.0
    %4814 = vmatpush1.msra.mxu0 0.0
    %4815 = vmatprep.subr.mxu0 0.0
    %4816 = vmatpush1.msra.mxu0 0.0
    %4817 = vmatprep.subr.mxu0 0.0
    %4818 = vmatpush1.msra.mxu0 0.0
    %4819 = vmatprep.subr.mxu0 0.0
    %4820 = vmatpush1.msra.mxu0 0.0
    %4821 = vmatprep.subr.mxu0 0.0
    %4822 = vmatpush1.msra.mxu0 0.0
    %4823 = vmatprep.subr.mxu0 0.0
    %4824 = vmatpush1.msra.mxu0 0.0
    %4825 = vmatprep.subr.mxu0 0.0
    %4826 = vmatpush1.msra.mxu0 0.0
    %4827 = vmatprep.subr.mxu0 0.0
    %4828 = vmatpush1.msra.mxu0 0.0
    %4829 = vmatprep.subr.mxu0 0.0
    %4830 = vmatpush1.msra.mxu0 0.0
    %4831 = vmatprep.subr.mxu0 0.0
    %4832 = vmatpush1.msra.mxu0 0.0
    %4833 = vmatprep.subr.mxu0 0.0
    %4834 = vmatpush1.msra.mxu0 0.0
    %4835 = vmatprep.subr.mxu0 0.0
    %4836 = vmatpush1.msra.mxu0 0.0
    %4837 = vmatprep.subr.mxu0 0.0
    %4838 = vmatpush1.msra.mxu0 0.0
    %4839 = vmatprep.subr.mxu0 0.0
    %4840 = vmatpush1.msra.mxu0 0.0
    %4841 = vmatprep.subr.mxu0 0.0
    %4842 = vmatpush1.msra.mxu0 0.0
    %4843 = vmatprep.subr.mxu0 0.0
    %4844 = vmatpush1.msra.mxu0 0.0
    %4845 = vmatprep.subr.mxu0 0.0
    %4846 = vmatpush1.msra.mxu0 0.0
    %4847 = vmatprep.subr.mxu0 0.0
    %4848 = vmatpush1.msra.mxu0 0.0
    %4849 = vmatprep.subr.mxu0 0.0
    %4850 = vmatpush1.msra.mxu0 0.0
    %4851 = vmatprep.subr.mxu0 0.0
    %4852 = vmatpush1.msra.mxu0 0.0
    %4853 = vmatprep.subr.mxu0 0.0
    %4854 = vmatpush1.msra.mxu0 0.0
    %4855 = vmatprep.subr.mxu0 0.0
    %4856 = vmatpush1.msra.mxu0 0.0
    %4857 = vmatprep.subr.mxu0 0.0
    %4858 = vmatpush1.msra.mxu0 0.0
    %4859 = vmatprep.subr.mxu0 0.0
    %4860 = vmatpush1.msra.mxu0 0.0
    %4861 = vmatprep.subr.mxu0 0.0
    %4862 = vmatpush1.msra.mxu0 0.0
    %4863 = vmatprep.subr.mxu0 0.0
    %4864 = vmatpush1.msra.mxu0 0.0
    %4865 = vmatprep.subr.mxu0 0.0
    %4866 = vmatpush1.msra.mxu0 0.0
    %4867 = vmatprep.subr.mxu0 0.0
    %4868 = vmatpush1.msra.mxu0 0.0
    %4869 = vmatprep.subr.mxu0 0.0
    %4870 = vmatpush1.msra.mxu0 0.0
    %4871 = vmatprep.subr.mxu0 0.0
    %4872 = vmatpush1.msra.mxu0 0.0
    %4873 = vmatprep.mubr.f32.mxu0 0.0
    %4874 = vmatmul.mubr.f32.gmra.mrb[0].mxu0 %v4804
    %v4875 = vpop.f32.mrb[0].mxu0
    %v4876 = vadd.f32 %v4802, %v4875
    %v4877 = vpop.f32.mrb[0].mxu0
    %4878 = vmatprep.mubr.f32.mxu0 0.0
    %4879 = vmatmul.mubr.f32.gmra.mrb[0].mxu0 %v4807
    %v4880 = vpop.f32.mrb[0].mxu0
    %v4881 = vadd.f32 %v4802, %v4880
    %v4882 = vpop.f32.mrb[0].mxu0
    %4883 = vdwg.mxu0
    %4884 = vst.msk [vmem:[%s2] sm:$0xff] %vm4598, %v4876
    %4885 = vst.msk [vmem:[%s2 + $0x8] sm:$0xff] %vm4598, %v4881
    // Predicated region
    $region18: #{fwd.1} parent=1 // pred_check
      _
    $region19: #{fwd.1} parent=1 // pred_check_branch
      %4887 = sbr.rel (0) target = $region21
    $region20: #{fwd.1} parent=1 // pred_region
      _
    $region21: #{fwd.1} parent=1 // pred_fallthru
      _
    // Predicated region
    $region22: #{fwd.1} parent=1 // pred_check
      _
    $region23: #{fwd.1} parent=1 // pred_check_branch
      %4889 = sbr.rel (0) target = $region25
    $region24: #{fwd.1} parent=1 // pred_region
      _
    $region25: #{fwd.1} parent=1 // pred_fallthru
      _
    %4890 = vsyncpa [#allocation3], 1
    %4891 = vsyncpa [#allocation5], 1

</llo_original>
